<compile_context>
chip_gen: v7x
topology: tpu7x:2x2x1
jax: 0.10.0
libtpu: 0.0.40
codegen_flags: <defaults>
</compile_context>

<pallas_src>
import functools
import math

import numpy as np
import jax
import jax.numpy as jnp
from jax import lax
from jax.experimental import pallas as pl
from jax.experimental.pallas import tpu as pltpu

_BN_EPS = 1e-5


# ----------------------------------------------------------------------------
# pallas_call plumbing: one full-array VMEM block per operand, grid=(1,).
# Block shape == full array dims, which satisfies the (8,128) rule.
# ----------------------------------------------------------------------------
def _full_spec(shape):
    n = len(shape)
    return pl.BlockSpec(shape, lambda i, _n=n: (0,) * _n)


def _pallas(kernel, out_shape, args):
    return pl.pallas_call(
        kernel,
        out_shape=jax.ShapeDtypeStruct(out_shape, jnp.float32),
        grid=(1,),
        in_specs=[_full_spec(a.shape) for a in args],
        out_specs=_full_spec(out_shape),
        compiler_params=pltpu.CompilerParams(
            dimension_semantics=("arbitrary",)),
    )(*args)


# ----------------------------------------------------------------------------
# Kernels
# ----------------------------------------------------------------------------
def _stem_kernel(xp_ref, s_ref, bw_ref, gb_ref, pt_ref, p_ref,
                 rowexp_ref, colexp_ref, rowplace_ref, colplace_ref, o_ref,
                 *, kh, m_count, hm, cg, eps):
    """7x7/s2 conv -> BN (batch stats, mask folded) -> ReLU -> 3x3/s2 maxpool.

    Output is the next block's zero-padded [N*(Hm+2), (Wm+2)*C] frame."""
    f32 = jnp.float32
    xp = xp_ref[...]                                       # [N*Hpi, Wpi*Cin]
    # conv as sum over the kh row taps of (row-select @ (X @ banded-weight))
    y = None
    for di in range(kh):
        z = jnp.dot(xp, bw_ref[di], preferred_element_type=f32)
        t = jnp.dot(s_ref[di], z, preferred_element_type=f32)
        y = t if y is None else y + t                      # [N*Hs, Ws*Cs]
    # one-pass BatchNorm (training-mode batch stats) + folded mask1 + ReLU
    inv_m = 1.0 / m_count
    csum = jnp.dot(jnp.sum(y, axis=0, keepdims=True), p_ref[...],
                   preferred_element_type=f32)             # [1, Cs]
    csq = jnp.dot(jnp.sum(y * y, axis=0, keepdims=True), p_ref[...],
                  preferred_element_type=f32)
    mean = csum * inv_m
    var = csq * inv_m - mean * mean
    gb = gb_ref[...]
    a = gb[0:1, :] * lax.rsqrt(var + eps)
    b = gb[1:2, :] - a * mean
    a_t = jnp.dot(a, pt_ref[...], preferred_element_type=f32)
    b_t = jnp.dot(b, pt_ref[...], preferred_element_type=f32)
    act = jnp.maximum(y * a_t + b_t, 0.0)                  # [N*Hs, Ws*Cs]
    # 3x3/s2 max pool (post-ReLU, so zero pad == -inf pad):
    # expand into 3 row-groups x 3 col-groups, max over shifted slices, then
    # place into the next block's zero-padded frame with 0/1 matmuls.
    e = jnp.dot(rowexp_ref[...],
                jnp.dot(act, colexp_ref[...], preferred_element_type=f32),
                preferred_element_type=f32)                # [N*3*hm, 3*cg]
    ltot = e.shape[0]
    r = jnp.maximum(jnp.maximum(e[0:ltot - 2 * hm, :], e[hm:ltot - hm, :]),
                    e[2 * hm:ltot, :])
    c = jnp.maximum(jnp.maximum(r[:, 0:cg], r[:, cg:2 * cg]),
                    r[:, 2 * cg:3 * cg])
    o_ref[...] = jnp.dot(
        rowplace_ref[...],
        jnp.dot(c, colplace_ref[...], preferred_element_type=f32),
        preferred_element_type=f32)


def _block_kernel(*refs, kh, m_valid, hw, eps, has_ds, final):
    """One fused ResBlock: conv1->bn1(+mask1)->relu->conv2->bn2->(+residual)
    ->mask2->relu (+ GAP + FC for the last block)."""
    it = iter(refs)
    xp_ref = next(it)
    s1_ref = next(it); bw1_ref = next(it)
    s2_ref = next(it); bw2_ref = next(it)
    gb1_ref = next(it); gb2_ref = next(it)
    pt1_ref = next(it); p1_ref = next(it)
    pt2_ref = next(it); p2_ref = next(it)
    mres_ref = next(it); m2_ref = next(it); rv_ref = next(it)
    if has_ds:
        sds_ref = next(it); bwds_ref = next(it); gbds_ref = next(it)
    if final:
        gsel_ref = next(it); fcw_ref = next(it); fcb_ref = next(it)
    o_ref = next(it)

    f32 = jnp.float32
    inv_m = 1.0 / m_valid
    xp = xp_ref[...]                                       # [N*Hpi, Wpi*Ci]

    def conv(x, s_ref, bw_ref):
        acc = None
        for di in range(kh):
            z = jnp.dot(x, bw_ref[di], preferred_element_type=f32)
            t = jnp.dot(s_ref[di], z, preferred_element_type=f32)
            acc = t if acc is None else acc + t
        return acc

    def bn_affine(y, gb, p_ref, pt_ref):
        # training-mode batch stats; border rows/cols of y are exactly zero,
        # so summing over everything equals summing over the valid pixels.
        csum = jnp.dot(jnp.sum(y, axis=0, keepdims=True), p_ref[...],
                       preferred_element_type=f32)
        csq = jnp.dot(jnp.sum(y * y, axis=0, keepdims=True), p_ref[...],
                      preferred_element_type=f32)
        mean = csum * inv_m
        var = csq * inv_m - mean * mean
        a = gb[0:1, :] * lax.rsqrt(var + eps)
        b = gb[1:2, :] - a * mean
        a_t = jnp.dot(a, pt_ref[...], preferred_element_type=f32)
        b_t = jnp.dot(b, pt_ref[...], preferred_element_type=f32)
        return y * a_t + b_t

    # main branch
    h = conv(xp, s1_ref, bw1_ref)                          # [N*Hpo, Wpo*Cm]
    h1 = jnp.maximum(bn_affine(h, gb1_ref[...], p1_ref, pt1_ref),
                     0.0) * rv_ref[...]                    # zero-pad preserved
    y = conv(h1, s2_ref, bw2_ref)                          # [N*Hpo, Wpo*Co]
    ybn = bn_affine(y, gb2_ref[...], p2_ref, pt2_ref)
    # residual branch: relu(mask_res * x) [-> 1x1/s conv -> BN]
    tres = jnp.maximum(xp * mres_ref[...], 0.0)
    if has_ds:
        rpre = jnp.dot(sds_ref[...],
                       jnp.dot(tres, bwds_ref[...], preferred_element_type=f32),
                       preferred_element_type=f32)         # [N*Hpo, Wpo*Co]
        res = bn_affine(rpre, gbds_ref[...], p2_ref, pt2_ref)
    else:
        res = tres                                         # frames coincide
    out = jnp.maximum((ybn + res) * m2_ref[...], 0.0)
    if final:
        pooled = jnp.dot(
            jnp.dot(gsel_ref[...], out, preferred_element_type=f32),
            p2_ref[...], preferred_element_type=f32) * (1.0 / hw)   # [N, Co]
        o_ref[...] = (jnp.dot(pooled, fcw_ref[...], preferred_element_type=f32)
                      + fcb_ref[...])
    else:
        o_ref[...] = out * rv_ref[...]                     # zero border rows


# ----------------------------------------------------------------------------
# Structure-matrix builders (hoisted out of the forward path; numpy constants
# plus one-time weight reshapes).
# ----------------------------------------------------------------------------
def _row_select(kh, stride, n, hpi, ho, pad_out, in_off=0):
    """0/1 matrices mapping input-frame rows -> output-frame rows per row tap."""
    hpo = ho + 2 * pad_out
    s = np.zeros((kh, n * hpo, n * hpi), np.float32)
    for di in range(kh):
        for nn in range(n):
            for h in range(ho):
                s[di, nn * hpo + h + pad_out,
                  nn * hpi + stride * h + di + in_off] = 1.0
    return jnp.asarray(s)


def _col_weight(w_oihw, stride, wpi, wo, pad_out, in_off=0):
    """Block-banded [Wpi*Ci, Wpo*Co] weight matrices (kw taps + stride folded)."""
    co, ci, kh, kw = w_oihw.shape
    wpo = wo + 2 * pad_out
    taps = []
    for di in range(kh):
        bw = jnp.zeros((wpi * ci, wpo * co), jnp.float32)
        for dj in range(kw):
            m = np.zeros((wpi, wpo), np.float32)
            for w in range(wo):
                m[stride * w + dj + in_off, w + pad_out] = 1.0
            bw = bw + jnp.kron(jnp.asarray(m), w_oihw[:, :, di, dj].T)
        taps.append(bw)
    return jnp.stack(taps)


def _chan_proj(c, wo, pad_out):
    """PT [C, Wp*C] tiles a per-channel row over valid column blocks; P = PT.T
    sums column blocks back per channel."""
    wp = wo + 2 * pad_out
    pt = np.zeros((c, wp * c), np.float32)
    for w in range(wo):
        for cc in range(c):
            pt[cc, (w + pad_out) * c + cc] = 1.0
    return jnp.asarray(pt), jnp.asarray(pt.T.copy())


def _row_valid(n, ho, pad_out):
    hpo = ho + 2 * pad_out
    rv = np.zeros((n * hpo, 1), np.float32)
    for nn in range(n):
        rv[nn * hpo + pad_out: nn * hpo + pad_out + ho, 0] = 1.0
    return jnp.asarray(rv)


def _pool_mats(n, hs, ws, hm, wm, cs):
    """Expansion / placement matrices for the fused 3x3/s2/p1 max pool."""
    rowexp = np.zeros((n * 3 * hm, n * hs), np.float32)
    for nn in range(n):
        for g in range(3):
            for po in range(hm):
                hh = 2 * po + g - 1
                if 0 <= hh < hs:
                    rowexp[nn * 3 * hm + g * hm + po, nn * hs + hh] = 1.0
    cg = -(-(wm * cs) // 128) * 128        # lane-aligned column-group width
    colexp = np.zeros((ws * cs, 3 * cg), np.float32)
    for g in range(3):
        for qo in range(wm):
            ww = 2 * qo + g - 1
            if 0 <= ww < ws:
                for c in range(cs):
                    colexp[ww * cs + c, g * cg + qo * cs + c] = 1.0
    rowplace = np.zeros((n * (hm + 2), n * 3 * hm - 2 * hm), np.float32)
    for nn in range(n):
        for po in range(hm):
            rowplace[nn * (hm + 2) + po + 1, nn * 3 * hm + po] = 1.0
    colplace = np.zeros((cg, (wm + 2) * cs), np.float32)
    for qo in range(wm):
        for c in range(cs):
            colplace[qo * cs + c, (qo + 1) * cs + c] = 1.0
    return (jnp.asarray(rowexp), jnp.asarray(colexp),
            jnp.asarray(rowplace), jnp.asarray(colplace), cg)


# ----------------------------------------------------------------------------
# Plan builder (all per-layer preprocessing, done once) and forward
# ----------------------------------------------------------------------------
def build_plan(params, n, h, w):
    plan = {}
    # ---- stem: 7x7/s2 conv + BN + mask + ReLU + 3x3/s2 maxpool --------------
    w1 = params["conv1_w"]
    cs = w1.shape[0]
    hpi, wpi = h + 6, w + 6
    hs = (hpi - 7) // 2 + 1
    ws = (wpi - 7) // 2 + 1
    hm = (hs - 1) // 2 + 1
    wm = (ws - 1) // 2 + 1
    s_stk = _row_select(7, 2, n, hpi, hs, pad_out=0)
    bw_stk = _col_weight(w1, 2, wpi, ws, pad_out=0)
    pt, p = _chan_proj(cs, ws, 0)
    gb = jnp.concatenate([params["bn1_g"] * params["mask1"],
                          params["bn1_b"] * params["mask1"]], axis=0)
    rowexp, colexp, rowplace, colplace, cg = _pool_mats(n, hs, ws, hm, wm, cs)
    plan["stem"] = dict(
        kernel=functools.partial(_stem_kernel, kh=7, m_count=float(n * hs * ws),
                                 hm=hm, cg=cg, eps=_BN_EPS),
        ops=[s_stk, bw_stk, gb, pt, p, rowexp, colexp, rowplace, colplace],
        out_shape=(n * (hm + 2), (wm + 2) * cs),
    )
    plan["stem_pad"] = 3
    # ---- residual blocks -----------------------------------------------------
    blocks = []
    hpi_b, wpi_b = hm + 2, wm + 2
    nblocks = len(params["blocks"])
    for idx, bp in enumerate(params["blocks"]):
        s = bp["stride"]
        cm = bp["conv1_w"].shape[0]
        co = bp["conv2_w"].shape[0]
        ho = (hpi_b - 3) // s + 1
        wo = (wpi_b - 3) // s + 1
        hpo, wpo = ho + 2, wo + 2
        has_ds = "ds_w" in bp
        final = idx == nblocks - 1
        s1 = _row_select(3, s, n, hpi_b, ho, pad_out=1)
        bw1 = _col_weight(bp["conv1_w"], s, wpi_b, wo, pad_out=1)
        s2 = _row_select(3, 1, n, hpo, ho, pad_out=1)
        bw2 = _col_weight(bp["conv2_w"], 1, wpo, wo, pad_out=1)
        gb1 = jnp.concatenate([bp["bn1_g"] * bp["mask1"],
                               bp["bn1_b"] * bp["mask1"]], axis=0)
        gb2 = jnp.concatenate([bp["bn2_g"], bp["bn2_b"]], axis=0)
        pt1, p1 = _chan_proj(cm, wo, 1)
        pt2, p2 = _chan_proj(co, wo, 1)
        mres_t = jnp.tile(bp["mask_res"], (1, wpi_b))
        m2_t = jnp.tile(bp["mask2"], (1, wpo))
        rv = _row_valid(n, ho, 1)
        ops = [s1, bw1, s2, bw2, gb1, gb2, pt1, p1, pt2, p2, mres_t, m2_t, rv]
        if has_ds:
            sds = _row_select(1, s, n, hpi_b, ho, pad_out=1, in_off=1)[0]
            bwds = _col_weight(bp["ds_w"], s, wpi_b, wo, pad_out=1, in_off=1)[0]
            gbds = jnp.concatenate([bp["ds_g"], bp["ds_b"]], axis=0)
            ops += [sds, bwds, gbds]
        if final:
            gsel = np.zeros((n, n * hpo), np.float32)
            for nn in range(n):
                gsel[nn, nn * hpo + 1: nn * hpo + 1 + ho] = 1.0
            ops += [jnp.asarray(gsel), params["fc_w"], params["fc_b"]]
            out_shape = (n, params["fc_w"].shape[1])
        else:
            out_shape = (n * hpo, wpo * co)
        blocks.append(dict(
            kernel=functools.partial(_block_kernel, kh=3,
                                     m_valid=float(n * ho * wo),
                                     hw=float(ho * wo), eps=_BN_EPS,
                                     has_ds=has_ds, final=final),
            ops=ops, out_shape=out_shape))
        hpi_b, wpi_b = hpo, wpo
    plan["blocks"] = blocks
    return plan


def rmnet_forward(x_nchw, plan):
    n = x_nchw.shape[0]
    pad = plan["stem_pad"]
    x = jnp.transpose(x_nchw, (0, 2, 3, 1)).astype(jnp.float32)  # NCHW -> NHWC
    xp = jnp.pad(x, ((0, 0), (pad, pad), (pad, pad), (0, 0)))
    xp = xp.reshape(n * xp.shape[1], xp.shape[2] * xp.shape[3])  # flat frame
    st = plan["stem"]
    out = _pallas(st["kernel"], st["out_shape"], [xp] + st["ops"])
    for bpln in plan["blocks"]:
        out = _pallas(bpln["kernel"], bpln["out_shape"], [out] + bpln["ops"])
    return out  # [N, num_classes]


# ----------------------------------------------------------------------------
# Deterministic parameter initialization (matches the PyTorch module's shapes)
# ----------------------------------------------------------------------------
def _conv_init(key, cout, cin, kh, kw):
    bound = 1.0 / math.sqrt(cin * kh * kw)
    return jax.random.uniform(key, (cout, cin, kh, kw), jnp.float32, -bound, bound)


def _init_block(key, in_planes, planes, stride):
    # ResBlock(in_planes, mid=2*planes, out=planes, stride):
    # conv1: in_planes -> planes, conv2: planes -> planes
    k1, k2, k3 = jax.random.split(key, 3)
    p = {
        "stride": stride,
        "conv1_w": _conv_init(k1, planes, in_planes, 3, 3),
        "bn1_g": jnp.ones((1, planes), jnp.float32),
        "bn1_b": jnp.zeros((1, planes), jnp.float32),
        "mask1": jnp.ones((1, planes), jnp.float32),
        "conv2_w": _conv_init(k2, planes, planes, 3, 3),
        "bn2_g": jnp.ones((1, planes), jnp.float32),
        "bn2_b": jnp.zeros((1, planes), jnp.float32),
        "mask2": jnp.ones((1, planes), jnp.float32),
        "mask_res": jnp.ones((1, in_planes), jnp.float32),
    }
    if in_planes != planes or stride != 1:
        p["ds_w"] = _conv_init(k3, planes, in_planes, 1, 1)
        p["ds_g"] = jnp.ones((1, planes), jnp.float32)
        p["ds_b"] = jnp.zeros((1, planes), jnp.float32)
    return p


def init_params(key, base_wide=8, num_blocks=(1, 1, 1, 1), num_classes=10):
    keys = iter(jax.random.split(key, 8 + sum(num_blocks)))
    params = {
        "conv1_w": _conv_init(next(keys), base_wide, 3, 7, 7),
        "bn1_g": jnp.ones((1, base_wide), jnp.float32),
        "bn1_b": jnp.zeros((1, base_wide), jnp.float32),
        "mask1": jnp.ones((1, base_wide), jnp.float32),
        "blocks": [],
    }
    in_planes = base_wide
    stage_cfg = [(base_wide, 1), (base_wide * 2, 2),
                 (base_wide * 4, 2), (base_wide * 8, 2)]
    for (planes, stride), nb in zip(stage_cfg, num_blocks):
        for s in [stride] + [1] * (nb - 1):
            params["blocks"].append(_init_block(next(keys), in_planes, planes, s))
            in_planes = planes
    bound = 1.0 / math.sqrt(in_planes)
    params["fc_w"] = jax.random.uniform(
        next(keys), (in_planes, num_classes), jnp.float32, -bound, bound)
    params["fc_b"] = jax.random.uniform(
        next(keys), (1, num_classes), jnp.float32, -bound, bound)
    return params


# ----------------------------------------------------------------------------
if __name__ == "__main__":
    key = jax.random.PRNGKey(0)
    kp, kx = jax.random.split(key)
    # small RMNetPruning(ResBlock, [1,1,1,1], num_classes=10, base_wide=8)
    params = init_params(kp, base_wide=8, num_blocks=(1, 1, 1, 1), num_classes=10)
    x = jax.random.normal(kx, (2, 3, 32, 32), jnp.float32)  # NCHW like PyTorch
    plan = build_plan(params, n=2, h=32, w=32)               # one-time prep
    out = rmnet_forward(x, plan)
    jax.block_until_ready(out)
    assert out.shape == (2, 10), out.shape
    assert bool(jnp.all(jnp.isfinite(out)))
    print("KERNEL_OK")
</pallas_src>

<mosaic_0001>
module attributes {stable_mosaic.version = 11 : i64} {
  func.func @_stem_kernel(%arg0: i32, %arg1: memref<76x114xf32, #tpu.memory_space<vmem>>, %arg2: memref<7x32x76xf32, #tpu.memory_space<vmem>>, %arg3: memref<7x114x128xf32, #tpu.memory_space<vmem>>, %arg4: memref<2x8xf32, #tpu.memory_space<vmem>>, %arg5: memref<8x128xf32, #tpu.memory_space<vmem>>, %arg6: memref<128x8xf32, #tpu.memory_space<vmem>>, %arg7: memref<48x32xf32, #tpu.memory_space<vmem>>, %arg8: memref<128x384xf32, #tpu.memory_space<vmem>>, %arg9: memref<20x32xf32, #tpu.memory_space<vmem>>, %arg10: memref<128x80xf32, #tpu.memory_space<vmem>>, %arg11: memref<20x80xf32, #tpu.memory_space<vmem>>) attributes {dimension_semantics = [#tpu.dimension_semantics<arbitrary>], iteration_bounds = array<i64: 1>, scalar_prefetch = 0 : i64, scratch_operands = 0 : i64, tpu.core_type = #tpu.core_type<tc>, window_params = [{pipeline_mode = #tpu.pipeline_mode<synchronous>, transform_indices = @transform_0, window_bounds = array<i64: 76, 114>}, {pipeline_mode = #tpu.pipeline_mode<synchronous>, transform_indices = @transform_1, window_bounds = array<i64: 7, 32, 76>}, {pipeline_mode = #tpu.pipeline_mode<synchronous>, transform_indices = @transform_2, window_bounds = array<i64: 7, 114, 128>}, {pipeline_mode = #tpu.pipeline_mode<synchronous>, transform_indices = @transform_3, window_bounds = array<i64: 2, 8>}, {pipeline_mode = #tpu.pipeline_mode<synchronous>, transform_indices = @transform_4, window_bounds = array<i64: 8, 128>}, {pipeline_mode = #tpu.pipeline_mode<synchronous>, transform_indices = @transform_5, window_bounds = array<i64: 128, 8>}, {pipeline_mode = #tpu.pipeline_mode<synchronous>, transform_indices = @transform_6, window_bounds = array<i64: 48, 32>}, {pipeline_mode = #tpu.pipeline_mode<synchronous>, transform_indices = @transform_7, window_bounds = array<i64: 128, 384>}, {pipeline_mode = #tpu.pipeline_mode<synchronous>, transform_indices = @transform_8, window_bounds = array<i64: 20, 32>}, {pipeline_mode = #tpu.pipeline_mode<synchronous>, transform_indices = @transform_9, window_bounds = array<i64: 128, 80>}, {pipeline_mode = #tpu.pipeline_mode<synchronous>, transform_indices = @transform_10, window_bounds = array<i64: 20, 80>}]} {
    %c0 = arith.constant 0 : index
    %c0_0 = arith.constant 0 : index
    %0 = vector.load %arg1[%c0, %c0_0] : memref<76x114xf32, #tpu.memory_space<vmem>>, vector<76x114xf32>
    %c0_1 = arith.constant 0 : index
    %c0_2 = arith.constant 0 : index
    %c0_3 = arith.constant 0 : index
    %1 = vector.load %arg3[%c0_1, %c0_2, %c0_3] : memref<7x114x128xf32, #tpu.memory_space<vmem>>, vector<1x114x128xf32>
    %2 = vector.shape_cast %1 : vector<1x114x128xf32> to vector<114x128xf32>
    %cst = arith.constant dense<0.000000e+00> : vector<76x128xf32>
    %3 = tpu.matmul %0, %2, %cst {dimension_numbers = #tpu.dot_dimension_numbers<[1], [0], [0], [1], [0, 0, 1, 1], [], []>} : vector<76x114xf32>, vector<114x128xf32>, vector<76x128xf32> -> vector<76x128xf32>
    %c0_4 = arith.constant 0 : index
    %c0_5 = arith.constant 0 : index
    %c0_6 = arith.constant 0 : index
    %4 = vector.load %arg2[%c0_4, %c0_5, %c0_6] : memref<7x32x76xf32, #tpu.memory_space<vmem>>, vector<1x32x76xf32>
    %5 = vector.shape_cast %4 : vector<1x32x76xf32> to vector<32x76xf32>
    %cst_7 = arith.constant dense<0.000000e+00> : vector<32x128xf32>
    %6 = tpu.matmul %5, %3, %cst_7 {dimension_numbers = #tpu.dot_dimension_numbers<[1], [0], [0], [1], [0, 0, 1, 1], [], []>} : vector<32x76xf32>, vector<76x128xf32>, vector<32x128xf32> -> vector<32x128xf32>
    %c1 = arith.constant 1 : index
    %c0_8 = arith.constant 0 : index
    %c0_9 = arith.constant 0 : index
    %7 = vector.load %arg3[%c1, %c0_8, %c0_9] : memref<7x114x128xf32, #tpu.memory_space<vmem>>, vector<1x114x128xf32>
    %8 = vector.shape_cast %7 : vector<1x114x128xf32> to vector<114x128xf32>
    %cst_10 = arith.constant dense<0.000000e+00> : vector<76x128xf32>
    %9 = tpu.matmul %0, %8, %cst_10 {dimension_numbers = #tpu.dot_dimension_numbers<[1], [0], [0], [1], [0, 0, 1, 1], [], []>} : vector<76x114xf32>, vector<114x128xf32>, vector<76x128xf32> -> vector<76x128xf32>
    %c1_11 = arith.constant 1 : index
    %c0_12 = arith.constant 0 : index
    %c0_13 = arith.constant 0 : index
    %10 = vector.load %arg2[%c1_11, %c0_12, %c0_13] : memref<7x32x76xf32, #tpu.memory_space<vmem>>, vector<1x32x76xf32>
    %11 = vector.shape_cast %10 : vector<1x32x76xf32> to vector<32x76xf32>
    %cst_14 = arith.constant dense<0.000000e+00> : vector<32x128xf32>
    %12 = tpu.matmul %11, %9, %cst_14 {dimension_numbers = #tpu.dot_dimension_numbers<[1], [0], [0], [1], [0, 0, 1, 1], [], []>} : vector<32x76xf32>, vector<76x128xf32>, vector<32x128xf32> -> vector<32x128xf32>
    %13 = arith.addf %6, %12 : vector<32x128xf32>
    %c2 = arith.constant 2 : index
    %c0_15 = arith.constant 0 : index
    %c0_16 = arith.constant 0 : index
    %14 = vector.load %arg3[%c2, %c0_15, %c0_16] : memref<7x114x128xf32, #tpu.memory_space<vmem>>, vector<1x114x128xf32>
    %15 = vector.shape_cast %14 : vector<1x114x128xf32> to vector<114x128xf32>
    %cst_17 = arith.constant dense<0.000000e+00> : vector<76x128xf32>
    %16 = tpu.matmul %0, %15, %cst_17 {dimension_numbers = #tpu.dot_dimension_numbers<[1], [0], [0], [1], [0, 0, 1, 1], [], []>} : vector<76x114xf32>, vector<114x128xf32>, vector<76x128xf32> -> vector<76x128xf32>
    %c2_18 = arith.constant 2 : index
    %c0_19 = arith.constant 0 : index
    %c0_20 = arith.constant 0 : index
    %17 = vector.load %arg2[%c2_18, %c0_19, %c0_20] : memref<7x32x76xf32, #tpu.memory_space<vmem>>, vector<1x32x76xf32>
    %18 = vector.shape_cast %17 : vector<1x32x76xf32> to vector<32x76xf32>
    %cst_21 = arith.constant dense<0.000000e+00> : vector<32x128xf32>
    %19 = tpu.matmul %18, %16, %cst_21 {dimension_numbers = #tpu.dot_dimension_numbers<[1], [0], [0], [1], [0, 0, 1, 1], [], []>} : vector<32x76xf32>, vector<76x128xf32>, vector<32x128xf32> -> vector<32x128xf32>
    %20 = arith.addf %13, %19 : vector<32x128xf32>
    %c3 = arith.constant 3 : index
    %c0_22 = arith.constant 0 : index
    %c0_23 = arith.constant 0 : index
    %21 = vector.load %arg3[%c3, %c0_22, %c0_23] : memref<7x114x128xf32, #tpu.memory_space<vmem>>, vector<1x114x128xf32>
    %22 = vector.shape_cast %21 : vector<1x114x128xf32> to vector<114x128xf32>
    %cst_24 = arith.constant dense<0.000000e+00> : vector<76x128xf32>
    %23 = tpu.matmul %0, %22, %cst_24 {dimension_numbers = #tpu.dot_dimension_numbers<[1], [0], [0], [1], [0, 0, 1, 1], [], []>} : vector<76x114xf32>, vector<114x128xf32>, vector<76x128xf32> -> vector<76x128xf32>
    %c3_25 = arith.constant 3 : index
    %c0_26 = arith.constant 0 : index
    %c0_27 = arith.constant 0 : index
    %24 = vector.load %arg2[%c3_25, %c0_26, %c0_27] : memref<7x32x76xf32, #tpu.memory_space<vmem>>, vector<1x32x76xf32>
    %25 = vector.shape_cast %24 : vector<1x32x76xf32> to vector<32x76xf32>
    %cst_28 = arith.constant dense<0.000000e+00> : vector<32x128xf32>
    %26 = tpu.matmul %25, %23, %cst_28 {dimension_numbers = #tpu.dot_dimension_numbers<[1], [0], [0], [1], [0, 0, 1, 1], [], []>} : vector<32x76xf32>, vector<76x128xf32>, vector<32x128xf32> -> vector<32x128xf32>
    %27 = arith.addf %20, %26 : vector<32x128xf32>
    %c4 = arith.constant 4 : index
    %c0_29 = arith.constant 0 : index
    %c0_30 = arith.constant 0 : index
    %28 = vector.load %arg3[%c4, %c0_29, %c0_30] : memref<7x114x128xf32, #tpu.memory_space<vmem>>, vector<1x114x128xf32>
    %29 = vector.shape_cast %28 : vector<1x114x128xf32> to vector<114x128xf32>
    %cst_31 = arith.constant dense<0.000000e+00> : vector<76x128xf32>
    %30 = tpu.matmul %0, %29, %cst_31 {dimension_numbers = #tpu.dot_dimension_numbers<[1], [0], [0], [1], [0, 0, 1, 1], [], []>} : vector<76x114xf32>, vector<114x128xf32>, vector<76x128xf32> -> vector<76x128xf32>
    %c4_32 = arith.constant 4 : index
    %c0_33 = arith.constant 0 : index
    %c0_34 = arith.constant 0 : index
    %31 = vector.load %arg2[%c4_32, %c0_33, %c0_34] : memref<7x32x76xf32, #tpu.memory_space<vmem>>, vector<1x32x76xf32>
    %32 = vector.shape_cast %31 : vector<1x32x76xf32> to vector<32x76xf32>
    %cst_35 = arith.constant dense<0.000000e+00> : vector<32x128xf32>
    %33 = tpu.matmul %32, %30, %cst_35 {dimension_numbers = #tpu.dot_dimension_numbers<[1], [0], [0], [1], [0, 0, 1, 1], [], []>} : vector<32x76xf32>, vector<76x128xf32>, vector<32x128xf32> -> vector<32x128xf32>
    %34 = arith.addf %27, %33 : vector<32x128xf32>
    %c5 = arith.constant 5 : index
    %c0_36 = arith.constant 0 : index
    %c0_37 = arith.constant 0 : index
    %35 = vector.load %arg3[%c5, %c0_36, %c0_37] : memref<7x114x128xf32, #tpu.memory_space<vmem>>, vector<1x114x128xf32>
    %36 = vector.shape_cast %35 : vector<1x114x128xf32> to vector<114x128xf32>
    %cst_38 = arith.constant dense<0.000000e+00> : vector<76x128xf32>
    %37 = tpu.matmul %0, %36, %cst_38 {dimension_numbers = #tpu.dot_dimension_numbers<[1], [0], [0], [1], [0, 0, 1, 1], [], []>} : vector<76x114xf32>, vector<114x128xf32>, vector<76x128xf32> -> vector<76x128xf32>
    %c5_39 = arith.constant 5 : index
    %c0_40 = arith.constant 0 : index
    %c0_41 = arith.constant 0 : index
    %38 = vector.load %arg2[%c5_39, %c0_40, %c0_41] : memref<7x32x76xf32, #tpu.memory_space<vmem>>, vector<1x32x76xf32>
    %39 = vector.shape_cast %38 : vector<1x32x76xf32> to vector<32x76xf32>
    %cst_42 = arith.constant dense<0.000000e+00> : vector<32x128xf32>
    %40 = tpu.matmul %39, %37, %cst_42 {dimension_numbers = #tpu.dot_dimension_numbers<[1], [0], [0], [1], [0, 0, 1, 1], [], []>} : vector<32x76xf32>, vector<76x128xf32>, vector<32x128xf32> -> vector<32x128xf32>
    %41 = arith.addf %34, %40 : vector<32x128xf32>
    %c6 = arith.constant 6 : index
    %c0_43 = arith.constant 0 : index
    %c0_44 = arith.constant 0 : index
    %42 = vector.load %arg3[%c6, %c0_43, %c0_44] : memref<7x114x128xf32, #tpu.memory_space<vmem>>, vector<1x114x128xf32>
    %43 = vector.shape_cast %42 : vector<1x114x128xf32> to vector<114x128xf32>
    %cst_45 = arith.constant dense<0.000000e+00> : vector<76x128xf32>
    %44 = tpu.matmul %0, %43, %cst_45 {dimension_numbers = #tpu.dot_dimension_numbers<[1], [0], [0], [1], [0, 0, 1, 1], [], []>} : vector<76x114xf32>, vector<114x128xf32>, vector<76x128xf32> -> vector<76x128xf32>
    %c6_46 = arith.constant 6 : index
    %c0_47 = arith.constant 0 : index
    %c0_48 = arith.constant 0 : index
    %45 = vector.load %arg2[%c6_46, %c0_47, %c0_48] : memref<7x32x76xf32, #tpu.memory_space<vmem>>, vector<1x32x76xf32>
    %46 = vector.shape_cast %45 : vector<1x32x76xf32> to vector<32x76xf32>
    %cst_49 = arith.constant dense<0.000000e+00> : vector<32x128xf32>
    %47 = tpu.matmul %46, %44, %cst_49 {dimension_numbers = #tpu.dot_dimension_numbers<[1], [0], [0], [1], [0, 0, 1, 1], [], []>} : vector<32x76xf32>, vector<76x128xf32>, vector<32x128xf32> -> vector<32x128xf32>
    %48 = arith.addf %41, %47 : vector<32x128xf32>
    %cst_50 = arith.constant dense<0.000000e+00> : vector<128xf32>
    %49 = vector.multi_reduction <add>, %48, %cst_50 [0] : vector<32x128xf32> to vector<128xf32>
    %50 = vector.shape_cast %49 : vector<128xf32> to vector<1x128xf32>
    %c0_51 = arith.constant 0 : index
    %c0_52 = arith.constant 0 : index
    %51 = vector.load %arg6[%c0_51, %c0_52] : memref<128x8xf32, #tpu.memory_space<vmem>>, vector<128x8xf32>
    %cst_53 = arith.constant dense<0.000000e+00> : vector<1x8xf32>
    %52 = tpu.matmul %50, %51, %cst_53 {dimension_numbers = #tpu.dot_dimension_numbers<[1], [0], [0], [1], [0, 0, 1, 1], [], []>} : vector<1x128xf32>, vector<128x8xf32>, vector<1x8xf32> -> vector<1x8xf32>
    %53 = arith.mulf %48, %48 : vector<32x128xf32>
    %cst_54 = arith.constant dense<0.000000e+00> : vector<128xf32>
    %54 = vector.multi_reduction <add>, %53, %cst_54 [0] : vector<32x128xf32> to vector<128xf32>
    %55 = vector.shape_cast %54 : vector<128xf32> to vector<1x128xf32>
    %c0_55 = arith.constant 0 : index
    %c0_56 = arith.constant 0 : index
    %56 = vector.load %arg6[%c0_55, %c0_56] : memref<128x8xf32, #tpu.memory_space<vmem>>, vector<128x8xf32>
    %cst_57 = arith.constant dense<0.000000e+00> : vector<1x8xf32>
    %57 = tpu.matmul %55, %56, %cst_57 {dimension_numbers = #tpu.dot_dimension_numbers<[1], [0], [0], [1], [0, 0, 1, 1], [], []>} : vector<1x128xf32>, vector<128x8xf32>, vector<1x8xf32> -> vector<1x8xf32>
    %cst_58 = arith.constant 0.001953125 : f32
    %58 = vector.broadcast %cst_58 : f32 to vector<1x8xf32>
    %59 = arith.mulf %52, %58 : vector<1x8xf32>
    %cst_59 = arith.constant 0.001953125 : f32
    %60 = vector.broadcast %cst_59 : f32 to vector<1x8xf32>
    %61 = arith.mulf %57, %60 : vector<1x8xf32>
    %62 = arith.mulf %59, %59 : vector<1x8xf32>
    %63 = arith.subf %61, %62 : vector<1x8xf32>
    %c0_60 = arith.constant 0 : index
    %c0_61 = arith.constant 0 : index
    %64 = vector.load %arg4[%c0_60, %c0_61] : memref<2x8xf32, #tpu.memory_space<vmem>>, vector<2x8xf32>
    %65 = vector.extract_strided_slice %64 {offsets = [0, 0], sizes = [1, 8], strides = [1, 1]} : vector<2x8xf32> to vector<1x8xf32>
    %cst_62 = arith.constant 9.99999974E-6 : f32
    %66 = vector.broadcast %cst_62 : f32 to vector<1x8xf32>
    %67 = arith.addf %63, %66 : vector<1x8xf32>
    %68 = math.rsqrt %67 : vector<1x8xf32>
    %69 = arith.mulf %65, %68 : vector<1x8xf32>
    %70 = vector.extract_strided_slice %64 {offsets = [1, 0], sizes = [1, 8], strides = [1, 1]} : vector<2x8xf32> to vector<1x8xf32>
    %71 = arith.mulf %69, %59 : vector<1x8xf32>
    %72 = arith.subf %70, %71 : vector<1x8xf32>
    %c0_63 = arith.constant 0 : index
    %c0_64 = arith.constant 0 : index
    %73 = vector.load %arg5[%c0_63, %c0_64] : memref<8x128xf32, #tpu.memory_space<vmem>>, vector<8x128xf32>
    %cst_65 = arith.constant dense<0.000000e+00> : vector<1x128xf32>
    %74 = tpu.matmul %69, %73, %cst_65 {dimension_numbers = #tpu.dot_dimension_numbers<[1], [0], [0], [1], [0, 0, 1, 1], [], []>} : vector<1x8xf32>, vector<8x128xf32>, vector<1x128xf32> -> vector<1x128xf32>
    %c0_66 = arith.constant 0 : index
    %c0_67 = arith.constant 0 : index
    %75 = vector.load %arg5[%c0_66, %c0_67] : memref<8x128xf32, #tpu.memory_space<vmem>>, vector<8x128xf32>
    %cst_68 = arith.constant dense<0.000000e+00> : vector<1x128xf32>
    %76 = tpu.matmul %72, %75, %cst_68 {dimension_numbers = #tpu.dot_dimension_numbers<[1], [0], [0], [1], [0, 0, 1, 1], [], []>} : vector<1x8xf32>, vector<8x128xf32>, vector<1x128xf32> -> vector<1x128xf32>
    %77 = vector.broadcast %74 : vector<1x128xf32> to vector<32x128xf32>
    %78 = arith.mulf %48, %77 : vector<32x128xf32>
    %79 = vector.broadcast %76 : vector<1x128xf32> to vector<32x128xf32>
    %80 = arith.addf %78, %79 : vector<32x128xf32>
    %cst_69 = arith.constant 0.000000e+00 : f32
    %81 = vector.broadcast %cst_69 : f32 to vector<32x128xf32>
    %82 = arith.maximumf %80, %81 : vector<32x128xf32>
    %c0_70 = arith.constant 0 : index
    %c0_71 = arith.constant 0 : index
    %83 = vector.load %arg7[%c0_70, %c0_71] : memref<48x32xf32, #tpu.memory_space<vmem>>, vector<48x32xf32>
    %c0_72 = arith.constant 0 : index
    %c0_73 = arith.constant 0 : index
    %84 = vector.load %arg8[%c0_72, %c0_73] : memref<128x384xf32, #tpu.memory_space<vmem>>, vector<128x384xf32>
    %cst_74 = arith.constant dense<0.000000e+00> : vector<32x384xf32>
    %85 = tpu.matmul %82, %84, %cst_74 {dimension_numbers = #tpu.dot_dimension_numbers<[1], [0], [0], [1], [0, 0, 1, 1], [], []>} : vector<32x128xf32>, vector<128x384xf32>, vector<32x384xf32> -> vector<32x384xf32>
    %cst_75 = arith.constant dense<0.000000e+00> : vector<48x384xf32>
    %86 = tpu.matmul %83, %85, %cst_75 {dimension_numbers = #tpu.dot_dimension_numbers<[1], [0], [0], [1], [0, 0, 1, 1], [], []>} : vector<48x32xf32>, vector<32x384xf32>, vector<48x384xf32> -> vector<48x384xf32>
    %87 = vector.extract_strided_slice %86 {offsets = [0, 0], sizes = [32, 384], strides = [1, 1]} : vector<48x384xf32> to vector<32x384xf32>
    %88 = vector.extract_strided_slice %86 {offsets = [8, 0], sizes = [32, 384], strides = [1, 1]} : vector<48x384xf32> to vector<32x384xf32>
    %89 = arith.maximumf %87, %88 : vector<32x384xf32>
    %90 = vector.extract_strided_slice %86 {offsets = [16, 0], sizes = [32, 384], strides = [1, 1]} : vector<48x384xf32> to vector<32x384xf32>
    %91 = arith.maximumf %89, %90 : vector<32x384xf32>
    %92 = vector.extract_strided_slice %91 {offsets = [0, 0], sizes = [32, 128], strides = [1, 1]} : vector<32x384xf32> to vector<32x128xf32>
    %93 = vector.extract_strided_slice %91 {offsets = [0, 128], sizes = [32, 128], strides = [1, 1]} : vector<32x384xf32> to vector<32x128xf32>
    %94 = arith.maximumf %92, %93 : vector<32x128xf32>
    %95 = vector.extract_strided_slice %91 {offsets = [0, 256], sizes = [32, 128], strides = [1, 1]} : vector<32x384xf32> to vector<32x128xf32>
    %96 = arith.maximumf %94, %95 : vector<32x128xf32>
    %c0_76 = arith.constant 0 : index
    %c0_77 = arith.constant 0 : index
    %97 = vector.load %arg9[%c0_76, %c0_77] : memref<20x32xf32, #tpu.memory_space<vmem>>, vector<20x32xf32>
    %c0_78 = arith.constant 0 : index
    %c0_79 = arith.constant 0 : index
    %98 = vector.load %arg10[%c0_78, %c0_79] : memref<128x80xf32, #tpu.memory_space<vmem>>, vector<128x80xf32>
    %cst_80 = arith.constant dense<0.000000e+00> : vector<32x80xf32>
    %99 = tpu.matmul %96, %98, %cst_80 {dimension_numbers = #tpu.dot_dimension_numbers<[1], [0], [0], [1], [0, 0, 1, 1], [], []>} : vector<32x128xf32>, vector<128x80xf32>, vector<32x80xf32> -> vector<32x80xf32>
    %cst_81 = arith.constant dense<0.000000e+00> : vector<20x80xf32>
    %100 = tpu.matmul %97, %99, %cst_81 {dimension_numbers = #tpu.dot_dimension_numbers<[1], [0], [0], [1], [0, 0, 1, 1], [], []>} : vector<20x32xf32>, vector<32x80xf32>, vector<20x80xf32> -> vector<20x80xf32>
    %c0_82 = arith.constant 0 : index
    %c0_83 = arith.constant 0 : index
    %101 = vector.load %arg11[%c0_82, %c0_83] : memref<20x80xf32, #tpu.memory_space<vmem>>, vector<20x80xf32>
    tpu.vector_store %arg11[%c0_82, %c0_83], %100 {strides = array<i32>} : memref<20x80xf32, #tpu.memory_space<vmem>>, vector<20x80xf32>,
    return
  }
  func.func @transform_0(%arg0: i32) -> (i32, i32) {
    %c0_i32 = arith.constant 0 : i32
    %c0_i32_0 = arith.constant 0 : i32
    %c0_i32_1 = arith.constant 0 : i32
    return %c0_i32, %c0_i32_0 : i32, i32
  }
  func.func @transform_1(%arg0: i32) -> (i32, i32, i32) {
    %c0_i32 = arith.constant 0 : i32
    %c0_i32_0 = arith.constant 0 : i32
    %c0_i32_1 = arith.constant 0 : i32
    %c0_i32_2 = arith.constant 0 : i32
    return %c0_i32, %c0_i32_0, %c0_i32_1 : i32, i32, i32
  }
  func.func @transform_2(%arg0: i32) -> (i32, i32, i32) {
    %c0_i32 = arith.constant 0 : i32
    %c0_i32_0 = arith.constant 0 : i32
    %c0_i32_1 = arith.constant 0 : i32
    %c0_i32_2 = arith.constant 0 : i32
    return %c0_i32, %c0_i32_0, %c0_i32_1 : i32, i32, i32
  }
  func.func @transform_3(%arg0: i32) -> (i32, i32) {
    %c0_i32 = arith.constant 0 : i32
    %c0_i32_0 = arith.constant 0 : i32
    %c0_i32_1 = arith.constant 0 : i32
    return %c0_i32, %c0_i32_0 : i32, i32
  }
  func.func @transform_4(%arg0: i32) -> (i32, i32) {
    %c0_i32 = arith.constant 0 : i32
    %c0_i32_0 = arith.constant 0 : i32
    %c0_i32_1 = arith.constant 0 : i32
    return %c0_i32, %c0_i32_0 : i32, i32
  }
  func.func @transform_5(%arg0: i32) -> (i32, i32) {
    %c0_i32 = arith.constant 0 : i32
    %c0_i32_0 = arith.constant 0 : i32
    %c0_i32_1 = arith.constant 0 : i32
    return %c0_i32, %c0_i32_0 : i32, i32
  }
  func.func @transform_6(%arg0: i32) -> (i32, i32) {
    %c0_i32 = arith.constant 0 : i32
    %c0_i32_0 = arith.constant 0 : i32
    %c0_i32_1 = arith.constant 0 : i32
    return %c0_i32, %c0_i32_0 : i32, i32
  }
  func.func @transform_7(%arg0: i32) -> (i32, i32) {
    %c0_i32 = arith.constant 0 : i32
    %c0_i32_0 = arith.constant 0 : i32
    %c0_i32_1 = arith.constant 0 : i32
    return %c0_i32, %c0_i32_0 : i32, i32
  }
  func.func @transform_8(%arg0: i32) -> (i32, i32) {
    %c0_i32 = arith.constant 0 : i32
    %c0_i32_0 = arith.constant 0 : i32
    %c0_i32_1 = arith.constant 0 : i32
    return %c0_i32, %c0_i32_0 : i32, i32
  }
  func.func @transform_9(%arg0: i32) -> (i32, i32) {
    %c0_i32 = arith.constant 0 : i32
    %c0_i32_0 = arith.constant 0 : i32
    %c0_i32_1 = arith.constant 0 : i32
    return %c0_i32, %c0_i32_0 : i32, i32
  }
  func.func @transform_10(%arg0: i32) -> (i32, i32) {
    %c0_i32 = arith.constant 0 : i32
    %c0_i32_0 = arith.constant 0 : i32
    %c0_i32_1 = arith.constant 0 : i32
    return %c0_i32, %c0_i32_0 : i32, i32
  }
}

</mosaic_0001>

<llo_original>
// kernel: tpu_custom_call.1
$region0: #{tpu_custom_call.1}
  #allocation0 [shape = 'u32[]', space=smem, size = 0x4, offset = 0x4, fixed_abs, tag = 'smem constant byte address 0x4 - core index']
  #allocation1 [shape = 'u32[144,128]{1,0:T(1,128)}', space=vmem, size = 0x12000, scoped, tag = 'internal scratch']
  %s0 = inlined_call_operand.hbm [shape: f32[76,114], index: 0, kind: input, shape index: {}]
  %s1 = inlined_call_operand.hbm [shape: f32[7,32,76], index: 1, kind: input, shape index: {}]
  %s2 = inlined_call_operand.hbm [shape: f32[7,114,128], index: 2, kind: input, shape index: {}]
  %s3 = inlined_call_operand.vmem [shape: f32[2,8], index: 3, kind: input, shape index: {}]
  %s4 = inlined_call_operand.vmem [shape: f32[8,128], index: 4, kind: input, shape index: {}]
  %s5 = inlined_call_operand.vmem [shape: f32[128,8], index: 5, kind: input, shape index: {}]
  %s6 = inlined_call_operand.vmem [shape: f32[48,32], index: 6, kind: input, shape index: {}]
  %s7 = inlined_call_operand.vmem [shape: f32[128,384], index: 7, kind: input, shape index: {}]
  %s8 = inlined_call_operand.vmem [shape: f32[20,32], index: 8, kind: input, shape index: {}]
  %s9 = inlined_call_operand.vmem [shape: f32[128,80], index: 9, kind: input, shape index: {}]
  %s10 = inlined_call_operand.hbm [shape: f32[20,80], index: 10, kind: output, shape index: {}]
  %s11 = sld [smem:[#allocation0]]
  $region62: #{tpu_custom_call.1} parent=0
    _
  %s13 = ssub.s32 1, %s11
  %s14 = scalar_select 0, %s13, %s11
  $region1: #{tpu_custom_call.1} parent=0
    #allocation2 [shape = 'u8[40960]{0}', space=vmem, size = 0xa000, scoped, tag = 'input window, operand 0, single buffered']
    #allocation3 [shape = 's32[1]{0}', space=sflag, size = 0x4, scoped, tag = 'scoped memory for tpu_custom_call.1']
    #allocation4 [shape = 's32[1]{0}', space=sflag, size = 0x4, scoped, tag = 'scoped memory for tpu_custom_call.1']
    #allocation5 [shape = 'u8[114688]{0}', space=vmem, size = 0x1c000, scoped, tag = 'input window, operand 1, single buffered']
    #allocation6 [shape = 's32[1]{0}', space=sflag, size = 0x4, scoped, tag = 'scoped memory for tpu_custom_call.1']
    #allocation7 [shape = 'u8[430080]{0}', space=vmem, size = 0x69000, scoped, tag = 'input window, operand 2, single buffered']
    #allocation8 [shape = 'u8[12288]{0}', space=vmem, size = 0x3000, scoped, tag = 'output window, operand 0, single buffered']
    %15 = vsyncpa [#allocation3], 0
    %16 = vsyncpa [#allocation6], 0
    %17 = vsyncpa [#allocation4], 0
    // Predicated region
    $region2: #{tpu_custom_call.1} parent=1 // pred_check
      _
    $region3: #{tpu_custom_call.1} parent=1 // pred_check_branch
      %19 = sbr.rel (0) target = $region5
    $region4: #{tpu_custom_call.1} parent=1 // pred_region
      %s21 = ssub.s32 1280, 1280
      %22 = vsyncadd [#allocation3], %s21
      %s23 = sshll.u32 [#allocation2], 4
      %s24 = int_to_ptr.vmem [resolvable:$true] %s23
      %29 = dma.hbm_to_vmem [thread:$0]  %s0, 1280, %s24, [#allocation3], 128, 128, 8
    $region5: #{tpu_custom_call.1} parent=1 // pred_fallthru
      _
    // Predicated region
    $region6: #{tpu_custom_call.1} parent=1 // pred_check
      _
    $region7: #{tpu_custom_call.1} parent=1 // pred_check_branch
      %31 = sbr.rel (0) target = $region9
    $region8: #{tpu_custom_call.1} parent=1 // pred_region
      %s33 = ssub.s32 3584, 3584
      %34 = vsyncadd [#allocation6], %s33
      %s35 = sshll.u32 [#allocation5], 4
      %s36 = int_to_ptr.vmem [resolvable:$true] %s35
      %41 = dma.hbm_to_vmem [thread:$0]  %s1, 3584, %s36, [#allocation6], 128, 128, 8
    $region9: #{tpu_custom_call.1} parent=1 // pred_fallthru
      _
    // Predicated region
    $region10: #{tpu_custom_call.1} parent=1 // pred_check
      _
    $region11: #{tpu_custom_call.1} parent=1 // pred_check_branch
      %43 = sbr.rel (0) target = $region13
    $region12: #{tpu_custom_call.1} parent=1 // pred_region
      %s45 = ssub.s32 13440, 13440
      %46 = vsyncadd [#allocation6], %s45
      %s47 = sshll.u32 [#allocation7], 4
      %s48 = int_to_ptr.vmem [resolvable:$true] %s47
      %53 = dma.hbm_to_vmem [thread:$0]  %s2, 13440, %s48, [#allocation6], 128, 128, 8
    $region13: #{tpu_custom_call.1} parent=1 // pred_fallthru
      _
    // Predicated region
    $region14: #{tpu_custom_call.1} parent=1 // pred_check
      _
    $region15: #{tpu_custom_call.1} parent=1 // pred_check_branch
      %55 = sbr.rel (0) target = $region17
    $region16: #{tpu_custom_call.1} parent=1 // pred_region
      _
    $region17: #{tpu_custom_call.1} parent=1 // pred_fallthru
      _
    // Predicated region
    $region18: #{tpu_custom_call.1} parent=1 // pred_check
      _
    $region19: #{tpu_custom_call.1} parent=1 // pred_check_branch
      %57 = sbr.rel (0) target = $region21
    $region20: #{tpu_custom_call.1} parent=1 // pred_region
      _
    $region21: #{tpu_custom_call.1} parent=1 // pred_fallthru
      _
    // Predicated region
    $region22: #{tpu_custom_call.1} parent=1 // pred_check
      _
    $region23: #{tpu_custom_call.1} parent=1 // pred_check_branch
      %59 = sbr.rel (0) target = $region25
    $region24: #{tpu_custom_call.1} parent=1 // pred_region
      _
    $region25: #{tpu_custom_call.1} parent=1 // pred_fallthru
      _
    // Predicated region
    $region26: #{tpu_custom_call.1} parent=1 // pred_check
      _
    $region27: #{tpu_custom_call.1} parent=1 // pred_check_branch
      %61 = sbr.rel (0) target = $region29
    $region28: #{tpu_custom_call.1} parent=1 // pred_region
      _
    $region29: #{tpu_custom_call.1} parent=1 // pred_fallthru
      _
    // Predicated region
    $region30: #{tpu_custom_call.1} parent=1 // pred_check
      _
    $region31: #{tpu_custom_call.1} parent=1 // pred_check_branch
      %63 = sbr.rel (0) target = $region33
    $region32: #{tpu_custom_call.1} parent=1 // pred_region
      _
    $region33: #{tpu_custom_call.1} parent=1 // pred_fallthru
      _
    // Predicated region
    $region34: #{tpu_custom_call.1} parent=1 // pred_check
      _
    $region35: #{tpu_custom_call.1} parent=1 // pred_check_branch
      %65 = sbr.rel (0) target = $region37
    $region36: #{tpu_custom_call.1} parent=1 // pred_region
      _
    $region37: #{tpu_custom_call.1} parent=1 // pred_fallthru
      _
    // Predicated region
    $region38: #{tpu_custom_call.1} parent=1 // pred_check
      _
    $region39: #{tpu_custom_call.1} parent=1 // pred_check_branch
      %67 = sbr.rel (0) target = $region41
    $region40: #{tpu_custom_call.1} parent=1 // pred_region
      _
    $region41: #{tpu_custom_call.1} parent=1 // pred_fallthru
      _
    // Predicated region
    $region42: #{tpu_custom_call.1} parent=1 // pred_check
      _
    $region43: #{tpu_custom_call.1} parent=1 // pred_check_branch
      %69 = sbr.rel (0) target = $region45
    $region44: #{tpu_custom_call.1} parent=1 // pred_region
      %70 = dma.done [#allocation3], 1280
    $region45: #{tpu_custom_call.1} parent=1 // pred_fallthru
      _
    // Predicated region
    $region46: #{tpu_custom_call.1} parent=1 // pred_check
      _
    $region47: #{tpu_custom_call.1} parent=1 // pred_check_branch
      %72 = sbr.rel (0) target = $region49
    $region48: #{tpu_custom_call.1} parent=1 // pred_region
      %73 = dma.done [#allocation6], 3584
    $region49: #{tpu_custom_call.1} parent=1 // pred_fallthru
      _
    // Predicated region
    $region50: #{tpu_custom_call.1} parent=1 // pred_check
      _
    $region51: #{tpu_custom_call.1} parent=1 // pred_check_branch
      %75 = sbr.rel (0) target = $region53
    $region52: #{tpu_custom_call.1} parent=1 // pred_region
      %76 = dma.done [#allocation6], 13440
    $region53: #{tpu_custom_call.1} parent=1 // pred_fallthru
      _
    %v77 = vld [vmem:[#allocation2] sm:$0xff]
    %v78 = vld [vmem:[#allocation2 + $0x8] sm:$0xff]
    %v79 = vld [vmem:[#allocation2 + $0x10] sm:$0xff]
    %v80 = vld [vmem:[#allocation2 + $0x18] sm:$0xff]
    %v81 = vld [vmem:[#allocation2 + $0x20] sm:$0xff]
    %v82 = vld [vmem:[#allocation2 + $0x28] sm:$0xff]
    %v83 = vld [vmem:[#allocation2 + $0x30] sm:$0xff]
    %v84 = vld [vmem:[#allocation2 + $0x38] sm:$0xff]
    %v85 = vld [vmem:[#allocation2 + $0x40] sm:$0xff]
    %v86 = vld [vmem:[#allocation2 + $0x48] sm:$0xf]
    %v87 = vld [vmem:[#allocation7] sm:$0xff]
    %v88 = vld [vmem:[#allocation7 + $0x8] sm:$0xff]
    %v89 = vld [vmem:[#allocation7 + $0x10] sm:$0xff]
    %v90 = vld [vmem:[#allocation7 + $0x18] sm:$0xff]
    %v91 = vld [vmem:[#allocation7 + $0x20] sm:$0xff]
    %v92 = vld [vmem:[#allocation7 + $0x28] sm:$0xff]
    %v93 = vld [vmem:[#allocation7 + $0x30] sm:$0xff]
    %v94 = vld [vmem:[#allocation7 + $0x38] sm:$0xff]
    %v95 = vld [vmem:[#allocation7 + $0x40] sm:$0xff]
    %v96 = vld [vmem:[#allocation7 + $0x48] sm:$0xff]
    %v97 = vld [vmem:[#allocation7 + $0x50] sm:$0xff]
    %v98 = vld [vmem:[#allocation7 + $0x58] sm:$0xff]
    %v99 = vld [vmem:[#allocation7 + $0x60] sm:$0xff]
    %v100 = vld [vmem:[#allocation7 + $0x68] sm:$0xff]
    %v101 = vld [vmem:[#allocation7 + $0x70] sm:$0x3]
    %vm102 = vcmask 932864
    %v104 = vsel %vm102, %v77, 0
    %v107 = vsel %vm102, %v78, 0
    %v110 = vsel %vm102, %v79, 0
    %v113 = vsel %vm102, %v80, 0
    %v116 = vsel %vm102, %v81, 0
    %v119 = vsel %vm102, %v82, 0
    %v122 = vsel %vm102, %v83, 0
    %v125 = vsel %vm102, %v84, 0
    %v128 = vsel %vm102, %v85, 0
    %v131 = vsel %vm102, %v86, 0
    %vm133 = vcmask 1041408
    %v135 = vsel %vm133, %v101, 0
    %137 = vmatprep.subr.mxu0 0.0
    %138 = vmatpush1.msra.mxu0 %v87
    %139 = vmatprep.subr.mxu0 0.0
    %140 = vmatpush1.msra.mxu0 %v88
    %141 = vmatprep.subr.mxu0 0.0
    %142 = vmatpush1.msra.mxu0 %v89
    %143 = vmatprep.subr.mxu0 0.0
    %144 = vmatpush1.msra.mxu0 %v90
    %145 = vmatprep.subr.mxu0 0.0
    %146 = vmatpush1.msra.mxu0 %v91
    %147 = vmatprep.subr.mxu0 0.0
    %148 = vmatpush1.msra.mxu0 %v92
    %149 = vmatprep.subr.mxu0 0.0
    %150 = vmatpush1.msra.mxu0 %v93
    %151 = vmatprep.subr.mxu0 0.0
    %152 = vmatpush1.msra.mxu0 %v94
    %153 = vmatprep.subr.mxu0 0.0
    %154 = vmatpush1.msra.mxu0 %v95
    %155 = vmatprep.subr.mxu0 0.0
    %156 = vmatpush1.msra.mxu0 %v96
    %157 = vmatprep.subr.mxu0 0.0
    %158 = vmatpush1.msra.mxu0 %v97
    %159 = vmatprep.subr.mxu0 0.0
    %160 = vmatpush1.msra.mxu0 %v98
    %161 = vmatprep.subr.mxu0 0.0
    %162 = vmatpush1.msra.mxu0 %v99
    %163 = vmatprep.subr.mxu0 0.0
    %164 = vmatpush1.msra.mxu0 %v100
    %165 = vmatprep.subr.mxu0 0.0
    %166 = vmatpush1.msra.mxu0 %v135
    %167 = vmatprep.subr.mxu0 0.0
    %168 = vmatpush1.msra.mxu0 0.0
    %169 = vmatprep.subr.mxu0 0.0
    %170 = vmatpush1.msra.mxu0 0.0
    %171 = vmatprep.subr.mxu0 0.0
    %172 = vmatpush1.msra.mxu0 0.0
    %173 = vmatprep.subr.mxu0 0.0
    %174 = vmatpush1.msra.mxu0 0.0
    %175 = vmatprep.subr.mxu0 0.0
    %176 = vmatpush1.msra.mxu0 0.0
    %177 = vmatprep.subr.mxu0 0.0
    %178 = vmatpush1.msra.mxu0 0.0
    %179 = vmatprep.subr.mxu0 0.0
    %180 = vmatpush1.msra.mxu0 0.0
    %181 = vmatprep.subr.mxu0 0.0
    %182 = vmatpush1.msra.mxu0 0.0
    %183 = vmatprep.subr.mxu0 0.0
    %184 = vmatpush1.msra.mxu0 0.0
    %185 = vmatprep.subr.mxu0 0.0
    %186 = vmatpush1.msra.mxu0 0.0
    %187 = vmatprep.subr.mxu0 0.0
    %188 = vmatpush1.msra.mxu0 0.0
    %189 = vmatprep.subr.mxu0 0.0
    %190 = vmatpush1.msra.mxu0 0.0
    %191 = vmatprep.subr.mxu0 0.0
    %192 = vmatpush1.msra.mxu0 0.0
    %193 = vmatprep.subr.mxu0 0.0
    %194 = vmatpush1.msra.mxu0 0.0
    %195 = vmatprep.subr.mxu0 0.0
    %196 = vmatpush1.msra.mxu0 0.0
    %197 = vmatprep.subr.mxu0 0.0
    %198 = vmatpush1.msra.mxu0 0.0
    %199 = vmatprep.subr.mxu0 0.0
    %200 = vmatpush1.msra.mxu0 0.0
    %201 = vmatprep.mubr.f32.mxu0 0.0
    %202 = vmatmul.mubr.f32.gmra.mrb[0].mxu0 %v104
    %v203 = vpop.f32.mrb[0].mxu0
    %v204 = vadd.f32 0.0, %v203
    %v205 = vpop.f32.mrb[0].mxu0
    %206 = vmatprep.mubr.f32.mxu0 0.0
    %207 = vmatmul.mubr.f32.gmra.mrb[0].mxu0 %v107
    %v208 = vpop.f32.mrb[0].mxu0
    %v209 = vadd.f32 0.0, %v208
    %v210 = vpop.f32.mrb[0].mxu0
    %211 = vmatprep.mubr.f32.mxu0 0.0
    %212 = vmatmul.mubr.f32.gmra.mrb[0].mxu0 %v110
    %v213 = vpop.f32.mrb[0].mxu0
    %v214 = vadd.f32 0.0, %v213
    %v215 = vpop.f32.mrb[0].mxu0
    %216 = vmatprep.mubr.f32.mxu0 0.0
    %217 = vmatmul.mubr.f32.gmra.mrb[0].mxu0 %v113
    %v218 = vpop.f32.mrb[0].mxu0
    %v219 = vadd.f32 0.0, %v218
    %v220 = vpop.f32.mrb[0].mxu0
    %221 = vmatprep.mubr.f32.mxu0 0.0
    %222 = vmatmul.mubr.f32.gmra.mrb[0].mxu0 %v116
    %v223 = vpop.f32.mrb[0].mxu0
    %v224 = vadd.f32 0.0, %v223
    %v225 = vpop.f32.mrb[0].mxu0
    %226 = vmatprep.mubr.f32.mxu0 0.0
    %227 = vmatmul.mubr.f32.gmra.mrb[0].mxu0 %v119
    %v228 = vpop.f32.mrb[0].mxu0
    %v229 = vadd.f32 0.0, %v228
    %v230 = vpop.f32.mrb[0].mxu0
    %231 = vmatprep.mubr.f32.mxu0 0.0
    %232 = vmatmul.mubr.f32.gmra.mrb[0].mxu0 %v122
    %v233 = vpop.f32.mrb[0].mxu0
    %v234 = vadd.f32 0.0, %v233
    %v235 = vpop.f32.mrb[0].mxu0
    %236 = vmatprep.mubr.f32.mxu0 0.0
    %237 = vmatmul.mubr.f32.gmra.mrb[0].mxu0 %v125
    %v238 = vpop.f32.mrb[0].mxu0
    %v239 = vadd.f32 0.0, %v238
    %v240 = vpop.f32.mrb[0].mxu0
    %241 = vmatprep.mubr.f32.mxu0 0.0
    %242 = vmatmul.mubr.f32.gmra.mrb[0].mxu0 %v128
    %v243 = vpop.f32.mrb[0].mxu0
    %v244 = vadd.f32 0.0, %v243
    %v245 = vpop.f32.mrb[0].mxu0
    %246 = vmatprep.mubr.f32.mxu0 0.0
    %247 = vmatmul.mubr.f32.gmra.mrb[0].mxu0 %v131
    %v248 = vpop.f32.mrb[0].mxu0
    %v249 = vadd.f32 0.0, %v248
    %v250 = vpop.f32.mrb[0].mxu0
    %251 = vdwg.mxu0
    %v252 = vld [vmem:[#allocation5] sm:$0xff]
    %v253 = vld [vmem:[#allocation5 + $0x8] sm:$0xff]
    %v254 = vld [vmem:[#allocation5 + $0x10] sm:$0xff]
    %v255 = vld [vmem:[#allocation5 + $0x18] sm:$0xff]
    %s256 = scalar_lea.vmem [#allocation7], 120
    %v257 = vld [vmem:[%s256] sm:$0xff]
    %v258 = vld [vmem:[%s256 + $0x8] sm:$0xff]
    %v259 = vld [vmem:[%s256 + $0x10] sm:$0xff]
    %v260 = vld [vmem:[%s256 + $0x18] sm:$0xff]
    %v261 = vld [vmem:[%s256 + $0x20] sm:$0xff]
    %v262 = vld [vmem:[%s256 + $0x28] sm:$0xff]
    %v263 = vld [vmem:[%s256 + $0x30] sm:$0xff]
    %v264 = vld [vmem:[%s256 + $0x38] sm:$0xff]
    %v265 = vld [vmem:[%s256 + $0x40] sm:$0xff]
    %v266 = vld [vmem:[%s256 + $0x48] sm:$0xff]
    %v267 = vld [vmem:[%s256 + $0x50] sm:$0xff]
    %v268 = vld [vmem:[%s256 + $0x58] sm:$0xff]
    %v269 = vld [vmem:[%s256 + $0x60] sm:$0xff]
    %v270 = vld [vmem:[%s256 + $0x68] sm:$0xff]
    %v271 = vld [vmem:[%s256 + $0x70] sm:$0x3]
    %v273 = vsel %vm133, %v271, 0
    %275 = vmatprep.subr.mxu0 0.0
    %276 = vmatpush1.msra.mxu0 %v257
    %277 = vmatprep.subr.mxu0 0.0
    %278 = vmatpush1.msra.mxu0 %v258
    %279 = vmatprep.subr.mxu0 0.0
    %280 = vmatpush1.msra.mxu0 %v259
    %281 = vmatprep.subr.mxu0 0.0
    %282 = vmatpush1.msra.mxu0 %v260
    %283 = vmatprep.subr.mxu0 0.0
    %284 = vmatpush1.msra.mxu0 %v261
    %285 = vmatprep.subr.mxu0 0.0
    %286 = vmatpush1.msra.mxu0 %v262
    %287 = vmatprep.subr.mxu0 0.0
    %288 = vmatpush1.msra.mxu0 %v263
    %289 = vmatprep.subr.mxu0 0.0
    %290 = vmatpush1.msra.mxu0 %v264
    %291 = vmatprep.subr.mxu0 0.0
    %292 = vmatpush1.msra.mxu0 %v265
    %293 = vmatprep.subr.mxu0 0.0
    %294 = vmatpush1.msra.mxu0 %v266
    %295 = vmatprep.subr.mxu0 0.0
    %296 = vmatpush1.msra.mxu0 %v267
    %297 = vmatprep.subr.mxu0 0.0
    %298 = vmatpush1.msra.mxu0 %v268
    %299 = vmatprep.subr.mxu0 0.0
    %300 = vmatpush1.msra.mxu0 %v269
    %301 = vmatprep.subr.mxu0 0.0
    %302 = vmatpush1.msra.mxu0 %v270
    %303 = vmatprep.subr.mxu0 0.0
    %304 = vmatpush1.msra.mxu0 %v273
    %305 = vmatprep.subr.mxu0 0.0
    %306 = vmatpush1.msra.mxu0 0.0
    %307 = vmatprep.subr.mxu0 0.0
    %308 = vmatpush1.msra.mxu0 0.0
    %309 = vmatprep.subr.mxu0 0.0
    %310 = vmatpush1.msra.mxu0 0.0
    %311 = vmatprep.subr.mxu0 0.0
    %312 = vmatpush1.msra.mxu0 0.0
    %313 = vmatprep.subr.mxu0 0.0
    %314 = vmatpush1.msra.mxu0 0.0
    %315 = vmatprep.subr.mxu0 0.0
    %316 = vmatpush1.msra.mxu0 0.0
    %317 = vmatprep.subr.mxu0 0.0
    %318 = vmatpush1.msra.mxu0 0.0
    %319 = vmatprep.subr.mxu0 0.0
    %320 = vmatpush1.msra.mxu0 0.0
    %321 = vmatprep.subr.mxu0 0.0
    %322 = vmatpush1.msra.mxu0 0.0
    %323 = vmatprep.subr.mxu0 0.0
    %324 = vmatpush1.msra.mxu0 0.0
    %325 = vmatprep.subr.mxu0 0.0
    %326 = vmatpush1.msra.mxu0 0.0
    %327 = vmatprep.subr.mxu0 0.0
    %328 = vmatpush1.msra.mxu0 0.0
    %329 = vmatprep.subr.mxu0 0.0
    %330 = vmatpush1.msra.mxu0 0.0
    %331 = vmatprep.subr.mxu0 0.0
    %332 = vmatpush1.msra.mxu0 0.0
    %333 = vmatprep.subr.mxu0 0.0
    %334 = vmatpush1.msra.mxu0 0.0
    %335 = vmatprep.subr.mxu0 0.0
    %336 = vmatpush1.msra.mxu0 0.0
    %337 = vmatprep.subr.mxu0 0.0
    %338 = vmatpush1.msra.mxu0 0.0
    %339 = vmatprep.mubr.f32.mxu0 0.0
    %340 = vmatmul.mubr.f32.gmra.mrb[0].mxu0 %v104
    %v341 = vpop.f32.mrb[0].mxu0
    %v342 = vadd.f32 0.0, %v341
    %v343 = vpop.f32.mrb[0].mxu0
    %344 = vmatprep.mubr.f32.mxu0 0.0
    %345 = vmatmul.mubr.f32.gmra.mrb[0].mxu0 %v107
    %v346 = vpop.f32.mrb[0].mxu0
    %v347 = vadd.f32 0.0, %v346
    %v348 = vpop.f32.mrb[0].mxu0
    %349 = vmatprep.mubr.f32.mxu0 0.0
    %350 = vmatmul.mubr.f32.gmra.mrb[0].mxu0 %v110
    %v351 = vpop.f32.mrb[0].mxu0
    %v352 = vadd.f32 0.0, %v351
    %v353 = vpop.f32.mrb[0].mxu0
    %354 = vmatprep.mubr.f32.mxu0 0.0
    %355 = vmatmul.mubr.f32.gmra.mrb[0].mxu0 %v113
    %v356 = vpop.f32.mrb[0].mxu0
    %v357 = vadd.f32 0.0, %v356
    %v358 = vpop.f32.mrb[0].mxu0
    %359 = vmatprep.mubr.f32.mxu0 0.0
    %360 = vmatmul.mubr.f32.gmra.mrb[0].mxu0 %v116
    %v361 = vpop.f32.mrb[0].mxu0
    %v362 = vadd.f32 0.0, %v361
    %v363 = vpop.f32.mrb[0].mxu0
    %364 = vmatprep.mubr.f32.mxu0 0.0
    %365 = vmatmul.mubr.f32.gmra.mrb[0].mxu0 %v119
    %v366 = vpop.f32.mrb[0].mxu0
    %v367 = vadd.f32 0.0, %v366
    %v368 = vpop.f32.mrb[0].mxu0
    %369 = vmatprep.mubr.f32.mxu0 0.0
    %370 = vmatmul.mubr.f32.gmra.mrb[0].mxu0 %v122
    %v371 = vpop.f32.mrb[0].mxu0
    %v372 = vadd.f32 0.0, %v371
    %v373 = vpop.f32.mrb[0].mxu0
    %374 = vmatprep.mubr.f32.mxu0 0.0
    %375 = vmatmul.mubr.f32.gmra.mrb[0].mxu0 %v125
    %v376 = vpop.f32.mrb[0].mxu0
    %v377 = vadd.f32 0.0, %v376
    %v378 = vpop.f32.mrb[0].mxu0
    %379 = vmatprep.mubr.f32.mxu0 0.0
    %380 = vmatmul.mubr.f32.gmra.mrb[0].mxu0 %v128
    %v381 = vpop.f32.mrb[0].mxu0
    %v382 = vadd.f32 0.0, %v381
    %v383 = vpop.f32.mrb[0].mxu0
    %384 = vmatprep.mubr.f32.mxu0 0.0
    %385 = vmatmul.mubr.f32.gmra.mrb[0].mxu0 %v131
    %v386 = vpop.f32.mrb[0].mxu0
    %v387 = vadd.f32 0.0, %v386
    %v388 = vpop.f32.mrb[0].mxu0
    %389 = vdwg.mxu0
    %s390 = scalar_lea.vmem [#allocation5], 32
    %v391 = vld [vmem:[%s390] sm:$0xff]
    %v392 = vld [vmem:[%s390 + $0x8] sm:$0xff]
    %v393 = vld [vmem:[%s390 + $0x10] sm:$0xff]
    %v394 = vld [vmem:[%s390 + $0x18] sm:$0xff]
    %vm395 = vcmask 621568
    %v397 = vsel %vm395, %v391, 0
    %v400 = vsel %vm395, %v392, 0
    %v403 = vsel %vm395, %v393, 0
    %v406 = vsel %vm395, %v394, 0
    %vm408 = vcmask 1043456
    %v410 = vsel %vm408, %v387, 0
    %412 = vmatprep.subr.mxu0 0.0
    %413 = vmatpush1.msra.mxu0 %v342
    %414 = vmatprep.subr.mxu0 0.0
    %415 = vmatpush1.msra.mxu0 %v347
    %416 = vmatprep.subr.mxu0 0.0
    %417 = vmatpush1.msra.mxu0 %v352
    %418 = vmatprep.subr.mxu0 0.0
    %419 = vmatpush1.msra.mxu0 %v357
    %420 = vmatprep.subr.mxu0 0.0
    %421 = vmatpush1.msra.mxu0 %v362
    %422 = vmatprep.subr.mxu0 0.0
    %423 = vmatpush1.msra.mxu0 %v367
    %424 = vmatprep.subr.mxu0 0.0
    %425 = vmatpush1.msra.mxu0 %v372
    %426 = vmatprep.subr.mxu0 0.0
    %427 = vmatpush1.msra.mxu0 %v377
    %428 = vmatprep.subr.mxu0 0.0
    %429 = vmatpush1.msra.mxu0 %v382
    %430 = vmatprep.subr.mxu0 0.0
    %431 = vmatpush1.msra.mxu0 %v410
    %432 = vmatprep.subr.mxu0 0.0
    %433 = vmatpush1.msra.mxu0 0.0
    %434 = vmatprep.subr.mxu0 0.0
    %435 = vmatpush1.msra.mxu0 0.0
    %436 = vmatprep.subr.mxu0 0.0
    %437 = vmatpush1.msra.mxu0 0.0
    %438 = vmatprep.subr.mxu0 0.0
    %439 = vmatpush1.msra.mxu0 0.0
    %440 = vmatprep.subr.mxu0 0.0
    %441 = vmatpush1.msra.mxu0 0.0
    %442 = vmatprep.subr.mxu0 0.0
    %443 = vmatpush1.msra.mxu0 0.0
    %444 = vmatprep.subr.mxu0 0.0
    %445 = vmatpush1.msra.mxu0 0.0
    %446 = vmatprep.subr.mxu0 0.0
    %447 = vmatpush1.msra.mxu0 0.0
    %448 = vmatprep.subr.mxu0 0.0
    %449 = vmatpush1.msra.mxu0 0.0
    %450 = vmatprep.subr.mxu0 0.0
    %451 = vmatpush1.msra.mxu0 0.0
    %452 = vmatprep.subr.mxu0 0.0
    %453 = vmatpush1.msra.mxu0 0.0
    %454 = vmatprep.subr.mxu0 0.0
    %455 = vmatpush1.msra.mxu0 0.0
    %456 = vmatprep.subr.mxu0 0.0
    %457 = vmatpush1.msra.mxu0 0.0
    %458 = vmatprep.subr.mxu0 0.0
    %459 = vmatpush1.msra.mxu0 0.0
    %460 = vmatprep.subr.mxu0 0.0
    %461 = vmatpush1.msra.mxu0 0.0
    %462 = vmatprep.subr.mxu0 0.0
    %463 = vmatpush1.msra.mxu0 0.0
    %464 = vmatprep.subr.mxu0 0.0
    %465 = vmatpush1.msra.mxu0 0.0
    %466 = vmatprep.subr.mxu0 0.0
    %467 = vmatpush1.msra.mxu0 0.0
    %468 = vmatprep.subr.mxu0 0.0
    %469 = vmatpush1.msra.mxu0 0.0
    %470 = vmatprep.subr.mxu0 0.0
    %471 = vmatpush1.msra.mxu0 0.0
    %472 = vmatprep.subr.mxu0 0.0
    %473 = vmatpush1.msra.mxu0 0.0
    %474 = vmatprep.subr.mxu0 0.0
    %475 = vmatpush1.msra.mxu0 0.0
    %476 = vmatprep.mubr.f32.mxu0 0.0
    %477 = vmatmul.mubr.f32.gmra.mrb[0].mxu0 %v397
    %v478 = vpop.f32.mrb[0].mxu0
    %v479 = vadd.f32 0.0, %v478
    %v480 = vpop.f32.mrb[0].mxu0
    %481 = vmatprep.mubr.f32.mxu0 0.0
    %482 = vmatmul.mubr.f32.gmra.mrb[0].mxu0 %v400
    %v483 = vpop.f32.mrb[0].mxu0
    %v484 = vadd.f32 0.0, %v483
    %v485 = vpop.f32.mrb[0].mxu0
    %486 = vmatprep.mubr.f32.mxu0 0.0
    %487 = vmatmul.mubr.f32.gmra.mrb[0].mxu0 %v403
    %v488 = vpop.f32.mrb[0].mxu0
    %v489 = vadd.f32 0.0, %v488
    %v490 = vpop.f32.mrb[0].mxu0
    %491 = vmatprep.mubr.f32.mxu0 0.0
    %492 = vmatmul.mubr.f32.gmra.mrb[0].mxu0 %v406
    %v493 = vpop.f32.mrb[0].mxu0
    %v494 = vadd.f32 0.0, %v493
    %v495 = vpop.f32.mrb[0].mxu0
    %496 = vdwg.mxu0
    %v498 = vsel %vm395, %v252, 0
    %v501 = vsel %vm395, %v253, 0
    %v504 = vsel %vm395, %v254, 0
    %v507 = vsel %vm395, %v255, 0
    %v510 = vsel %vm408, %v249, 0
    %512 = vmatprep.subr.mxu0 0.0
    %513 = vmatpush1.msra.mxu0 %v204
    %514 = vmatprep.subr.mxu0 0.0
    %515 = vmatpush1.msra.mxu0 %v209
    %516 = vmatprep.subr.mxu0 0.0
    %517 = vmatpush1.msra.mxu0 %v214
    %518 = vmatprep.subr.mxu0 0.0
    %519 = vmatpush1.msra.mxu0 %v219
    %520 = vmatprep.subr.mxu0 0.0
    %521 = vmatpush1.msra.mxu0 %v224
    %522 = vmatprep.subr.mxu0 0.0
    %523 = vmatpush1.msra.mxu0 %v229
    %524 = vmatprep.subr.mxu0 0.0
    %525 = vmatpush1.msra.mxu0 %v234
    %526 = vmatprep.subr.mxu0 0.0
    %527 = vmatpush1.msra.mxu0 %v239
    %528 = vmatprep.subr.mxu0 0.0
    %529 = vmatpush1.msra.mxu0 %v244
    %530 = vmatprep.subr.mxu0 0.0
    %531 = vmatpush1.msra.mxu0 %v510
    %532 = vmatprep.subr.mxu0 0.0
    %533 = vmatpush1.msra.mxu0 0.0
    %534 = vmatprep.subr.mxu0 0.0
    %535 = vmatpush1.msra.mxu0 0.0
    %536 = vmatprep.subr.mxu0 0.0
    %537 = vmatpush1.msra.mxu0 0.0
    %538 = vmatprep.subr.mxu0 0.0
    %539 = vmatpush1.msra.mxu0 0.0
    %540 = vmatprep.subr.mxu0 0.0
    %541 = vmatpush1.msra.mxu0 0.0
    %542 = vmatprep.subr.mxu0 0.0
    %543 = vmatpush1.msra.mxu0 0.0
    %544 = vmatprep.subr.mxu0 0.0
    %545 = vmatpush1.msra.mxu0 0.0
    %546 = vmatprep.subr.mxu0 0.0
    %547 = vmatpush1.msra.mxu0 0.0
    %548 = vmatprep.subr.mxu0 0.0
    %549 = vmatpush1.msra.mxu0 0.0
    %550 = vmatprep.subr.mxu0 0.0
    %551 = vmatpush1.msra.mxu0 0.0
    %552 = vmatprep.subr.mxu0 0.0
    %553 = vmatpush1.msra.mxu0 0.0
    %554 = vmatprep.subr.mxu0 0.0
    %555 = vmatpush1.msra.mxu0 0.0
    %556 = vmatprep.subr.mxu0 0.0
    %557 = vmatpush1.msra.mxu0 0.0
    %558 = vmatprep.subr.mxu0 0.0
    %559 = vmatpush1.msra.mxu0 0.0
    %560 = vmatprep.subr.mxu0 0.0
    %561 = vmatpush1.msra.mxu0 0.0
    %562 = vmatprep.subr.mxu0 0.0
    %563 = vmatpush1.msra.mxu0 0.0
    %564 = vmatprep.subr.mxu0 0.0
    %565 = vmatpush1.msra.mxu0 0.0
    %566 = vmatprep.subr.mxu0 0.0
    %567 = vmatpush1.msra.mxu0 0.0
    %568 = vmatprep.subr.mxu0 0.0
    %569 = vmatpush1.msra.mxu0 0.0
    %570 = vmatprep.subr.mxu0 0.0
    %571 = vmatpush1.msra.mxu0 0.0
    %572 = vmatprep.subr.mxu0 0.0
    %573 = vmatpush1.msra.mxu0 0.0
    %574 = vmatprep.subr.mxu0 0.0
    %575 = vmatpush1.msra.mxu0 0.0
    %576 = vmatprep.mubr.f32.mxu0 0.0
    %577 = vmatmul.mubr.f32.gmra.mrb[0].mxu0 %v498
    %v578 = vpop.f32.mrb[0].mxu0
    %v579 = vadd.f32 %v479, %v578
    %v580 = vpop.f32.mrb[0].mxu0
    %581 = vmatprep.mubr.f32.mxu0 0.0
    %582 = vmatmul.mubr.f32.gmra.mrb[0].mxu0 %v501
    %v583 = vpop.f32.mrb[0].mxu0
    %v584 = vadd.f32 %v484, %v583
    %v585 = vpop.f32.mrb[0].mxu0
    %586 = vmatprep.mubr.f32.mxu0 0.0
    %587 = vmatmul.mubr.f32.gmra.mrb[0].mxu0 %v504
    %v588 = vpop.f32.mrb[0].mxu0
    %v589 = vadd.f32 %v489, %v588
    %v590 = vpop.f32.mrb[0].mxu0
    %591 = vmatprep.mubr.f32.mxu0 0.0
    %592 = vmatmul.mubr.f32.gmra.mrb[0].mxu0 %v507
    %v593 = vpop.f32.mrb[0].mxu0
    %v594 = vadd.f32 %v494, %v593
    %v595 = vpop.f32.mrb[0].mxu0
    %596 = vdwg.mxu0
    %s597 = scalar_lea.vmem [#allocation7], 240
    %v598 = vld [vmem:[%s597] sm:$0xff]
    %v599 = vld [vmem:[%s597 + $0x8] sm:$0xff]
    %v600 = vld [vmem:[%s597 + $0x10] sm:$0xff]
    %v601 = vld [vmem:[%s597 + $0x18] sm:$0xff]
    %v602 = vld [vmem:[%s597 + $0x20] sm:$0xff]
    %v603 = vld [vmem:[%s597 + $0x28] sm:$0xff]
    %v604 = vld [vmem:[%s597 + $0x30] sm:$0xff]
    %v605 = vld [vmem:[%s597 + $0x38] sm:$0xff]
    %v606 = vld [vmem:[%s597 + $0x40] sm:$0xff]
    %v607 = vld [vmem:[%s597 + $0x48] sm:$0xff]
    %v608 = vld [vmem:[%s597 + $0x50] sm:$0xff]
    %v609 = vld [vmem:[%s597 + $0x58] sm:$0xff]
    %v610 = vld [vmem:[%s597 + $0x60] sm:$0xff]
    %v611 = vld [vmem:[%s597 + $0x68] sm:$0xff]
    %v612 = vld [vmem:[%s597 + $0x70] sm:$0x3]
    %v614 = vsel %vm133, %v612, 0
    %616 = vmatprep.subr.mxu0 0.0
    %617 = vmatpush1.msra.mxu0 %v598
    %618 = vmatprep.subr.mxu0 0.0
    %619 = vmatpush1.msra.mxu0 %v599
    %620 = vmatprep.subr.mxu0 0.0
    %621 = vmatpush1.msra.mxu0 %v600
    %622 = vmatprep.subr.mxu0 0.0
    %623 = vmatpush1.msra.mxu0 %v601
    %624 = vmatprep.subr.mxu0 0.0
    %625 = vmatpush1.msra.mxu0 %v602
    %626 = vmatprep.subr.mxu0 0.0
    %627 = vmatpush1.msra.mxu0 %v603
    %628 = vmatprep.subr.mxu0 0.0
    %629 = vmatpush1.msra.mxu0 %v604
    %630 = vmatprep.subr.mxu0 0.0
    %631 = vmatpush1.msra.mxu0 %v605
    %632 = vmatprep.subr.mxu0 0.0
    %633 = vmatpush1.msra.mxu0 %v606
    %634 = vmatprep.subr.mxu0 0.0
    %635 = vmatpush1.msra.mxu0 %v607
    %636 = vmatprep.subr.mxu0 0.0
    %637 = vmatpush1.msra.mxu0 %v608
    %638 = vmatprep.subr.mxu0 0.0
    %639 = vmatpush1.msra.mxu0 %v609
    %640 = vmatprep.subr.mxu0 0.0
    %641 = vmatpush1.msra.mxu0 %v610
    %642 = vmatprep.subr.mxu0 0.0
    %643 = vmatpush1.msra.mxu0 %v611
    %644 = vmatprep.subr.mxu0 0.0
    %645 = vmatpush1.msra.mxu0 %v614
    %646 = vmatprep.subr.mxu0 0.0
    %647 = vmatpush1.msra.mxu0 0.0
    %648 = vmatprep.subr.mxu0 0.0
    %649 = vmatpush1.msra.mxu0 0.0
    %650 = vmatprep.subr.mxu0 0.0
    %651 = vmatpush1.msra.mxu0 0.0
    %652 = vmatprep.subr.mxu0 0.0
    %653 = vmatpush1.msra.mxu0 0.0
    %654 = vmatprep.subr.mxu0 0.0
    %655 = vmatpush1.msra.mxu0 0.0
    %656 = vmatprep.subr.mxu0 0.0
    %657 = vmatpush1.msra.mxu0 0.0
    %658 = vmatprep.subr.mxu0 0.0
    %659 = vmatpush1.msra.mxu0 0.0
    %660 = vmatprep.subr.mxu0 0.0
    %661 = vmatpush1.msra.mxu0 0.0
    %662 = vmatprep.subr.mxu0 0.0
    %663 = vmatpush1.msra.mxu0 0.0
    %664 = vmatprep.subr.mxu0 0.0
    %665 = vmatpush1.msra.mxu0 0.0
    %666 = vmatprep.subr.mxu0 0.0
    %667 = vmatpush1.msra.mxu0 0.0
    %668 = vmatprep.subr.mxu0 0.0
    %669 = vmatpush1.msra.mxu0 0.0
    %670 = vmatprep.subr.mxu0 0.0
    %671 = vmatpush1.msra.mxu0 0.0
    %672 = vmatprep.subr.mxu0 0.0
    %673 = vmatpush1.msra.mxu0 0.0
    %674 = vmatprep.subr.mxu0 0.0
    %675 = vmatpush1.msra.mxu0 0.0
    %676 = vmatprep.subr.mxu0 0.0
    %677 = vmatpush1.msra.mxu0 0.0
    %678 = vmatprep.subr.mxu0 0.0
    %679 = vmatpush1.msra.mxu0 0.0
    %680 = vmatprep.mubr.f32.mxu0 0.0
    %681 = vmatmul.mubr.f32.gmra.mrb[0].mxu0 %v104
    %v682 = vpop.f32.mrb[0].mxu0
    %v683 = vadd.f32 0.0, %v682
    %v684 = vpop.f32.mrb[0].mxu0
    %685 = vmatprep.mubr.f32.mxu0 0.0
    %686 = vmatmul.mubr.f32.gmra.mrb[0].mxu0 %v107
    %v687 = vpop.f32.mrb[0].mxu0
    %v688 = vadd.f32 0.0, %v687
    %v689 = vpop.f32.mrb[0].mxu0
    %690 = vmatprep.mubr.f32.mxu0 0.0
    %691 = vmatmul.mubr.f32.gmra.mrb[0].mxu0 %v110
    %v692 = vpop.f32.mrb[0].mxu0
    %v693 = vadd.f32 0.0, %v692
    %v694 = vpop.f32.mrb[0].mxu0
    %695 = vmatprep.mubr.f32.mxu0 0.0
    %696 = vmatmul.mubr.f32.gmra.mrb[0].mxu0 %v113
    %v697 = vpop.f32.mrb[0].mxu0
    %v698 = vadd.f32 0.0, %v697
    %v699 = vpop.f32.mrb[0].mxu0
    %700 = vmatprep.mubr.f32.mxu0 0.0
    %701 = vmatmul.mubr.f32.gmra.mrb[0].mxu0 %v116
    %v702 = vpop.f32.mrb[0].mxu0
    %v703 = vadd.f32 0.0, %v702
    %v704 = vpop.f32.mrb[0].mxu0
    %705 = vmatprep.mubr.f32.mxu0 0.0
    %706 = vmatmul.mubr.f32.gmra.mrb[0].mxu0 %v119
    %v707 = vpop.f32.mrb[0].mxu0
    %v708 = vadd.f32 0.0, %v707
    %v709 = vpop.f32.mrb[0].mxu0
    %710 = vmatprep.mubr.f32.mxu0 0.0
    %711 = vmatmul.mubr.f32.gmra.mrb[0].mxu0 %v122
    %v712 = vpop.f32.mrb[0].mxu0
    %v713 = vadd.f32 0.0, %v712
    %v714 = vpop.f32.mrb[0].mxu0
    %715 = vmatprep.mubr.f32.mxu0 0.0
    %716 = vmatmul.mubr.f32.gmra.mrb[0].mxu0 %v125
    %v717 = vpop.f32.mrb[0].mxu0
    %v718 = vadd.f32 0.0, %v717
    %v719 = vpop.f32.mrb[0].mxu0
    %720 = vmatprep.mubr.f32.mxu0 0.0
    %721 = vmatmul.mubr.f32.gmra.mrb[0].mxu0 %v128
    %v722 = vpop.f32.mrb[0].mxu0
    %v723 = vadd.f32 0.0, %v722
    %v724 = vpop.f32.mrb[0].mxu0
    %725 = vmatprep.mubr.f32.mxu0 0.0
    %726 = vmatmul.mubr.f32.gmra.mrb[0].mxu0 %v131
    %v727 = vpop.f32.mrb[0].mxu0
    %v728 = vadd.f32 0.0, %v727
    %v729 = vpop.f32.mrb[0].mxu0
    %730 = vdwg.mxu0
    %s731 = scalar_lea.vmem [#allocation5], 64
    %v732 = vld [vmem:[%s731] sm:$0xff]
    %v733 = vld [vmem:[%s731 + $0x8] sm:$0xff]
    %v734 = vld [vmem:[%s731 + $0x10] sm:$0xff]
    %v735 = vld [vmem:[%s731 + $0x18] sm:$0xff]
    %v737 = vsel %vm395, %v732, 0
    %v740 = vsel %vm395, %v733, 0
    %v743 = vsel %vm395, %v734, 0
    %v746 = vsel %vm395, %v735, 0
    %v749 = vsel %vm408, %v728, 0
    %751 = vmatprep.subr.mxu0 0.0
    %752 = vmatpush1.msra.mxu0 %v683
    %753 = vmatprep.subr.mxu0 0.0
    %754 = vmatpush1.msra.mxu0 %v688
    %755 = vmatprep.subr.mxu0 0.0
    %756 = vmatpush1.msra.mxu0 %v693
    %757 = vmatprep.subr.mxu0 0.0
    %758 = vmatpush1.msra.mxu0 %v698
    %759 = vmatprep.subr.mxu0 0.0
    %760 = vmatpush1.msra.mxu0 %v703
    %761 = vmatprep.subr.mxu0 0.0
    %762 = vmatpush1.msra.mxu0 %v708
    %763 = vmatprep.subr.mxu0 0.0
    %764 = vmatpush1.msra.mxu0 %v713
    %765 = vmatprep.subr.mxu0 0.0
    %766 = vmatpush1.msra.mxu0 %v718
    %767 = vmatprep.subr.mxu0 0.0
    %768 = vmatpush1.msra.mxu0 %v723
    %769 = vmatprep.subr.mxu0 0.0
    %770 = vmatpush1.msra.mxu0 %v749
    %771 = vmatprep.subr.mxu0 0.0
    %772 = vmatpush1.msra.mxu0 0.0
    %773 = vmatprep.subr.mxu0 0.0
    %774 = vmatpush1.msra.mxu0 0.0
    %775 = vmatprep.subr.mxu0 0.0
    %776 = vmatpush1.msra.mxu0 0.0
    %777 = vmatprep.subr.mxu0 0.0
    %778 = vmatpush1.msra.mxu0 0.0
    %779 = vmatprep.subr.mxu0 0.0
    %780 = vmatpush1.msra.mxu0 0.0
    %781 = vmatprep.subr.mxu0 0.0
    %782 = vmatpush1.msra.mxu0 0.0
    %783 = vmatprep.subr.mxu0 0.0
    %784 = vmatpush1.msra.mxu0 0.0
    %785 = vmatprep.subr.mxu0 0.0
    %786 = vmatpush1.msra.mxu0 0.0
    %787 = vmatprep.subr.mxu0 0.0
    %788 = vmatpush1.msra.mxu0 0.0
    %789 = vmatprep.subr.mxu0 0.0
    %790 = vmatpush1.msra.mxu0 0.0
    %791 = vmatprep.subr.mxu0 0.0
    %792 = vmatpush1.msra.mxu0 0.0
    %793 = vmatprep.subr.mxu0 0.0
    %794 = vmatpush1.msra.mxu0 0.0
    %795 = vmatprep.subr.mxu0 0.0
    %796 = vmatpush1.msra.mxu0 0.0
    %797 = vmatprep.subr.mxu0 0.0
    %798 = vmatpush1.msra.mxu0 0.0
    %799 = vmatprep.subr.mxu0 0.0
    %800 = vmatpush1.msra.mxu0 0.0
    %801 = vmatprep.subr.mxu0 0.0
    %802 = vmatpush1.msra.mxu0 0.0
    %803 = vmatprep.subr.mxu0 0.0
    %804 = vmatpush1.msra.mxu0 0.0
    %805 = vmatprep.subr.mxu0 0.0
    %806 = vmatpush1.msra.mxu0 0.0
    %807 = vmatprep.subr.mxu0 0.0
    %808 = vmatpush1.msra.mxu0 0.0
    %809 = vmatprep.subr.mxu0 0.0
    %810 = vmatpush1.msra.mxu0 0.0
    %811 = vmatprep.subr.mxu0 0.0
    %812 = vmatpush1.msra.mxu0 0.0
    %813 = vmatprep.subr.mxu0 0.0
    %814 = vmatpush1.msra.mxu0 0.0
    %815 = vmatprep.mubr.f32.mxu0 0.0
    %816 = vmatmul.mubr.f32.gmra.mrb[0].mxu0 %v737
    %v817 = vpop.f32.mrb[0].mxu0
    %v818 = vadd.f32 0.0, %v817
    %v819 = vpop.f32.mrb[0].mxu0
    %820 = vmatprep.mubr.f32.mxu0 0.0
    %821 = vmatmul.mubr.f32.gmra.mrb[0].mxu0 %v740
    %v822 = vpop.f32.mrb[0].mxu0
    %v823 = vadd.f32 0.0, %v822
    %v824 = vpop.f32.mrb[0].mxu0
    %825 = vmatprep.mubr.f32.mxu0 0.0
    %826 = vmatmul.mubr.f32.gmra.mrb[0].mxu0 %v743
    %v827 = vpop.f32.mrb[0].mxu0
    %v828 = vadd.f32 0.0, %v827
    %v829 = vpop.f32.mrb[0].mxu0
    %830 = vmatprep.mubr.f32.mxu0 0.0
    %831 = vmatmul.mubr.f32.gmra.mrb[0].mxu0 %v746
    %v832 = vpop.f32.mrb[0].mxu0
    %v833 = vadd.f32 0.0, %v832
    %v834 = vpop.f32.mrb[0].mxu0
    %835 = vdwg.mxu0
    %v836 = vadd.f32 %v579, %v818
    %v837 = vadd.f32 %v584, %v823
    %v838 = vadd.f32 %v589, %v828
    %v839 = vadd.f32 %v594, %v833
    %s840 = scalar_lea.vmem [#allocation7], 360
    %v841 = vld [vmem:[%s840] sm:$0xff]
    %v842 = vld [vmem:[%s840 + $0x8] sm:$0xff]
    %v843 = vld [vmem:[%s840 + $0x10] sm:$0xff]
    %v844 = vld [vmem:[%s840 + $0x18] sm:$0xff]
    %v845 = vld [vmem:[%s840 + $0x20] sm:$0xff]
    %v846 = vld [vmem:[%s840 + $0x28] sm:$0xff]
    %v847 = vld [vmem:[%s840 + $0x30] sm:$0xff]
    %v848 = vld [vmem:[%s840 + $0x38] sm:$0xff]
    %v849 = vld [vmem:[%s840 + $0x40] sm:$0xff]
    %v850 = vld [vmem:[%s840 + $0x48] sm:$0xff]
    %v851 = vld [vmem:[%s840 + $0x50] sm:$0xff]
    %v852 = vld [vmem:[%s840 + $0x58] sm:$0xff]
    %v853 = vld [vmem:[%s840 + $0x60] sm:$0xff]
    %v854 = vld [vmem:[%s840 + $0x68] sm:$0xff]
    %v855 = vld [vmem:[%s840 + $0x70] sm:$0x3]
    %v857 = vsel %vm133, %v855, 0
    %859 = vmatprep.subr.mxu0 0.0
    %860 = vmatpush1.msra.mxu0 %v841
    %861 = vmatprep.subr.mxu0 0.0
    %862 = vmatpush1.msra.mxu0 %v842
    %863 = vmatprep.subr.mxu0 0.0
    %864 = vmatpush1.msra.mxu0 %v843
    %865 = vmatprep.subr.mxu0 0.0
    %866 = vmatpush1.msra.mxu0 %v844
    %867 = vmatprep.subr.mxu0 0.0
    %868 = vmatpush1.msra.mxu0 %v845
    %869 = vmatprep.subr.mxu0 0.0
    %870 = vmatpush1.msra.mxu0 %v846
    %871 = vmatprep.subr.mxu0 0.0
    %872 = vmatpush1.msra.mxu0 %v847
    %873 = vmatprep.subr.mxu0 0.0
    %874 = vmatpush1.msra.mxu0 %v848
    %875 = vmatprep.subr.mxu0 0.0
    %876 = vmatpush1.msra.mxu0 %v849
    %877 = vmatprep.subr.mxu0 0.0
    %878 = vmatpush1.msra.mxu0 %v850
    %879 = vmatprep.subr.mxu0 0.0
    %880 = vmatpush1.msra.mxu0 %v851
    %881 = vmatprep.subr.mxu0 0.0
    %882 = vmatpush1.msra.mxu0 %v852
    %883 = vmatprep.subr.mxu0 0.0
    %884 = vmatpush1.msra.mxu0 %v853
    %885 = vmatprep.subr.mxu0 0.0
    %886 = vmatpush1.msra.mxu0 %v854
    %887 = vmatprep.subr.mxu0 0.0
    %888 = vmatpush1.msra.mxu0 %v857
    %889 = vmatprep.subr.mxu0 0.0
    %890 = vmatpush1.msra.mxu0 0.0
    %891 = vmatprep.subr.mxu0 0.0
    %892 = vmatpush1.msra.mxu0 0.0
    %893 = vmatprep.subr.mxu0 0.0
    %894 = vmatpush1.msra.mxu0 0.0
    %895 = vmatprep.subr.mxu0 0.0
    %896 = vmatpush1.msra.mxu0 0.0
    %897 = vmatprep.subr.mxu0 0.0
    %898 = vmatpush1.msra.mxu0 0.0
    %899 = vmatprep.subr.mxu0 0.0
    %900 = vmatpush1.msra.mxu0 0.0
    %901 = vmatprep.subr.mxu0 0.0
    %902 = vmatpush1.msra.mxu0 0.0
    %903 = vmatprep.subr.mxu0 0.0
    %904 = vmatpush1.msra.mxu0 0.0
    %905 = vmatprep.subr.mxu0 0.0
    %906 = vmatpush1.msra.mxu0 0.0
    %907 = vmatprep.subr.mxu0 0.0
    %908 = vmatpush1.msra.mxu0 0.0
    %909 = vmatprep.subr.mxu0 0.0
    %910 = vmatpush1.msra.mxu0 0.0
    %911 = vmatprep.subr.mxu0 0.0
    %912 = vmatpush1.msra.mxu0 0.0
    %913 = vmatprep.subr.mxu0 0.0
    %914 = vmatpush1.msra.mxu0 0.0
    %915 = vmatprep.subr.mxu0 0.0
    %916 = vmatpush1.msra.mxu0 0.0
    %917 = vmatprep.subr.mxu0 0.0
    %918 = vmatpush1.msra.mxu0 0.0
    %919 = vmatprep.subr.mxu0 0.0
    %920 = vmatpush1.msra.mxu0 0.0
    %921 = vmatprep.subr.mxu0 0.0
    %922 = vmatpush1.msra.mxu0 0.0
    %923 = vmatprep.mubr.f32.mxu0 0.0
    %924 = vmatmul.mubr.f32.gmra.mrb[0].mxu0 %v104
    %v925 = vpop.f32.mrb[0].mxu0
    %v926 = vadd.f32 0.0, %v925
    %v927 = vpop.f32.mrb[0].mxu0
    %928 = vmatprep.mubr.f32.mxu0 0.0
    %929 = vmatmul.mubr.f32.gmra.mrb[0].mxu0 %v107
    %v930 = vpop.f32.mrb[0].mxu0
    %v931 = vadd.f32 0.0, %v930
    %v932 = vpop.f32.mrb[0].mxu0
    %933 = vmatprep.mubr.f32.mxu0 0.0
    %934 = vmatmul.mubr.f32.gmra.mrb[0].mxu0 %v110
    %v935 = vpop.f32.mrb[0].mxu0
    %v936 = vadd.f32 0.0, %v935
    %v937 = vpop.f32.mrb[0].mxu0
    %938 = vmatprep.mubr.f32.mxu0 0.0
    %939 = vmatmul.mubr.f32.gmra.mrb[0].mxu0 %v113
    %v940 = vpop.f32.mrb[0].mxu0
    %v941 = vadd.f32 0.0, %v940
    %v942 = vpop.f32.mrb[0].mxu0
    %943 = vmatprep.mubr.f32.mxu0 0.0
    %944 = vmatmul.mubr.f32.gmra.mrb[0].mxu0 %v116
    %v945 = vpop.f32.mrb[0].mxu0
    %v946 = vadd.f32 0.0, %v945
    %v947 = vpop.f32.mrb[0].mxu0
    %948 = vmatprep.mubr.f32.mxu0 0.0
    %949 = vmatmul.mubr.f32.gmra.mrb[0].mxu0 %v119
    %v950 = vpop.f32.mrb[0].mxu0
    %v951 = vadd.f32 0.0, %v950
    %v952 = vpop.f32.mrb[0].mxu0
    %953 = vmatprep.mubr.f32.mxu0 0.0
    %954 = vmatmul.mubr.f32.gmra.mrb[0].mxu0 %v122
    %v955 = vpop.f32.mrb[0].mxu0
    %v956 = vadd.f32 0.0, %v955
    %v957 = vpop.f32.mrb[0].mxu0
    %958 = vmatprep.mubr.f32.mxu0 0.0
    %959 = vmatmul.mubr.f32.gmra.mrb[0].mxu0 %v125
    %v960 = vpop.f32.mrb[0].mxu0
    %v961 = vadd.f32 0.0, %v960
    %v962 = vpop.f32.mrb[0].mxu0
    %963 = vmatprep.mubr.f32.mxu0 0.0
    %964 = vmatmul.mubr.f32.gmra.mrb[0].mxu0 %v128
    %v965 = vpop.f32.mrb[0].mxu0
    %v966 = vadd.f32 0.0, %v965
    %v967 = vpop.f32.mrb[0].mxu0
    %968 = vmatprep.mubr.f32.mxu0 0.0
    %969 = vmatmul.mubr.f32.gmra.mrb[0].mxu0 %v131
    %v970 = vpop.f32.mrb[0].mxu0
    %v971 = vadd.f32 0.0, %v970
    %v972 = vpop.f32.mrb[0].mxu0
    %973 = vdwg.mxu0
    %s974 = scalar_lea.vmem [#allocation5], 96
    %v975 = vld [vmem:[%s974] sm:$0xff]
    %v976 = vld [vmem:[%s974 + $0x8] sm:$0xff]
    %v977 = vld [vmem:[%s974 + $0x10] sm:$0xff]
    %v978 = vld [vmem:[%s974 + $0x18] sm:$0xff]
    %v980 = vsel %vm395, %v975, 0
    %v983 = vsel %vm395, %v976, 0
    %v986 = vsel %vm395, %v977, 0
    %v989 = vsel %vm395, %v978, 0
    %v992 = vsel %vm408, %v971, 0
    %994 = vmatprep.subr.mxu0 0.0
    %995 = vmatpush1.msra.mxu0 %v926
    %996 = vmatprep.subr.mxu0 0.0
    %997 = vmatpush1.msra.mxu0 %v931
    %998 = vmatprep.subr.mxu0 0.0
    %999 = vmatpush1.msra.mxu0 %v936
    %1000 = vmatprep.subr.mxu0 0.0
    %1001 = vmatpush1.msra.mxu0 %v941
    %1002 = vmatprep.subr.mxu0 0.0
    %1003 = vmatpush1.msra.mxu0 %v946
    %1004 = vmatprep.subr.mxu0 0.0
    %1005 = vmatpush1.msra.mxu0 %v951
    %1006 = vmatprep.subr.mxu0 0.0
    %1007 = vmatpush1.msra.mxu0 %v956
    %1008 = vmatprep.subr.mxu0 0.0
    %1009 = vmatpush1.msra.mxu0 %v961
    %1010 = vmatprep.subr.mxu0 0.0
    %1011 = vmatpush1.msra.mxu0 %v966
    %1012 = vmatprep.subr.mxu0 0.0
    %1013 = vmatpush1.msra.mxu0 %v992
    %1014 = vmatprep.subr.mxu0 0.0
    %1015 = vmatpush1.msra.mxu0 0.0
    %1016 = vmatprep.subr.mxu0 0.0
    %1017 = vmatpush1.msra.mxu0 0.0
    %1018 = vmatprep.subr.mxu0 0.0
    %1019 = vmatpush1.msra.mxu0 0.0
    %1020 = vmatprep.subr.mxu0 0.0
    %1021 = vmatpush1.msra.mxu0 0.0
    %1022 = vmatprep.subr.mxu0 0.0
    %1023 = vmatpush1.msra.mxu0 0.0
    %1024 = vmatprep.subr.mxu0 0.0
    %1025 = vmatpush1.msra.mxu0 0.0
    %1026 = vmatprep.subr.mxu0 0.0
    %1027 = vmatpush1.msra.mxu0 0.0
    %1028 = vmatprep.subr.mxu0 0.0
    %1029 = vmatpush1.msra.mxu0 0.0
    %1030 = vmatprep.subr.mxu0 0.0
    %1031 = vmatpush1.msra.mxu0 0.0
    %1032 = vmatprep.subr.mxu0 0.0
    %1033 = vmatpush1.msra.mxu0 0.0
    %1034 = vmatprep.subr.mxu0 0.0
    %1035 = vmatpush1.msra.mxu0 0.0
    %1036 = vmatprep.subr.mxu0 0.0
    %1037 = vmatpush1.msra.mxu0 0.0
    %1038 = vmatprep.subr.mxu0 0.0
    %1039 = vmatpush1.msra.mxu0 0.0
    %1040 = vmatprep.subr.mxu0 0.0
    %1041 = vmatpush1.msra.mxu0 0.0
    %1042 = vmatprep.subr.mxu0 0.0
    %1043 = vmatpush1.msra.mxu0 0.0
    %1044 = vmatprep.subr.mxu0 0.0
    %1045 = vmatpush1.msra.mxu0 0.0
    %1046 = vmatprep.subr.mxu0 0.0
    %1047 = vmatpush1.msra.mxu0 0.0
    %1048 = vmatprep.subr.mxu0 0.0
    %1049 = vmatpush1.msra.mxu0 0.0
    %1050 = vmatprep.subr.mxu0 0.0
    %1051 = vmatpush1.msra.mxu0 0.0
    %1052 = vmatprep.subr.mxu0 0.0
    %1053 = vmatpush1.msra.mxu0 0.0
    %1054 = vmatprep.subr.mxu0 0.0
    %1055 = vmatpush1.msra.mxu0 0.0
    %1056 = vmatprep.subr.mxu0 0.0
    %1057 = vmatpush1.msra.mxu0 0.0
    %1058 = vmatprep.mubr.f32.mxu0 0.0
    %1059 = vmatmul.mubr.f32.gmra.mrb[0].mxu0 %v980
    %v1060 = vpop.f32.mrb[0].mxu0
    %v1061 = vadd.f32 0.0, %v1060
    %v1062 = vpop.f32.mrb[0].mxu0
    %1063 = vmatprep.mubr.f32.mxu0 0.0
    %1064 = vmatmul.mubr.f32.gmra.mrb[0].mxu0 %v983
    %v1065 = vpop.f32.mrb[0].mxu0
    %v1066 = vadd.f32 0.0, %v1065
    %v1067 = vpop.f32.mrb[0].mxu0
    %1068 = vmatprep.mubr.f32.mxu0 0.0
    %1069 = vmatmul.mubr.f32.gmra.mrb[0].mxu0 %v986
    %v1070 = vpop.f32.mrb[0].mxu0
    %v1071 = vadd.f32 0.0, %v1070
    %v1072 = vpop.f32.mrb[0].mxu0
    %1073 = vmatprep.mubr.f32.mxu0 0.0
    %1074 = vmatmul.mubr.f32.gmra.mrb[0].mxu0 %v989
    %v1075 = vpop.f32.mrb[0].mxu0
    %v1076 = vadd.f32 0.0, %v1075
    %v1077 = vpop.f32.mrb[0].mxu0
    %1078 = vdwg.mxu0
    %v1079 = vadd.f32 %v836, %v1061
    %v1080 = vadd.f32 %v837, %v1066
    %v1081 = vadd.f32 %v838, %v1071
    %v1082 = vadd.f32 %v839, %v1076
    %s1083 = scalar_lea.vmem [#allocation7], 480
    %v1084 = vld [vmem:[%s1083] sm:$0xff]
    %v1085 = vld [vmem:[%s1083 + $0x8] sm:$0xff]
    %v1086 = vld [vmem:[%s1083 + $0x10] sm:$0xff]
    %v1087 = vld [vmem:[%s1083 + $0x18] sm:$0xff]
    %v1088 = vld [vmem:[%s1083 + $0x20] sm:$0xff]
    %v1089 = vld [vmem:[%s1083 + $0x28] sm:$0xff]
    %v1090 = vld [vmem:[%s1083 + $0x30] sm:$0xff]
    %v1091 = vld [vmem:[%s1083 + $0x38] sm:$0xff]
    %v1092 = vld [vmem:[%s1083 + $0x40] sm:$0xff]
    %v1093 = vld [vmem:[%s1083 + $0x48] sm:$0xff]
    %v1094 = vld [vmem:[%s1083 + $0x50] sm:$0xff]
    %v1095 = vld [vmem:[%s1083 + $0x58] sm:$0xff]
    %v1096 = vld [vmem:[%s1083 + $0x60] sm:$0xff]
    %v1097 = vld [vmem:[%s1083 + $0x68] sm:$0xff]
    %v1098 = vld [vmem:[%s1083 + $0x70] sm:$0x3]
    %v1100 = vsel %vm133, %v1098, 0
    %1102 = vmatprep.subr.mxu0 0.0
    %1103 = vmatpush1.msra.mxu0 %v1084
    %1104 = vmatprep.subr.mxu0 0.0
    %1105 = vmatpush1.msra.mxu0 %v1085
    %1106 = vmatprep.subr.mxu0 0.0
    %1107 = vmatpush1.msra.mxu0 %v1086
    %1108 = vmatprep.subr.mxu0 0.0
    %1109 = vmatpush1.msra.mxu0 %v1087
    %1110 = vmatprep.subr.mxu0 0.0
    %1111 = vmatpush1.msra.mxu0 %v1088
    %1112 = vmatprep.subr.mxu0 0.0
    %1113 = vmatpush1.msra.mxu0 %v1089
    %1114 = vmatprep.subr.mxu0 0.0
    %1115 = vmatpush1.msra.mxu0 %v1090
    %1116 = vmatprep.subr.mxu0 0.0
    %1117 = vmatpush1.msra.mxu0 %v1091
    %1118 = vmatprep.subr.mxu0 0.0
    %1119 = vmatpush1.msra.mxu0 %v1092
    %1120 = vmatprep.subr.mxu0 0.0
    %1121 = vmatpush1.msra.mxu0 %v1093
    %1122 = vmatprep.subr.mxu0 0.0
    %1123 = vmatpush1.msra.mxu0 %v1094
    %1124 = vmatprep.subr.mxu0 0.0
    %1125 = vmatpush1.msra.mxu0 %v1095
    %1126 = vmatprep.subr.mxu0 0.0
    %1127 = vmatpush1.msra.mxu0 %v1096
    %1128 = vmatprep.subr.mxu0 0.0
    %1129 = vmatpush1.msra.mxu0 %v1097
    %1130 = vmatprep.subr.mxu0 0.0
    %1131 = vmatpush1.msra.mxu0 %v1100
    %1132 = vmatprep.subr.mxu0 0.0
    %1133 = vmatpush1.msra.mxu0 0.0
    %1134 = vmatprep.subr.mxu0 0.0
    %1135 = vmatpush1.msra.mxu0 0.0
    %1136 = vmatprep.subr.mxu0 0.0
    %1137 = vmatpush1.msra.mxu0 0.0
    %1138 = vmatprep.subr.mxu0 0.0
    %1139 = vmatpush1.msra.mxu0 0.0
    %1140 = vmatprep.subr.mxu0 0.0
    %1141 = vmatpush1.msra.mxu0 0.0
    %1142 = vmatprep.subr.mxu0 0.0
    %1143 = vmatpush1.msra.mxu0 0.0
    %1144 = vmatprep.subr.mxu0 0.0
    %1145 = vmatpush1.msra.mxu0 0.0
    %1146 = vmatprep.subr.mxu0 0.0
    %1147 = vmatpush1.msra.mxu0 0.0
    %1148 = vmatprep.subr.mxu0 0.0
    %1149 = vmatpush1.msra.mxu0 0.0
    %1150 = vmatprep.subr.mxu0 0.0
    %1151 = vmatpush1.msra.mxu0 0.0
    %1152 = vmatprep.subr.mxu0 0.0
    %1153 = vmatpush1.msra.mxu0 0.0
    %1154 = vmatprep.subr.mxu0 0.0
    %1155 = vmatpush1.msra.mxu0 0.0
    %1156 = vmatprep.subr.mxu0 0.0
    %1157 = vmatpush1.msra.mxu0 0.0
    %1158 = vmatprep.subr.mxu0 0.0
    %1159 = vmatpush1.msra.mxu0 0.0
    %1160 = vmatprep.subr.mxu0 0.0
    %1161 = vmatpush1.msra.mxu0 0.0
    %1162 = vmatprep.subr.mxu0 0.0
    %1163 = vmatpush1.msra.mxu0 0.0
    %1164 = vmatprep.subr.mxu0 0.0
    %1165 = vmatpush1.msra.mxu0 0.0
    %1166 = vmatprep.mubr.f32.mxu0 0.0
    %1167 = vmatmul.mubr.f32.gmra.mrb[0].mxu0 %v104
    %v1168 = vpop.f32.mrb[0].mxu0
    %v1169 = vadd.f32 0.0, %v1168
    %v1170 = vpop.f32.mrb[0].mxu0
    %1171 = vmatprep.mubr.f32.mxu0 0.0
    %1172 = vmatmul.mubr.f32.gmra.mrb[0].mxu0 %v107
    %v1173 = vpop.f32.mrb[0].mxu0
    %v1174 = vadd.f32 0.0, %v1173
    %v1175 = vpop.f32.mrb[0].mxu0
    %1176 = vmatprep.mubr.f32.mxu0 0.0
    %1177 = vmatmul.mubr.f32.gmra.mrb[0].mxu0 %v110
    %v1178 = vpop.f32.mrb[0].mxu0
    %v1179 = vadd.f32 0.0, %v1178
    %v1180 = vpop.f32.mrb[0].mxu0
    %1181 = vmatprep.mubr.f32.mxu0 0.0
    %1182 = vmatmul.mubr.f32.gmra.mrb[0].mxu0 %v113
    %v1183 = vpop.f32.mrb[0].mxu0
    %v1184 = vadd.f32 0.0, %v1183
    %v1185 = vpop.f32.mrb[0].mxu0
    %1186 = vmatprep.mubr.f32.mxu0 0.0
    %1187 = vmatmul.mubr.f32.gmra.mrb[0].mxu0 %v116
    %v1188 = vpop.f32.mrb[0].mxu0
    %v1189 = vadd.f32 0.0, %v1188
    %v1190 = vpop.f32.mrb[0].mxu0
    %1191 = vmatprep.mubr.f32.mxu0 0.0
    %1192 = vmatmul.mubr.f32.gmra.mrb[0].mxu0 %v119
    %v1193 = vpop.f32.mrb[0].mxu0
    %v1194 = vadd.f32 0.0, %v1193
    %v1195 = vpop.f32.mrb[0].mxu0
    %1196 = vmatprep.mubr.f32.mxu0 0.0
    %1197 = vmatmul.mubr.f32.gmra.mrb[0].mxu0 %v122
    %v1198 = vpop.f32.mrb[0].mxu0
    %v1199 = vadd.f32 0.0, %v1198
    %v1200 = vpop.f32.mrb[0].mxu0
    %1201 = vmatprep.mubr.f32.mxu0 0.0
    %1202 = vmatmul.mubr.f32.gmra.mrb[0].mxu0 %v125
    %v1203 = vpop.f32.mrb[0].mxu0
    %v1204 = vadd.f32 0.0, %v1203
    %v1205 = vpop.f32.mrb[0].mxu0
    %1206 = vmatprep.mubr.f32.mxu0 0.0
    %1207 = vmatmul.mubr.f32.gmra.mrb[0].mxu0 %v128
    %v1208 = vpop.f32.mrb[0].mxu0
    %v1209 = vadd.f32 0.0, %v1208
    %v1210 = vpop.f32.mrb[0].mxu0
    %1211 = vmatprep.mubr.f32.mxu0 0.0
    %1212 = vmatmul.mubr.f32.gmra.mrb[0].mxu0 %v131
    %v1213 = vpop.f32.mrb[0].mxu0
    %v1214 = vadd.f32 0.0, %v1213
    %v1215 = vpop.f32.mrb[0].mxu0
    %1216 = vdwg.mxu0
    %s1217 = scalar_lea.vmem [#allocation5], 128
    %v1218 = vld [vmem:[%s1217] sm:$0xff]
    %v1219 = vld [vmem:[%s1217 + $0x8] sm:$0xff]
    %v1220 = vld [vmem:[%s1217 + $0x10] sm:$0xff]
    %v1221 = vld [vmem:[%s1217 + $0x18] sm:$0xff]
    %v1223 = vsel %vm395, %v1218, 0
    %v1226 = vsel %vm395, %v1219, 0
    %v1229 = vsel %vm395, %v1220, 0
    %v1232 = vsel %vm395, %v1221, 0
    %v1235 = vsel %vm408, %v1214, 0
    %1237 = vmatprep.subr.mxu0 0.0
    %1238 = vmatpush1.msra.mxu0 %v1169
    %1239 = vmatprep.subr.mxu0 0.0
    %1240 = vmatpush1.msra.mxu0 %v1174
    %1241 = vmatprep.subr.mxu0 0.0
    %1242 = vmatpush1.msra.mxu0 %v1179
    %1243 = vmatprep.subr.mxu0 0.0
    %1244 = vmatpush1.msra.mxu0 %v1184
    %1245 = vmatprep.subr.mxu0 0.0
    %1246 = vmatpush1.msra.mxu0 %v1189
    %1247 = vmatprep.subr.mxu0 0.0
    %1248 = vmatpush1.msra.mxu0 %v1194
    %1249 = vmatprep.subr.mxu0 0.0
    %1250 = vmatpush1.msra.mxu0 %v1199
    %1251 = vmatprep.subr.mxu0 0.0
    %1252 = vmatpush1.msra.mxu0 %v1204
    %1253 = vmatprep.subr.mxu0 0.0
    %1254 = vmatpush1.msra.mxu0 %v1209
    %1255 = vmatprep.subr.mxu0 0.0
    %1256 = vmatpush1.msra.mxu0 %v1235
    %1257 = vmatprep.subr.mxu0 0.0
    %1258 = vmatpush1.msra.mxu0 0.0
    %1259 = vmatprep.subr.mxu0 0.0
    %1260 = vmatpush1.msra.mxu0 0.0
    %1261 = vmatprep.subr.mxu0 0.0
    %1262 = vmatpush1.msra.mxu0 0.0
    %1263 = vmatprep.subr.mxu0 0.0
    %1264 = vmatpush1.msra.mxu0 0.0
    %1265 = vmatprep.subr.mxu0 0.0
    %1266 = vmatpush1.msra.mxu0 0.0
    %1267 = vmatprep.subr.mxu0 0.0
    %1268 = vmatpush1.msra.mxu0 0.0
    %1269 = vmatprep.subr.mxu0 0.0
    %1270 = vmatpush1.msra.mxu0 0.0
    %1271 = vmatprep.subr.mxu0 0.0
    %1272 = vmatpush1.msra.mxu0 0.0
    %1273 = vmatprep.subr.mxu0 0.0
    %1274 = vmatpush1.msra.mxu0 0.0
    %1275 = vmatprep.subr.mxu0 0.0
    %1276 = vmatpush1.msra.mxu0 0.0
    %1277 = vmatprep.subr.mxu0 0.0
    %1278 = vmatpush1.msra.mxu0 0.0
    %1279 = vmatprep.subr.mxu0 0.0
    %1280 = vmatpush1.msra.mxu0 0.0
    %1281 = vmatprep.subr.mxu0 0.0
    %1282 = vmatpush1.msra.mxu0 0.0
    %1283 = vmatprep.subr.mxu0 0.0
    %1284 = vmatpush1.msra.mxu0 0.0
    %1285 = vmatprep.subr.mxu0 0.0
    %1286 = vmatpush1.msra.mxu0 0.0
    %1287 = vmatprep.subr.mxu0 0.0
    %1288 = vmatpush1.msra.mxu0 0.0
    %1289 = vmatprep.subr.mxu0 0.0
    %1290 = vmatpush1.msra.mxu0 0.0
    %1291 = vmatprep.subr.mxu0 0.0
    %1292 = vmatpush1.msra.mxu0 0.0
    %1293 = vmatprep.subr.mxu0 0.0
    %1294 = vmatpush1.msra.mxu0 0.0
    %1295 = vmatprep.subr.mxu0 0.0
    %1296 = vmatpush1.msra.mxu0 0.0
    %1297 = vmatprep.subr.mxu0 0.0
    %1298 = vmatpush1.msra.mxu0 0.0
    %1299 = vmatprep.subr.mxu0 0.0
    %1300 = vmatpush1.msra.mxu0 0.0
    %1301 = vmatprep.mubr.f32.mxu0 0.0
    %1302 = vmatmul.mubr.f32.gmra.mrb[0].mxu0 %v1223
    %v1303 = vpop.f32.mrb[0].mxu0
    %v1304 = vadd.f32 0.0, %v1303
    %v1305 = vpop.f32.mrb[0].mxu0
    %1306 = vmatprep.mubr.f32.mxu0 0.0
    %1307 = vmatmul.mubr.f32.gmra.mrb[0].mxu0 %v1226
    %v1308 = vpop.f32.mrb[0].mxu0
    %v1309 = vadd.f32 0.0, %v1308
    %v1310 = vpop.f32.mrb[0].mxu0
    %1311 = vmatprep.mubr.f32.mxu0 0.0
    %1312 = vmatmul.mubr.f32.gmra.mrb[0].mxu0 %v1229
    %v1313 = vpop.f32.mrb[0].mxu0
    %v1314 = vadd.f32 0.0, %v1313
    %v1315 = vpop.f32.mrb[0].mxu0
    %1316 = vmatprep.mubr.f32.mxu0 0.0
    %1317 = vmatmul.mubr.f32.gmra.mrb[0].mxu0 %v1232
    %v1318 = vpop.f32.mrb[0].mxu0
    %v1319 = vadd.f32 0.0, %v1318
    %v1320 = vpop.f32.mrb[0].mxu0
    %1321 = vdwg.mxu0
    %v1322 = vadd.f32 %v1079, %v1304
    %v1323 = vadd.f32 %v1080, %v1309
    %v1324 = vadd.f32 %v1081, %v1314
    %v1325 = vadd.f32 %v1082, %v1319
    %s1326 = scalar_lea.vmem [#allocation7], 600
    %v1327 = vld [vmem:[%s1326] sm:$0xff]
    %v1328 = vld [vmem:[%s1326 + $0x8] sm:$0xff]
    %v1329 = vld [vmem:[%s1326 + $0x10] sm:$0xff]
    %v1330 = vld [vmem:[%s1326 + $0x18] sm:$0xff]
    %v1331 = vld [vmem:[%s1326 + $0x20] sm:$0xff]
    %v1332 = vld [vmem:[%s1326 + $0x28] sm:$0xff]
    %v1333 = vld [vmem:[%s1326 + $0x30] sm:$0xff]
    %v1334 = vld [vmem:[%s1326 + $0x38] sm:$0xff]
    %v1335 = vld [vmem:[%s1326 + $0x40] sm:$0xff]
    %v1336 = vld [vmem:[%s1326 + $0x48] sm:$0xff]
    %v1337 = vld [vmem:[%s1326 + $0x50] sm:$0xff]
    %v1338 = vld [vmem:[%s1326 + $0x58] sm:$0xff]
    %v1339 = vld [vmem:[%s1326 + $0x60] sm:$0xff]
    %v1340 = vld [vmem:[%s1326 + $0x68] sm:$0xff]
    %v1341 = vld [vmem:[%s1326 + $0x70] sm:$0x3]
    %v1343 = vsel %vm133, %v1341, 0
    %1345 = vmatprep.subr.mxu0 0.0
    %1346 = vmatpush1.msra.mxu0 %v1327
    %1347 = vmatprep.subr.mxu0 0.0
    %1348 = vmatpush1.msra.mxu0 %v1328
    %1349 = vmatprep.subr.mxu0 0.0
    %1350 = vmatpush1.msra.mxu0 %v1329
    %1351 = vmatprep.subr.mxu0 0.0
    %1352 = vmatpush1.msra.mxu0 %v1330
    %1353 = vmatprep.subr.mxu0 0.0
    %1354 = vmatpush1.msra.mxu0 %v1331
    %1355 = vmatprep.subr.mxu0 0.0
    %1356 = vmatpush1.msra.mxu0 %v1332
    %1357 = vmatprep.subr.mxu0 0.0
    %1358 = vmatpush1.msra.mxu0 %v1333
    %1359 = vmatprep.subr.mxu0 0.0
    %1360 = vmatpush1.msra.mxu0 %v1334
    %1361 = vmatprep.subr.mxu0 0.0
    %1362 = vmatpush1.msra.mxu0 %v1335
    %1363 = vmatprep.subr.mxu0 0.0
    %1364 = vmatpush1.msra.mxu0 %v1336
    %1365 = vmatprep.subr.mxu0 0.0
    %1366 = vmatpush1.msra.mxu0 %v1337
    %1367 = vmatprep.subr.mxu0 0.0
    %1368 = vmatpush1.msra.mxu0 %v1338
    %1369 = vmatprep.subr.mxu0 0.0
    %1370 = vmatpush1.msra.mxu0 %v1339
    %1371 = vmatprep.subr.mxu0 0.0
    %1372 = vmatpush1.msra.mxu0 %v1340
    %1373 = vmatprep.subr.mxu0 0.0
    %1374 = vmatpush1.msra.mxu0 %v1343
    %1375 = vmatprep.subr.mxu0 0.0
    %1376 = vmatpush1.msra.mxu0 0.0
    %1377 = vmatprep.subr.mxu0 0.0
    %1378 = vmatpush1.msra.mxu0 0.0
    %1379 = vmatprep.subr.mxu0 0.0
    %1380 = vmatpush1.msra.mxu0 0.0
    %1381 = vmatprep.subr.mxu0 0.0
    %1382 = vmatpush1.msra.mxu0 0.0
    %1383 = vmatprep.subr.mxu0 0.0
    %1384 = vmatpush1.msra.mxu0 0.0
    %1385 = vmatprep.subr.mxu0 0.0
    %1386 = vmatpush1.msra.mxu0 0.0
    %1387 = vmatprep.subr.mxu0 0.0
    %1388 = vmatpush1.msra.mxu0 0.0
    %1389 = vmatprep.subr.mxu0 0.0
    %1390 = vmatpush1.msra.mxu0 0.0
    %1391 = vmatprep.subr.mxu0 0.0
    %1392 = vmatpush1.msra.mxu0 0.0
    %1393 = vmatprep.subr.mxu0 0.0
    %1394 = vmatpush1.msra.mxu0 0.0
    %1395 = vmatprep.subr.mxu0 0.0
    %1396 = vmatpush1.msra.mxu0 0.0
    %1397 = vmatprep.subr.mxu0 0.0
    %1398 = vmatpush1.msra.mxu0 0.0
    %1399 = vmatprep.subr.mxu0 0.0
    %1400 = vmatpush1.msra.mxu0 0.0
    %1401 = vmatprep.subr.mxu0 0.0
    %1402 = vmatpush1.msra.mxu0 0.0
    %1403 = vmatprep.subr.mxu0 0.0
    %1404 = vmatpush1.msra.mxu0 0.0
    %1405 = vmatprep.subr.mxu0 0.0
    %1406 = vmatpush1.msra.mxu0 0.0
    %1407 = vmatprep.subr.mxu0 0.0
    %1408 = vmatpush1.msra.mxu0 0.0
    %1409 = vmatprep.mubr.f32.mxu0 0.0
    %1410 = vmatmul.mubr.f32.gmra.mrb[0].mxu0 %v104
    %v1411 = vpop.f32.mrb[0].mxu0
    %v1412 = vadd.f32 0.0, %v1411
    %v1413 = vpop.f32.mrb[0].mxu0
    %1414 = vmatprep.mubr.f32.mxu0 0.0
    %1415 = vmatmul.mubr.f32.gmra.mrb[0].mxu0 %v107
    %v1416 = vpop.f32.mrb[0].mxu0
    %v1417 = vadd.f32 0.0, %v1416
    %v1418 = vpop.f32.mrb[0].mxu0
    %1419 = vmatprep.mubr.f32.mxu0 0.0
    %1420 = vmatmul.mubr.f32.gmra.mrb[0].mxu0 %v110
    %v1421 = vpop.f32.mrb[0].mxu0
    %v1422 = vadd.f32 0.0, %v1421
    %v1423 = vpop.f32.mrb[0].mxu0
    %1424 = vmatprep.mubr.f32.mxu0 0.0
    %1425 = vmatmul.mubr.f32.gmra.mrb[0].mxu0 %v113
    %v1426 = vpop.f32.mrb[0].mxu0
    %v1427 = vadd.f32 0.0, %v1426
    %v1428 = vpop.f32.mrb[0].mxu0
    %1429 = vmatprep.mubr.f32.mxu0 0.0
    %1430 = vmatmul.mubr.f32.gmra.mrb[0].mxu0 %v116
    %v1431 = vpop.f32.mrb[0].mxu0
    %v1432 = vadd.f32 0.0, %v1431
    %v1433 = vpop.f32.mrb[0].mxu0
    %1434 = vmatprep.mubr.f32.mxu0 0.0
    %1435 = vmatmul.mubr.f32.gmra.mrb[0].mxu0 %v119
    %v1436 = vpop.f32.mrb[0].mxu0
    %v1437 = vadd.f32 0.0, %v1436
    %v1438 = vpop.f32.mrb[0].mxu0
    %1439 = vmatprep.mubr.f32.mxu0 0.0
    %1440 = vmatmul.mubr.f32.gmra.mrb[0].mxu0 %v122
    %v1441 = vpop.f32.mrb[0].mxu0
    %v1442 = vadd.f32 0.0, %v1441
    %v1443 = vpop.f32.mrb[0].mxu0
    %1444 = vmatprep.mubr.f32.mxu0 0.0
    %1445 = vmatmul.mubr.f32.gmra.mrb[0].mxu0 %v125
    %v1446 = vpop.f32.mrb[0].mxu0
    %v1447 = vadd.f32 0.0, %v1446
    %v1448 = vpop.f32.mrb[0].mxu0
    %1449 = vmatprep.mubr.f32.mxu0 0.0
    %1450 = vmatmul.mubr.f32.gmra.mrb[0].mxu0 %v128
    %v1451 = vpop.f32.mrb[0].mxu0
    %v1452 = vadd.f32 0.0, %v1451
    %v1453 = vpop.f32.mrb[0].mxu0
    %1454 = vmatprep.mubr.f32.mxu0 0.0
    %1455 = vmatmul.mubr.f32.gmra.mrb[0].mxu0 %v131
    %v1456 = vpop.f32.mrb[0].mxu0
    %v1457 = vadd.f32 0.0, %v1456
    %v1458 = vpop.f32.mrb[0].mxu0
    %1459 = vdwg.mxu0
    %s1460 = scalar_lea.vmem [#allocation5], 160
    %v1461 = vld [vmem:[%s1460] sm:$0xff]
    %v1462 = vld [vmem:[%s1460 + $0x8] sm:$0xff]
    %v1463 = vld [vmem:[%s1460 + $0x10] sm:$0xff]
    %v1464 = vld [vmem:[%s1460 + $0x18] sm:$0xff]
    %v1466 = vsel %vm395, %v1461, 0
    %v1469 = vsel %vm395, %v1462, 0
    %v1472 = vsel %vm395, %v1463, 0
    %v1475 = vsel %vm395, %v1464, 0
    %v1478 = vsel %vm408, %v1457, 0
    %1480 = vmatprep.subr.mxu0 0.0
    %1481 = vmatpush1.msra.mxu0 %v1412
    %1482 = vmatprep.subr.mxu0 0.0
    %1483 = vmatpush1.msra.mxu0 %v1417
    %1484 = vmatprep.subr.mxu0 0.0
    %1485 = vmatpush1.msra.mxu0 %v1422
    %1486 = vmatprep.subr.mxu0 0.0
    %1487 = vmatpush1.msra.mxu0 %v1427
    %1488 = vmatprep.subr.mxu0 0.0
    %1489 = vmatpush1.msra.mxu0 %v1432
    %1490 = vmatprep.subr.mxu0 0.0
    %1491 = vmatpush1.msra.mxu0 %v1437
    %1492 = vmatprep.subr.mxu0 0.0
    %1493 = vmatpush1.msra.mxu0 %v1442
    %1494 = vmatprep.subr.mxu0 0.0
    %1495 = vmatpush1.msra.mxu0 %v1447
    %1496 = vmatprep.subr.mxu0 0.0
    %1497 = vmatpush1.msra.mxu0 %v1452
    %1498 = vmatprep.subr.mxu0 0.0
    %1499 = vmatpush1.msra.mxu0 %v1478
    %1500 = vmatprep.subr.mxu0 0.0
    %1501 = vmatpush1.msra.mxu0 0.0
    %1502 = vmatprep.subr.mxu0 0.0
    %1503 = vmatpush1.msra.mxu0 0.0
    %1504 = vmatprep.subr.mxu0 0.0
    %1505 = vmatpush1.msra.mxu0 0.0
    %1506 = vmatprep.subr.mxu0 0.0
    %1507 = vmatpush1.msra.mxu0 0.0
    %1508 = vmatprep.subr.mxu0 0.0
    %1509 = vmatpush1.msra.mxu0 0.0
    %1510 = vmatprep.subr.mxu0 0.0
    %1511 = vmatpush1.msra.mxu0 0.0
    %1512 = vmatprep.subr.mxu0 0.0
    %1513 = vmatpush1.msra.mxu0 0.0
    %1514 = vmatprep.subr.mxu0 0.0
    %1515 = vmatpush1.msra.mxu0 0.0
    %1516 = vmatprep.subr.mxu0 0.0
    %1517 = vmatpush1.msra.mxu0 0.0
    %1518 = vmatprep.subr.mxu0 0.0
    %1519 = vmatpush1.msra.mxu0 0.0
    %1520 = vmatprep.subr.mxu0 0.0
    %1521 = vmatpush1.msra.mxu0 0.0
    %1522 = vmatprep.subr.mxu0 0.0
    %1523 = vmatpush1.msra.mxu0 0.0
    %1524 = vmatprep.subr.mxu0 0.0
    %1525 = vmatpush1.msra.mxu0 0.0
    %1526 = vmatprep.subr.mxu0 0.0
    %1527 = vmatpush1.msra.mxu0 0.0
    %1528 = vmatprep.subr.mxu0 0.0
    %1529 = vmatpush1.msra.mxu0 0.0
    %1530 = vmatprep.subr.mxu0 0.0
    %1531 = vmatpush1.msra.mxu0 0.0
    %1532 = vmatprep.subr.mxu0 0.0
    %1533 = vmatpush1.msra.mxu0 0.0
    %1534 = vmatprep.subr.mxu0 0.0
    %1535 = vmatpush1.msra.mxu0 0.0
    %1536 = vmatprep.subr.mxu0 0.0
    %1537 = vmatpush1.msra.mxu0 0.0
    %1538 = vmatprep.subr.mxu0 0.0
    %1539 = vmatpush1.msra.mxu0 0.0
    %1540 = vmatprep.subr.mxu0 0.0
    %1541 = vmatpush1.msra.mxu0 0.0
    %1542 = vmatprep.subr.mxu0 0.0
    %1543 = vmatpush1.msra.mxu0 0.0
    %1544 = vmatprep.mubr.f32.mxu0 0.0
    %1545 = vmatmul.mubr.f32.gmra.mrb[0].mxu0 %v1466
    %v1546 = vpop.f32.mrb[0].mxu0
    %v1547 = vadd.f32 0.0, %v1546
    %v1548 = vpop.f32.mrb[0].mxu0
    %1549 = vmatprep.mubr.f32.mxu0 0.0
    %1550 = vmatmul.mubr.f32.gmra.mrb[0].mxu0 %v1469
    %v1551 = vpop.f32.mrb[0].mxu0
    %v1552 = vadd.f32 0.0, %v1551
    %v1553 = vpop.f32.mrb[0].mxu0
    %1554 = vmatprep.mubr.f32.mxu0 0.0
    %1555 = vmatmul.mubr.f32.gmra.mrb[0].mxu0 %v1472
    %v1556 = vpop.f32.mrb[0].mxu0
    %v1557 = vadd.f32 0.0, %v1556
    %v1558 = vpop.f32.mrb[0].mxu0
    %1559 = vmatprep.mubr.f32.mxu0 0.0
    %1560 = vmatmul.mubr.f32.gmra.mrb[0].mxu0 %v1475
    %v1561 = vpop.f32.mrb[0].mxu0
    %v1562 = vadd.f32 0.0, %v1561
    %v1563 = vpop.f32.mrb[0].mxu0
    %1564 = vdwg.mxu0
    %v1565 = vadd.f32 %v1322, %v1547
    %v1566 = vadd.f32 %v1323, %v1552
    %v1567 = vadd.f32 %v1324, %v1557
    %v1568 = vadd.f32 %v1325, %v1562
    %s1569 = scalar_lea.vmem [#allocation7], 720
    %v1570 = vld [vmem:[%s1569] sm:$0xff]
    %v1571 = vld [vmem:[%s1569 + $0x8] sm:$0xff]
    %v1572 = vld [vmem:[%s1569 + $0x10] sm:$0xff]
    %v1573 = vld [vmem:[%s1569 + $0x18] sm:$0xff]
    %v1574 = vld [vmem:[%s1569 + $0x20] sm:$0xff]
    %v1575 = vld [vmem:[%s1569 + $0x28] sm:$0xff]
    %v1576 = vld [vmem:[%s1569 + $0x30] sm:$0xff]
    %v1577 = vld [vmem:[%s1569 + $0x38] sm:$0xff]
    %v1578 = vld [vmem:[%s1569 + $0x40] sm:$0xff]
    %v1579 = vld [vmem:[%s1569 + $0x48] sm:$0xff]
    %v1580 = vld [vmem:[%s1569 + $0x50] sm:$0xff]
    %v1581 = vld [vmem:[%s1569 + $0x58] sm:$0xff]
    %v1582 = vld [vmem:[%s1569 + $0x60] sm:$0xff]
    %v1583 = vld [vmem:[%s1569 + $0x68] sm:$0xff]
    %v1584 = vld [vmem:[%s1569 + $0x70] sm:$0x3]
    %v1586 = vsel %vm133, %v1584, 0
    %1588 = vmatprep.subr.mxu0 0.0
    %1589 = vmatpush1.msra.mxu0 %v1570
    %1590 = vmatprep.subr.mxu0 0.0
    %1591 = vmatpush1.msra.mxu0 %v1571
    %1592 = vmatprep.subr.mxu0 0.0
    %1593 = vmatpush1.msra.mxu0 %v1572
    %1594 = vmatprep.subr.mxu0 0.0
    %1595 = vmatpush1.msra.mxu0 %v1573
    %1596 = vmatprep.subr.mxu0 0.0
    %1597 = vmatpush1.msra.mxu0 %v1574
    %1598 = vmatprep.subr.mxu0 0.0
    %1599 = vmatpush1.msra.mxu0 %v1575
    %1600 = vmatprep.subr.mxu0 0.0
    %1601 = vmatpush1.msra.mxu0 %v1576
    %1602 = vmatprep.subr.mxu0 0.0
    %1603 = vmatpush1.msra.mxu0 %v1577
    %1604 = vmatprep.subr.mxu0 0.0
    %1605 = vmatpush1.msra.mxu0 %v1578
    %1606 = vmatprep.subr.mxu0 0.0
    %1607 = vmatpush1.msra.mxu0 %v1579
    %1608 = vmatprep.subr.mxu0 0.0
    %1609 = vmatpush1.msra.mxu0 %v1580
    %1610 = vmatprep.subr.mxu0 0.0
    %1611 = vmatpush1.msra.mxu0 %v1581
    %1612 = vmatprep.subr.mxu0 0.0
    %1613 = vmatpush1.msra.mxu0 %v1582
    %1614 = vmatprep.subr.mxu0 0.0
    %1615 = vmatpush1.msra.mxu0 %v1583
    %1616 = vmatprep.subr.mxu0 0.0
    %1617 = vmatpush1.msra.mxu0 %v1586
    %1618 = vmatprep.subr.mxu0 0.0
    %1619 = vmatpush1.msra.mxu0 0.0
    %1620 = vmatprep.subr.mxu0 0.0
    %1621 = vmatpush1.msra.mxu0 0.0
    %1622 = vmatprep.subr.mxu0 0.0
    %1623 = vmatpush1.msra.mxu0 0.0
    %1624 = vmatprep.subr.mxu0 0.0
    %1625 = vmatpush1.msra.mxu0 0.0
    %1626 = vmatprep.subr.mxu0 0.0
    %1627 = vmatpush1.msra.mxu0 0.0
    %1628 = vmatprep.subr.mxu0 0.0
    %1629 = vmatpush1.msra.mxu0 0.0
    %1630 = vmatprep.subr.mxu0 0.0
    %1631 = vmatpush1.msra.mxu0 0.0
    %1632 = vmatprep.subr.mxu0 0.0
    %1633 = vmatpush1.msra.mxu0 0.0
    %1634 = vmatprep.subr.mxu0 0.0
    %1635 = vmatpush1.msra.mxu0 0.0
    %1636 = vmatprep.subr.mxu0 0.0
    %1637 = vmatpush1.msra.mxu0 0.0
    %1638 = vmatprep.subr.mxu0 0.0
    %1639 = vmatpush1.msra.mxu0 0.0
    %1640 = vmatprep.subr.mxu0 0.0
    %1641 = vmatpush1.msra.mxu0 0.0
    %1642 = vmatprep.subr.mxu0 0.0
    %1643 = vmatpush1.msra.mxu0 0.0
    %1644 = vmatprep.subr.mxu0 0.0
    %1645 = vmatpush1.msra.mxu0 0.0
    %1646 = vmatprep.subr.mxu0 0.0
    %1647 = vmatpush1.msra.mxu0 0.0
    %1648 = vmatprep.subr.mxu0 0.0
    %1649 = vmatpush1.msra.mxu0 0.0
    %1650 = vmatprep.subr.mxu0 0.0
    %1651 = vmatpush1.msra.mxu0 0.0
    %1652 = vmatprep.mubr.f32.mxu0 0.0
    %1653 = vmatmul.mubr.f32.gmra.mrb[0].mxu0 %v104
    %v1654 = vpop.f32.mrb[0].mxu0
    %v1655 = vadd.f32 0.0, %v1654
    %v1656 = vpop.f32.mrb[0].mxu0
    %1657 = vmatprep.mubr.f32.mxu0 0.0
    %1658 = vmatmul.mubr.f32.gmra.mrb[0].mxu0 %v107
    %v1659 = vpop.f32.mrb[0].mxu0
    %v1660 = vadd.f32 0.0, %v1659
    %v1661 = vpop.f32.mrb[0].mxu0
    %1662 = vmatprep.mubr.f32.mxu0 0.0
    %1663 = vmatmul.mubr.f32.gmra.mrb[0].mxu0 %v110
    %v1664 = vpop.f32.mrb[0].mxu0
    %v1665 = vadd.f32 0.0, %v1664
    %v1666 = vpop.f32.mrb[0].mxu0
    %1667 = vmatprep.mubr.f32.mxu0 0.0
    %1668 = vmatmul.mubr.f32.gmra.mrb[0].mxu0 %v113
    %v1669 = vpop.f32.mrb[0].mxu0
    %v1670 = vadd.f32 0.0, %v1669
    %v1671 = vpop.f32.mrb[0].mxu0
    %1672 = vmatprep.mubr.f32.mxu0 0.0
    %1673 = vmatmul.mubr.f32.gmra.mrb[0].mxu0 %v116
    %v1674 = vpop.f32.mrb[0].mxu0
    %v1675 = vadd.f32 0.0, %v1674
    %v1676 = vpop.f32.mrb[0].mxu0
    %1677 = vmatprep.mubr.f32.mxu0 0.0
    %1678 = vmatmul.mubr.f32.gmra.mrb[0].mxu0 %v119
    %v1679 = vpop.f32.mrb[0].mxu0
    %v1680 = vadd.f32 0.0, %v1679
    %v1681 = vpop.f32.mrb[0].mxu0
    %1682 = vmatprep.mubr.f32.mxu0 0.0
    %1683 = vmatmul.mubr.f32.gmra.mrb[0].mxu0 %v122
    %v1684 = vpop.f32.mrb[0].mxu0
    %v1685 = vadd.f32 0.0, %v1684
    %v1686 = vpop.f32.mrb[0].mxu0
    %1687 = vmatprep.mubr.f32.mxu0 0.0
    %1688 = vmatmul.mubr.f32.gmra.mrb[0].mxu0 %v125
    %v1689 = vpop.f32.mrb[0].mxu0
    %v1690 = vadd.f32 0.0, %v1689
    %v1691 = vpop.f32.mrb[0].mxu0
    %1692 = vmatprep.mubr.f32.mxu0 0.0
    %1693 = vmatmul.mubr.f32.gmra.mrb[0].mxu0 %v128
    %v1694 = vpop.f32.mrb[0].mxu0
    %v1695 = vadd.f32 0.0, %v1694
    %v1696 = vpop.f32.mrb[0].mxu0
    %1697 = vmatprep.mubr.f32.mxu0 0.0
    %1698 = vmatmul.mubr.f32.gmra.mrb[0].mxu0 %v131
    %v1699 = vpop.f32.mrb[0].mxu0
    %v1700 = vadd.f32 0.0, %v1699
    %v1701 = vpop.f32.mrb[0].mxu0
    %1702 = vdwg.mxu0
    %s1703 = scalar_lea.vmem [#allocation5], 192
    %v1704 = vld [vmem:[%s1703] sm:$0xff]
    %v1705 = vld [vmem:[%s1703 + $0x8] sm:$0xff]
    %v1706 = vld [vmem:[%s1703 + $0x10] sm:$0xff]
    %v1707 = vld [vmem:[%s1703 + $0x18] sm:$0xff]
    %v1709 = vsel %vm395, %v1704, 0
    %v1712 = vsel %vm395, %v1705, 0
    %v1715 = vsel %vm395, %v1706, 0
    %v1718 = vsel %vm395, %v1707, 0
    %v1721 = vsel %vm408, %v1700, 0
    %1723 = vmatprep.subr.mxu0 0.0
    %1724 = vmatpush1.msra.mxu0 %v1655
    %1725 = vmatprep.subr.mxu0 0.0
    %1726 = vmatpush1.msra.mxu0 %v1660
    %1727 = vmatprep.subr.mxu0 0.0
    %1728 = vmatpush1.msra.mxu0 %v1665
    %1729 = vmatprep.subr.mxu0 0.0
    %1730 = vmatpush1.msra.mxu0 %v1670
    %1731 = vmatprep.subr.mxu0 0.0
    %1732 = vmatpush1.msra.mxu0 %v1675
    %1733 = vmatprep.subr.mxu0 0.0
    %1734 = vmatpush1.msra.mxu0 %v1680
    %1735 = vmatprep.subr.mxu0 0.0
    %1736 = vmatpush1.msra.mxu0 %v1685
    %1737 = vmatprep.subr.mxu0 0.0
    %1738 = vmatpush1.msra.mxu0 %v1690
    %1739 = vmatprep.subr.mxu0 0.0
    %1740 = vmatpush1.msra.mxu0 %v1695
    %1741 = vmatprep.subr.mxu0 0.0
    %1742 = vmatpush1.msra.mxu0 %v1721
    %1743 = vmatprep.subr.mxu0 0.0
    %1744 = vmatpush1.msra.mxu0 0.0
    %1745 = vmatprep.subr.mxu0 0.0
    %1746 = vmatpush1.msra.mxu0 0.0
    %1747 = vmatprep.subr.mxu0 0.0
    %1748 = vmatpush1.msra.mxu0 0.0
    %1749 = vmatprep.subr.mxu0 0.0
    %1750 = vmatpush1.msra.mxu0 0.0
    %1751 = vmatprep.subr.mxu0 0.0
    %1752 = vmatpush1.msra.mxu0 0.0
    %1753 = vmatprep.subr.mxu0 0.0
    %1754 = vmatpush1.msra.mxu0 0.0
    %1755 = vmatprep.subr.mxu0 0.0
    %1756 = vmatpush1.msra.mxu0 0.0
    %1757 = vmatprep.subr.mxu0 0.0
    %1758 = vmatpush1.msra.mxu0 0.0
    %1759 = vmatprep.subr.mxu0 0.0
    %1760 = vmatpush1.msra.mxu0 0.0
    %1761 = vmatprep.subr.mxu0 0.0
    %1762 = vmatpush1.msra.mxu0 0.0
    %1763 = vmatprep.subr.mxu0 0.0
    %1764 = vmatpush1.msra.mxu0 0.0
    %1765 = vmatprep.subr.mxu0 0.0
    %1766 = vmatpush1.msra.mxu0 0.0
    %1767 = vmatprep.subr.mxu0 0.0
    %1768 = vmatpush1.msra.mxu0 0.0
    %1769 = vmatprep.subr.mxu0 0.0
    %1770 = vmatpush1.msra.mxu0 0.0
    %1771 = vmatprep.subr.mxu0 0.0
    %1772 = vmatpush1.msra.mxu0 0.0
    %1773 = vmatprep.subr.mxu0 0.0
    %1774 = vmatpush1.msra.mxu0 0.0
    %1775 = vmatprep.subr.mxu0 0.0
    %1776 = vmatpush1.msra.mxu0 0.0
    %1777 = vmatprep.subr.mxu0 0.0
    %1778 = vmatpush1.msra.mxu0 0.0
    %1779 = vmatprep.subr.mxu0 0.0
    %1780 = vmatpush1.msra.mxu0 0.0
    %1781 = vmatprep.subr.mxu0 0.0
    %1782 = vmatpush1.msra.mxu0 0.0
    %1783 = vmatprep.subr.mxu0 0.0
    %1784 = vmatpush1.msra.mxu0 0.0
    %1785 = vmatprep.subr.mxu0 0.0
    %1786 = vmatpush1.msra.mxu0 0.0
    %1787 = vmatprep.mubr.f32.mxu0 0.0
    %1788 = vmatmul.mubr.f32.gmra.mrb[0].mxu0 %v1709
    %v1789 = vpop.f32.mrb[0].mxu0
    %v1790 = vadd.f32 0.0, %v1789
    %v1791 = vpop.f32.mrb[0].mxu0
    %1792 = vmatprep.mubr.f32.mxu0 0.0
    %1793 = vmatmul.mubr.f32.gmra.mrb[0].mxu0 %v1712
    %v1794 = vpop.f32.mrb[0].mxu0
    %v1795 = vadd.f32 0.0, %v1794
    %v1796 = vpop.f32.mrb[0].mxu0
    %1797 = vmatprep.mubr.f32.mxu0 0.0
    %1798 = vmatmul.mubr.f32.gmra.mrb[0].mxu0 %v1715
    %v1799 = vpop.f32.mrb[0].mxu0
    %v1800 = vadd.f32 0.0, %v1799
    %v1801 = vpop.f32.mrb[0].mxu0
    %1802 = vmatprep.mubr.f32.mxu0 0.0
    %1803 = vmatmul.mubr.f32.gmra.mrb[0].mxu0 %v1718
    %v1804 = vpop.f32.mrb[0].mxu0
    %v1805 = vadd.f32 0.0, %v1804
    %v1806 = vpop.f32.mrb[0].mxu0
    %1807 = vdwg.mxu0
    %v1808 = vadd.f32 %v1565, %v1790
    %v1809 = vadd.f32 %v1566, %v1795
    %v1810 = vadd.f32 %v1567, %v1800
    %v1811 = vadd.f32 %v1568, %v1805
    %v1812 = vadd.f32 %v1808, %v1809
    %v1813 = vadd.f32 %v1812, %v1810
    %v1814 = vadd.f32 %v1813, %v1811
    %v1815 = vrot.slane %v1814, 4
    %v1816 = vadd.f32 %v1814, %v1815
    %v1817 = vrot.slane %v1816, 2
    %v1818 = vadd.f32 %v1816, %v1817
    %v1819 = vrot.slane %v1818, 1
    %v1820 = vadd.f32 %v1818, %v1819
    %v1821 = vld [vmem:[%s5] sm:$0xff]
    %v1822 = vld [vmem:[%s5 + $0x8] sm:$0xff]
    %v1823 = vld [vmem:[%s5 + $0x10] sm:$0xff]
    %v1824 = vld [vmem:[%s5 + $0x18] sm:$0xff]
    %v1825 = vld [vmem:[%s5 + $0x20] sm:$0xff]
    %v1826 = vld [vmem:[%s5 + $0x28] sm:$0xff]
    %v1827 = vld [vmem:[%s5 + $0x30] sm:$0xff]
    %v1828 = vld [vmem:[%s5 + $0x38] sm:$0xff]
    %v1829 = vld [vmem:[%s5 + $0x40] sm:$0xff]
    %v1830 = vld [vmem:[%s5 + $0x48] sm:$0xff]
    %v1831 = vld [vmem:[%s5 + $0x50] sm:$0xff]
    %v1832 = vld [vmem:[%s5 + $0x58] sm:$0xff]
    %v1833 = vld [vmem:[%s5 + $0x60] sm:$0xff]
    %v1834 = vld [vmem:[%s5 + $0x68] sm:$0xff]
    %v1835 = vld [vmem:[%s5 + $0x70] sm:$0xff]
    %v1836 = vld [vmem:[%s5 + $0x78] sm:$0xff]
    %1837 = vmatprep.subr.mxu0 0.0
    %1838 = vmatpush1.msra.mxu0 %v1821
    %1839 = vmatprep.subr.mxu0 0.0
    %1840 = vmatpush1.msra.mxu0 %v1822
    %1841 = vmatprep.subr.mxu0 0.0
    %1842 = vmatpush1.msra.mxu0 %v1823
    %1843 = vmatprep.subr.mxu0 0.0
    %1844 = vmatpush1.msra.mxu0 %v1824
    %1845 = vmatprep.subr.mxu0 0.0
    %1846 = vmatpush1.msra.mxu0 %v1825
    %1847 = vmatprep.subr.mxu0 0.0
    %1848 = vmatpush1.msra.mxu0 %v1826
    %1849 = vmatprep.subr.mxu0 0.0
    %1850 = vmatpush1.msra.mxu0 %v1827
    %1851 = vmatprep.subr.mxu0 0.0
    %1852 = vmatpush1.msra.mxu0 %v1828
    %1853 = vmatprep.subr.mxu0 0.0
    %1854 = vmatpush1.msra.mxu0 %v1829
    %1855 = vmatprep.subr.mxu0 0.0
    %1856 = vmatpush1.msra.mxu0 %v1830
    %1857 = vmatprep.subr.mxu0 0.0
    %1858 = vmatpush1.msra.mxu0 %v1831
    %1859 = vmatprep.subr.mxu0 0.0
    %1860 = vmatpush1.msra.mxu0 %v1832
    %1861 = vmatprep.subr.mxu0 0.0
    %1862 = vmatpush1.msra.mxu0 %v1833
    %1863 = vmatprep.subr.mxu0 0.0
    %1864 = vmatpush1.msra.mxu0 %v1834
    %1865 = vmatprep.subr.mxu0 0.0
    %1866 = vmatpush1.msra.mxu0 %v1835
    %1867 = vmatprep.subr.mxu0 0.0
    %1868 = vmatpush1.msra.mxu0 %v1836
    %1869 = vmatprep.subr.mxu0 0.0
    %1870 = vmatpush1.msra.mxu0 0.0
    %1871 = vmatprep.subr.mxu0 0.0
    %1872 = vmatpush1.msra.mxu0 0.0
    %1873 = vmatprep.subr.mxu0 0.0
    %1874 = vmatpush1.msra.mxu0 0.0
    %1875 = vmatprep.subr.mxu0 0.0
    %1876 = vmatpush1.msra.mxu0 0.0
    %1877 = vmatprep.subr.mxu0 0.0
    %1878 = vmatpush1.msra.mxu0 0.0
    %1879 = vmatprep.subr.mxu0 0.0
    %1880 = vmatpush1.msra.mxu0 0.0
    %1881 = vmatprep.subr.mxu0 0.0
    %1882 = vmatpush1.msra.mxu0 0.0
    %1883 = vmatprep.subr.mxu0 0.0
    %1884 = vmatpush1.msra.mxu0 0.0
    %1885 = vmatprep.subr.mxu0 0.0
    %1886 = vmatpush1.msra.mxu0 0.0
    %1887 = vmatprep.subr.mxu0 0.0
    %1888 = vmatpush1.msra.mxu0 0.0
    %1889 = vmatprep.subr.mxu0 0.0
    %1890 = vmatpush1.msra.mxu0 0.0
    %1891 = vmatprep.subr.mxu0 0.0
    %1892 = vmatpush1.msra.mxu0 0.0
    %1893 = vmatprep.subr.mxu0 0.0
    %1894 = vmatpush1.msra.mxu0 0.0
    %1895 = vmatprep.subr.mxu0 0.0
    %1896 = vmatpush1.msra.mxu0 0.0
    %1897 = vmatprep.subr.mxu0 0.0
    %1898 = vmatpush1.msra.mxu0 0.0
    %1899 = vmatprep.subr.mxu0 0.0
    %1900 = vmatpush1.msra.mxu0 0.0
    %1901 = vmatprep.mubr.f32.mxu0 0.0
    %1902 = vmatmul.mubr.f32.gmra.mrb[0].mxu0 %v1820
    %v1903 = vpop.f32.mrb[0].mxu0
    %v1904 = vadd.f32 0.0, %v1903
    %v1905 = vpop.f32.mrb[0].mxu0
    %1906 = vdwg.mxu0
    %v1907 = vmul.f32 %v1808, %v1808
    %v1908 = vmul.f32 %v1809, %v1809
    %v1909 = vmul.f32 %v1810, %v1810
    %v1910 = vmul.f32 %v1811, %v1811
    %v1911 = vadd.f32 %v1907, %v1908
    %v1912 = vadd.f32 %v1911, %v1909
    %v1913 = vadd.f32 %v1912, %v1910
    %v1914 = vrot.slane %v1913, 4
    %v1915 = vadd.f32 %v1913, %v1914
    %v1916 = vrot.slane %v1915, 2
    %v1917 = vadd.f32 %v1915, %v1916
    %v1918 = vrot.slane %v1917, 1
    %v1919 = vadd.f32 %v1917, %v1918
    %1920 = vmatprep.subr.mxu0 0.0
    %1921 = vmatpush1.msra.mxu0 %v1821
    %1922 = vmatprep.subr.mxu0 0.0
    %1923 = vmatpush1.msra.mxu0 %v1822
    %1924 = vmatprep.subr.mxu0 0.0
    %1925 = vmatpush1.msra.mxu0 %v1823
    %1926 = vmatprep.subr.mxu0 0.0
    %1927 = vmatpush1.msra.mxu0 %v1824
    %1928 = vmatprep.subr.mxu0 0.0
    %1929 = vmatpush1.msra.mxu0 %v1825
    %1930 = vmatprep.subr.mxu0 0.0
    %1931 = vmatpush1.msra.mxu0 %v1826
    %1932 = vmatprep.subr.mxu0 0.0
    %1933 = vmatpush1.msra.mxu0 %v1827
    %1934 = vmatprep.subr.mxu0 0.0
    %1935 = vmatpush1.msra.mxu0 %v1828
    %1936 = vmatprep.subr.mxu0 0.0
    %1937 = vmatpush1.msra.mxu0 %v1829
    %1938 = vmatprep.subr.mxu0 0.0
    %1939 = vmatpush1.msra.mxu0 %v1830
    %1940 = vmatprep.subr.mxu0 0.0
    %1941 = vmatpush1.msra.mxu0 %v1831
    %1942 = vmatprep.subr.mxu0 0.0
    %1943 = vmatpush1.msra.mxu0 %v1832
    %1944 = vmatprep.subr.mxu0 0.0
    %1945 = vmatpush1.msra.mxu0 %v1833
    %1946 = vmatprep.subr.mxu0 0.0
    %1947 = vmatpush1.msra.mxu0 %v1834
    %1948 = vmatprep.subr.mxu0 0.0
    %1949 = vmatpush1.msra.mxu0 %v1835
    %1950 = vmatprep.subr.mxu0 0.0
    %1951 = vmatpush1.msra.mxu0 %v1836
    %1952 = vmatprep.subr.mxu0 0.0
    %1953 = vmatpush1.msra.mxu0 0.0
    %1954 = vmatprep.subr.mxu0 0.0
    %1955 = vmatpush1.msra.mxu0 0.0
    %1956 = vmatprep.subr.mxu0 0.0
    %1957 = vmatpush1.msra.mxu0 0.0
    %1958 = vmatprep.subr.mxu0 0.0
    %1959 = vmatpush1.msra.mxu0 0.0
    %1960 = vmatprep.subr.mxu0 0.0
    %1961 = vmatpush1.msra.mxu0 0.0
    %1962 = vmatprep.subr.mxu0 0.0
    %1963 = vmatpush1.msra.mxu0 0.0
    %1964 = vmatprep.subr.mxu0 0.0
    %1965 = vmatpush1.msra.mxu0 0.0
    %1966 = vmatprep.subr.mxu0 0.0
    %1967 = vmatpush1.msra.mxu0 0.0
    %1968 = vmatprep.subr.mxu0 0.0
    %1969 = vmatpush1.msra.mxu0 0.0
    %1970 = vmatprep.subr.mxu0 0.0
    %1971 = vmatpush1.msra.mxu0 0.0
    %1972 = vmatprep.subr.mxu0 0.0
    %1973 = vmatpush1.msra.mxu0 0.0
    %1974 = vmatprep.subr.mxu0 0.0
    %1975 = vmatpush1.msra.mxu0 0.0
    %1976 = vmatprep.subr.mxu0 0.0
    %1977 = vmatpush1.msra.mxu0 0.0
    %1978 = vmatprep.subr.mxu0 0.0
    %1979 = vmatpush1.msra.mxu0 0.0
    %1980 = vmatprep.subr.mxu0 0.0
    %1981 = vmatpush1.msra.mxu0 0.0
    %1982 = vmatprep.subr.mxu0 0.0
    %1983 = vmatpush1.msra.mxu0 0.0
    %1984 = vmatprep.mubr.f32.mxu0 0.0
    %1985 = vmatmul.mubr.f32.gmra.mrb[0].mxu0 %v1919
    %v1986 = vpop.f32.mrb[0].mxu0
    %v1987 = vadd.f32 0.0, %v1986
    %v1988 = vpop.f32.mrb[0].mxu0
    %1989 = vdwg.mxu0
    %v1990 = vmul.f32 %v1904, 0.001953125
    %v1991 = vmul.f32 %v1987, 0.001953125
    %v1992 = vmul.f32 %v1990, %v1990
    %v1993 = vsub.f32 %v1991, %v1992
    %v1994 = vld [vmem:[%s3] sm:$0x3]
    %v1995 = vadd.f32 %v1993, 1e-05
    %v1996 = vrsqrt.pop %v1995
    %v1997 = vmul.f32 %v1994, %v1996
    %v1998 = vmul.f32 %v1997, %v1990
    %v2000 = vrot.slane %v1998, 7
    %v2002 = vsub.f32 %v1994, %v2000
    %v2003 = vld [vmem:[%s4] sm:$0xff]
    %vm2004 = vcmask 64512
    %v2006 = vsel %vm2004, %v1997, 0
    %2008 = vmatprep.subr.mxu0 0.0
    %2009 = vmatpush1.msra.mxu0 %v2003
    %2010 = vmatprep.subr.mxu0 0.0
    %2011 = vmatpush1.msra.mxu0 0.0
    %2012 = vmatprep.subr.mxu0 0.0
    %2013 = vmatpush1.msra.mxu0 0.0
    %2014 = vmatprep.subr.mxu0 0.0
    %2015 = vmatpush1.msra.mxu0 0.0
    %2016 = vmatprep.subr.mxu0 0.0
    %2017 = vmatpush1.msra.mxu0 0.0
    %2018 = vmatprep.subr.mxu0 0.0
    %2019 = vmatpush1.msra.mxu0 0.0
    %2020 = vmatprep.subr.mxu0 0.0
    %2021 = vmatpush1.msra.mxu0 0.0
    %2022 = vmatprep.subr.mxu0 0.0
    %2023 = vmatpush1.msra.mxu0 0.0
    %2024 = vmatprep.subr.mxu0 0.0
    %2025 = vmatpush1.msra.mxu0 0.0
    %2026 = vmatprep.subr.mxu0 0.0
    %2027 = vmatpush1.msra.mxu0 0.0
    %2028 = vmatprep.subr.mxu0 0.0
    %2029 = vmatpush1.msra.mxu0 0.0
    %2030 = vmatprep.subr.mxu0 0.0
    %2031 = vmatpush1.msra.mxu0 0.0
    %2032 = vmatprep.subr.mxu0 0.0
    %2033 = vmatpush1.msra.mxu0 0.0
    %2034 = vmatprep.subr.mxu0 0.0
    %2035 = vmatpush1.msra.mxu0 0.0
    %2036 = vmatprep.subr.mxu0 0.0
    %2037 = vmatpush1.msra.mxu0 0.0
    %2038 = vmatprep.subr.mxu0 0.0
    %2039 = vmatpush1.msra.mxu0 0.0
    %2040 = vmatprep.subr.mxu0 0.0
    %2041 = vmatpush1.msra.mxu0 0.0
    %2042 = vmatprep.subr.mxu0 0.0
    %2043 = vmatpush1.msra.mxu0 0.0
    %2044 = vmatprep.subr.mxu0 0.0
    %2045 = vmatpush1.msra.mxu0 0.0
    %2046 = vmatprep.subr.mxu0 0.0
    %2047 = vmatpush1.msra.mxu0 0.0
    %2048 = vmatprep.subr.mxu0 0.0
    %2049 = vmatpush1.msra.mxu0 0.0
    %2050 = vmatprep.subr.mxu0 0.0
    %2051 = vmatpush1.msra.mxu0 0.0
    %2052 = vmatprep.subr.mxu0 0.0
    %2053 = vmatpush1.msra.mxu0 0.0
    %2054 = vmatprep.subr.mxu0 0.0
    %2055 = vmatpush1.msra.mxu0 0.0
    %2056 = vmatprep.subr.mxu0 0.0
    %2057 = vmatpush1.msra.mxu0 0.0
    %2058 = vmatprep.subr.mxu0 0.0
    %2059 = vmatpush1.msra.mxu0 0.0
    %2060 = vmatprep.subr.mxu0 0.0
    %2061 = vmatpush1.msra.mxu0 0.0
    %2062 = vmatprep.subr.mxu0 0.0
    %2063 = vmatpush1.msra.mxu0 0.0
    %2064 = vmatprep.subr.mxu0 0.0
    %2065 = vmatpush1.msra.mxu0 0.0
    %2066 = vmatprep.subr.mxu0 0.0
    %2067 = vmatpush1.msra.mxu0 0.0
    %2068 = vmatprep.subr.mxu0 0.0
    %2069 = vmatpush1.msra.mxu0 0.0
    %2070 = vmatprep.subr.mxu0 0.0
    %2071 = vmatpush1.msra.mxu0 0.0
    %2072 = vmatprep.mubr.f32.mxu0 0.0
    %2073 = vmatmul.mubr.f32.gmra.mrb[0].mxu0 %v2006
    %v2074 = vpop.f32.mrb[0].mxu0
    %v2075 = vadd.f32 0.0, %v2074
    %v2076 = vpop.f32.mrb[0].mxu0
    %2077 = vdwg.mxu0
    %v2079 = vrot.slane %v2002, 1
    %v2080 = vsel %vm2004, %v2079, 0
    %2082 = vmatprep.subr.mxu0 0.0
    %2083 = vmatpush1.msra.mxu0 %v2003
    %2084 = vmatprep.subr.mxu0 0.0
    %2085 = vmatpush1.msra.mxu0 0.0
    %2086 = vmatprep.subr.mxu0 0.0
    %2087 = vmatpush1.msra.mxu0 0.0
    %2088 = vmatprep.subr.mxu0 0.0
    %2089 = vmatpush1.msra.mxu0 0.0
    %2090 = vmatprep.subr.mxu0 0.0
    %2091 = vmatpush1.msra.mxu0 0.0
    %2092 = vmatprep.subr.mxu0 0.0
    %2093 = vmatpush1.msra.mxu0 0.0
    %2094 = vmatprep.subr.mxu0 0.0
    %2095 = vmatpush1.msra.mxu0 0.0
    %2096 = vmatprep.subr.mxu0 0.0
    %2097 = vmatpush1.msra.mxu0 0.0
    %2098 = vmatprep.subr.mxu0 0.0
    %2099 = vmatpush1.msra.mxu0 0.0
    %2100 = vmatprep.subr.mxu0 0.0
    %2101 = vmatpush1.msra.mxu0 0.0
    %2102 = vmatprep.subr.mxu0 0.0
    %2103 = vmatpush1.msra.mxu0 0.0
    %2104 = vmatprep.subr.mxu0 0.0
    %2105 = vmatpush1.msra.mxu0 0.0
    %2106 = vmatprep.subr.mxu0 0.0
    %2107 = vmatpush1.msra.mxu0 0.0
    %2108 = vmatprep.subr.mxu0 0.0
    %2109 = vmatpush1.msra.mxu0 0.0
    %2110 = vmatprep.subr.mxu0 0.0
    %2111 = vmatpush1.msra.mxu0 0.0
    %2112 = vmatprep.subr.mxu0 0.0
    %2113 = vmatpush1.msra.mxu0 0.0
    %2114 = vmatprep.subr.mxu0 0.0
    %2115 = vmatpush1.msra.mxu0 0.0
    %2116 = vmatprep.subr.mxu0 0.0
    %2117 = vmatpush1.msra.mxu0 0.0
    %2118 = vmatprep.subr.mxu0 0.0
    %2119 = vmatpush1.msra.mxu0 0.0
    %2120 = vmatprep.subr.mxu0 0.0
    %2121 = vmatpush1.msra.mxu0 0.0
    %2122 = vmatprep.subr.mxu0 0.0
    %2123 = vmatpush1.msra.mxu0 0.0
    %2124 = vmatprep.subr.mxu0 0.0
    %2125 = vmatpush1.msra.mxu0 0.0
    %2126 = vmatprep.subr.mxu0 0.0
    %2127 = vmatpush1.msra.mxu0 0.0
    %2128 = vmatprep.subr.mxu0 0.0
    %2129 = vmatpush1.msra.mxu0 0.0
    %2130 = vmatprep.subr.mxu0 0.0
    %2131 = vmatpush1.msra.mxu0 0.0
    %2132 = vmatprep.subr.mxu0 0.0
    %2133 = vmatpush1.msra.mxu0 0.0
    %2134 = vmatprep.subr.mxu0 0.0
    %2135 = vmatpush1.msra.mxu0 0.0
    %2136 = vmatprep.subr.mxu0 0.0
    %2137 = vmatpush1.msra.mxu0 0.0
    %2138 = vmatprep.subr.mxu0 0.0
    %2139 = vmatpush1.msra.mxu0 0.0
    %2140 = vmatprep.subr.mxu0 0.0
    %2141 = vmatpush1.msra.mxu0 0.0
    %2142 = vmatprep.subr.mxu0 0.0
    %2143 = vmatpush1.msra.mxu0 0.0
    %2144 = vmatprep.subr.mxu0 0.0
    %2145 = vmatpush1.msra.mxu0 0.0
    %2146 = vmatprep.mubr.f32.mxu0 0.0
    %2147 = vmatmul.mubr.f32.gmra.mrb[0].mxu0 %v2080
    %v2148 = vpop.f32.mrb[0].mxu0
    %v2149 = vadd.f32 0.0, %v2148
    %v2150 = vpop.f32.mrb[0].mxu0
    %2151 = vdwg.mxu0
    %v2152 = vlaneseq
    %v2153 = vshrl.u32 %v2152, 7
    %v2154 = vsub.s32 0, %v2153
    %v2155 = vrot.slane %v2075, %v2154
    %v2156 = vmul.f32 %v1808, %v2155
    %v2157 = vmul.f32 %v1809, %v2155
    %v2158 = vmul.f32 %v1810, %v2155
    %v2159 = vmul.f32 %v1811, %v2155
    %v2160 = vlaneseq
    %v2161 = vshrl.u32 %v2160, 7
    %v2162 = vsub.s32 0, %v2161
    %v2163 = vrot.slane %v2149, %v2162
    %v2164 = vadd.f32 %v2156, %v2163
    %v2165 = vadd.f32 %v2157, %v2163
    %v2166 = vadd.f32 %v2158, %v2163
    %v2167 = vadd.f32 %v2159, %v2163
    %v2168 = vmax.f32 %v2164, 0.0
    %v2169 = vmax.f32 %v2165, 0.0
    %v2170 = vmax.f32 %v2166, 0.0
    %v2171 = vmax.f32 %v2167, 0.0
    %v2172 = vld [vmem:[%s6] sm:$0xff]
    %v2173 = vld [vmem:[%s6 + $0x8] sm:$0xff]
    %v2174 = vld [vmem:[%s6 + $0x10] sm:$0xff]
    %v2175 = vld [vmem:[%s6 + $0x18] sm:$0xff]
    %v2176 = vld [vmem:[%s6 + $0x20] sm:$0xff]
    %v2177 = vld [vmem:[%s6 + $0x28] sm:$0xff]
    %v2178 = vld [vmem:[%s7] sm:$0xff]
    %v2179 = vld [vmem:[%s7 + $0x8] sm:$0xff]
    %v2180 = vld [vmem:[%s7 + $0x10] sm:$0xff]
    %v2181 = vld [vmem:[%s7 + $0x18] sm:$0xff]
    %v2182 = vld [vmem:[%s7 + $0x20] sm:$0xff]
    %v2183 = vld [vmem:[%s7 + $0x28] sm:$0xff]
    %v2184 = vld [vmem:[%s7 + $0x30] sm:$0xff]
    %v2185 = vld [vmem:[%s7 + $0x38] sm:$0xff]
    %v2186 = vld [vmem:[%s7 + $0x40] sm:$0xff]
    %v2187 = vld [vmem:[%s7 + $0x48] sm:$0xff]
    %v2188 = vld [vmem:[%s7 + $0x50] sm:$0xff]
    %v2189 = vld [vmem:[%s7 + $0x58] sm:$0xff]
    %v2190 = vld [vmem:[%s7 + $0x60] sm:$0xff]
    %v2191 = vld [vmem:[%s7 + $0x68] sm:$0xff]
    %v2192 = vld [vmem:[%s7 + $0x70] sm:$0xff]
    %v2193 = vld [vmem:[%s7 + $0x78] sm:$0xff]
    %v2194 = vld [vmem:[%s7 + $0x80] sm:$0xff]
    %v2195 = vld [vmem:[%s7 + $0x88] sm:$0xff]
    %v2196 = vld [vmem:[%s7 + $0x90] sm:$0xff]
    %v2197 = vld [vmem:[%s7 + $0x98] sm:$0xff]
    %v2198 = vld [vmem:[%s7 + $0xa0] sm:$0xff]
    %v2199 = vld [vmem:[%s7 + $0xa8] sm:$0xff]
    %v2200 = vld [vmem:[%s7 + $0xb0] sm:$0xff]
    %v2201 = vld [vmem:[%s7 + $0xb8] sm:$0xff]
    %v2202 = vld [vmem:[%s7 + $0xc0] sm:$0xff]
    %v2203 = vld [vmem:[%s7 + $0xc8] sm:$0xff]
    %v2204 = vld [vmem:[%s7 + $0xd0] sm:$0xff]
    %v2205 = vld [vmem:[%s7 + $0xd8] sm:$0xff]
    %v2206 = vld [vmem:[%s7 + $0xe0] sm:$0xff]
    %v2207 = vld [vmem:[%s7 + $0xe8] sm:$0xff]
    %v2208 = vld [vmem:[%s7 + $0xf0] sm:$0xff]
    %v2209 = vld [vmem:[%s7 + $0xf8] sm:$0xff]
    %v2210 = vld [vmem:[%s7 + $0x100] sm:$0xff]
    %v2211 = vld [vmem:[%s7 + $0x108] sm:$0xff]
    %v2212 = vld [vmem:[%s7 + $0x110] sm:$0xff]
    %v2213 = vld [vmem:[%s7 + $0x118] sm:$0xff]
    %v2214 = vld [vmem:[%s7 + $0x120] sm:$0xff]
    %v2215 = vld [vmem:[%s7 + $0x128] sm:$0xff]
    %v2216 = vld [vmem:[%s7 + $0x130] sm:$0xff]
    %v2217 = vld [vmem:[%s7 + $0x138] sm:$0xff]
    %v2218 = vld [vmem:[%s7 + $0x140] sm:$0xff]
    %v2219 = vld [vmem:[%s7 + $0x148] sm:$0xff]
    %v2220 = vld [vmem:[%s7 + $0x150] sm:$0xff]
    %v2221 = vld [vmem:[%s7 + $0x158] sm:$0xff]
    %v2222 = vld [vmem:[%s7 + $0x160] sm:$0xff]
    %v2223 = vld [vmem:[%s7 + $0x168] sm:$0xff]
    %v2224 = vld [vmem:[%s7 + $0x170] sm:$0xff]
    %v2225 = vld [vmem:[%s7 + $0x178] sm:$0xff]
    %2226 = vmatprep.subr.mxu0 %v2179
    %2227 = vmatpush1.msra.mxu0 %v2178
    %2228 = vmatprep.subr.mxu0 %v2182
    %2229 = vmatpush1.msra.mxu0 %v2181
    %2230 = vmatprep.subr.mxu0 %v2185
    %2231 = vmatpush1.msra.mxu0 %v2184
    %2232 = vmatprep.subr.mxu0 %v2188
    %2233 = vmatpush1.msra.mxu0 %v2187
    %2234 = vmatprep.subr.mxu0 %v2191
    %2235 = vmatpush1.msra.mxu0 %v2190
    %2236 = vmatprep.subr.mxu0 %v2194
    %2237 = vmatpush1.msra.mxu0 %v2193
    %2238 = vmatprep.subr.mxu0 %v2197
    %2239 = vmatpush1.msra.mxu0 %v2196
    %2240 = vmatprep.subr.mxu0 %v2200
    %2241 = vmatpush1.msra.mxu0 %v2199
    %2242 = vmatprep.subr.mxu0 %v2203
    %2243 = vmatpush1.msra.mxu0 %v2202
    %2244 = vmatprep.subr.mxu0 %v2206
    %2245 = vmatpush1.msra.mxu0 %v2205
    %2246 = vmatprep.subr.mxu0 %v2209
    %2247 = vmatpush1.msra.mxu0 %v2208
    %2248 = vmatprep.subr.mxu0 %v2212
    %2249 = vmatpush1.msra.mxu0 %v2211
    %2250 = vmatprep.subr.mxu0 %v2215
    %2251 = vmatpush1.msra.mxu0 %v2214
    %2252 = vmatprep.subr.mxu0 %v2218
    %2253 = vmatpush1.msra.mxu0 %v2217
    %2254 = vmatprep.subr.mxu0 %v2221
    %2255 = vmatpush1.msra.mxu0 %v2220
    %2256 = vmatprep.subr.mxu0 %v2224
    %2257 = vmatpush1.msra.mxu0 %v2223
    %2258 = vmatprep.subr.mxu0 0.0
    %2259 = vmatpush1.msra.mxu0 0.0
    %2260 = vmatprep.subr.mxu0 0.0
    %2261 = vmatpush1.msra.mxu0 0.0
    %2262 = vmatprep.subr.mxu0 0.0
    %2263 = vmatpush1.msra.mxu0 0.0
    %2264 = vmatprep.subr.mxu0 0.0
    %2265 = vmatpush1.msra.mxu0 0.0
    %2266 = vmatprep.subr.mxu0 0.0
    %2267 = vmatpush1.msra.mxu0 0.0
    %2268 = vmatprep.subr.mxu0 0.0
    %2269 = vmatpush1.msra.mxu0 0.0
    %2270 = vmatprep.subr.mxu0 0.0
    %2271 = vmatpush1.msra.mxu0 0.0
    %2272 = vmatprep.subr.mxu0 0.0
    %2273 = vmatpush1.msra.mxu0 0.0
    %2274 = vmatprep.subr.mxu0 0.0
    %2275 = vmatpush1.msra.mxu0 0.0
    %2276 = vmatprep.subr.mxu0 0.0
    %2277 = vmatpush1.msra.mxu0 0.0
    %2278 = vmatprep.subr.mxu0 0.0
    %2279 = vmatpush1.msra.mxu0 0.0
    %2280 = vmatprep.subr.mxu0 0.0
    %2281 = vmatpush1.msra.mxu0 0.0
    %2282 = vmatprep.subr.mxu0 0.0
    %2283 = vmatpush1.msra.mxu0 0.0
    %2284 = vmatprep.subr.mxu0 0.0
    %2285 = vmatpush1.msra.mxu0 0.0
    %2286 = vmatprep.subr.mxu0 0.0
    %2287 = vmatpush1.msra.mxu0 0.0
    %2288 = vmatprep.subr.mxu0 0.0
    %2289 = vmatpush1.msra.mxu0 0.0
    %2290 = vmatprep.mubr.f32.mxu0 0.0
    %2291 = vmatmul.mubr.f32.gmra.mrb[0].mxu0 %v2168
    %v2292 = vpop.f32.mrb[0].mxu0
    %v2293 = vadd.f32 0.0, %v2292
    %v2294 = vpop.f32.mrb[0].mxu0
    %v2295 = vadd.f32 0.0, %v2294
    %2296 = vmatprep.mubr.f32.mxu0 0.0
    %2297 = vmatmul.mubr.f32.gmra.mrb[0].mxu0 %v2169
    %v2298 = vpop.f32.mrb[0].mxu0
    %v2299 = vadd.f32 0.0, %v2298
    %v2300 = vpop.f32.mrb[0].mxu0
    %v2301 = vadd.f32 0.0, %v2300
    %2302 = vmatprep.mubr.f32.mxu0 0.0
    %2303 = vmatmul.mubr.f32.gmra.mrb[0].mxu0 %v2170
    %v2304 = vpop.f32.mrb[0].mxu0
    %v2305 = vadd.f32 0.0, %v2304
    %v2306 = vpop.f32.mrb[0].mxu0
    %v2307 = vadd.f32 0.0, %v2306
    %2308 = vmatprep.mubr.f32.mxu0 0.0
    %2309 = vmatmul.mubr.f32.gmra.mrb[0].mxu0 %v2171
    %v2310 = vpop.f32.mrb[0].mxu0
    %v2311 = vadd.f32 0.0, %v2310
    %v2312 = vpop.f32.mrb[0].mxu0
    %v2313 = vadd.f32 0.0, %v2312
    %2314 = vdwg.mxu0
    %2315 = vmatprep.subr.mxu0 0.0
    %2316 = vmatpush1.msra.mxu0 %v2180
    %2317 = vmatprep.subr.mxu0 0.0
    %2318 = vmatpush1.msra.mxu0 %v2183
    %2319 = vmatprep.subr.mxu0 0.0
    %2320 = vmatpush1.msra.mxu0 %v2186
    %2321 = vmatprep.subr.mxu0 0.0
    %2322 = vmatpush1.msra.mxu0 %v2189
    %2323 = vmatprep.subr.mxu0 0.0
    %2324 = vmatpush1.msra.mxu0 %v2192
    %2325 = vmatprep.subr.mxu0 0.0
    %2326 = vmatpush1.msra.mxu0 %v2195
    %2327 = vmatprep.subr.mxu0 0.0
    %2328 = vmatpush1.msra.mxu0 %v2198
    %2329 = vmatprep.subr.mxu0 0.0
    %2330 = vmatpush1.msra.mxu0 %v2201
    %2331 = vmatprep.subr.mxu0 0.0
    %2332 = vmatpush1.msra.mxu0 %v2204
    %2333 = vmatprep.subr.mxu0 0.0
    %2334 = vmatpush1.msra.mxu0 %v2207
    %2335 = vmatprep.subr.mxu0 0.0
    %2336 = vmatpush1.msra.mxu0 %v2210
    %2337 = vmatprep.subr.mxu0 0.0
    %2338 = vmatpush1.msra.mxu0 %v2213
    %2339 = vmatprep.subr.mxu0 0.0
    %2340 = vmatpush1.msra.mxu0 %v2216
    %2341 = vmatprep.subr.mxu0 0.0
    %2342 = vmatpush1.msra.mxu0 %v2219
    %2343 = vmatprep.subr.mxu0 0.0
    %2344 = vmatpush1.msra.mxu0 %v2222
    %2345 = vmatprep.subr.mxu0 0.0
    %2346 = vmatpush1.msra.mxu0 %v2225
    %2347 = vmatprep.subr.mxu0 0.0
    %2348 = vmatpush1.msra.mxu0 0.0
    %2349 = vmatprep.subr.mxu0 0.0
    %2350 = vmatpush1.msra.mxu0 0.0
    %2351 = vmatprep.subr.mxu0 0.0
    %2352 = vmatpush1.msra.mxu0 0.0
    %2353 = vmatprep.subr.mxu0 0.0
    %2354 = vmatpush1.msra.mxu0 0.0
    %2355 = vmatprep.subr.mxu0 0.0
    %2356 = vmatpush1.msra.mxu0 0.0
    %2357 = vmatprep.subr.mxu0 0.0
    %2358 = vmatpush1.msra.mxu0 0.0
    %2359 = vmatprep.subr.mxu0 0.0
    %2360 = vmatpush1.msra.mxu0 0.0
    %2361 = vmatprep.subr.mxu0 0.0
    %2362 = vmatpush1.msra.mxu0 0.0
    %2363 = vmatprep.subr.mxu0 0.0
    %2364 = vmatpush1.msra.mxu0 0.0
    %2365 = vmatprep.subr.mxu0 0.0
    %2366 = vmatpush1.msra.mxu0 0.0
    %2367 = vmatprep.subr.mxu0 0.0
    %2368 = vmatpush1.msra.mxu0 0.0
    %2369 = vmatprep.subr.mxu0 0.0
    %2370 = vmatpush1.msra.mxu0 0.0
    %2371 = vmatprep.subr.mxu0 0.0
    %2372 = vmatpush1.msra.mxu0 0.0
    %2373 = vmatprep.subr.mxu0 0.0
    %2374 = vmatpush1.msra.mxu0 0.0
    %2375 = vmatprep.subr.mxu0 0.0
    %2376 = vmatpush1.msra.mxu0 0.0
    %2377 = vmatprep.subr.mxu0 0.0
    %2378 = vmatpush1.msra.mxu0 0.0
    %2379 = vmatprep.mubr.f32.mxu0 0.0
    %2380 = vmatmul.mubr.f32.gmra.mrb[0].mxu0 %v2168
    %v2381 = vpop.f32.mrb[0].mxu0
    %v2382 = vadd.f32 0.0, %v2381
    %v2383 = vpop.f32.mrb[0].mxu0
    %2384 = vmatprep.mubr.f32.mxu0 0.0
    %2385 = vmatmul.mubr.f32.gmra.mrb[0].mxu0 %v2169
    %v2386 = vpop.f32.mrb[0].mxu0
    %v2387 = vadd.f32 0.0, %v2386
    %v2388 = vpop.f32.mrb[0].mxu0
    %2389 = vmatprep.mubr.f32.mxu0 0.0
    %2390 = vmatmul.mubr.f32.gmra.mrb[0].mxu0 %v2170
    %v2391 = vpop.f32.mrb[0].mxu0
    %v2392 = vadd.f32 0.0, %v2391
    %v2393 = vpop.f32.mrb[0].mxu0
    %2394 = vmatprep.mubr.f32.mxu0 0.0
    %2395 = vmatmul.mubr.f32.gmra.mrb[0].mxu0 %v2171
    %v2396 = vpop.f32.mrb[0].mxu0
    %v2397 = vadd.f32 0.0, %v2396
    %v2398 = vpop.f32.mrb[0].mxu0
    %2399 = vdwg.mxu0
    %vm2400 = vcmask 261120
    %v2402 = vsel %vm2400, %v2172, 0
    %v2405 = vsel %vm2400, %v2173, 0
    %v2408 = vsel %vm2400, %v2174, 0
    %v2411 = vsel %vm2400, %v2175, 0
    %v2414 = vsel %vm2400, %v2176, 0
    %v2417 = vsel %vm2400, %v2177, 0
    %2419 = vmatprep.subr.mxu0 %v2295
    %2420 = vmatpush1.msra.mxu0 %v2293
    %2421 = vmatprep.subr.mxu0 %v2301
    %2422 = vmatpush1.msra.mxu0 %v2299
    %2423 = vmatprep.subr.mxu0 %v2307
    %2424 = vmatpush1.msra.mxu0 %v2305
    %2425 = vmatprep.subr.mxu0 %v2313
    %2426 = vmatpush1.msra.mxu0 %v2311
    %2427 = vmatprep.subr.mxu0 0.0
    %2428 = vmatpush1.msra.mxu0 0.0
    %2429 = vmatprep.subr.mxu0 0.0
    %2430 = vmatpush1.msra.mxu0 0.0
    %2431 = vmatprep.subr.mxu0 0.0
    %2432 = vmatpush1.msra.mxu0 0.0
    %2433 = vmatprep.subr.mxu0 0.0
    %2434 = vmatpush1.msra.mxu0 0.0
    %2435 = vmatprep.subr.mxu0 0.0
    %2436 = vmatpush1.msra.mxu0 0.0
    %2437 = vmatprep.subr.mxu0 0.0
    %2438 = vmatpush1.msra.mxu0 0.0
    %2439 = vmatprep.subr.mxu0 0.0
    %2440 = vmatpush1.msra.mxu0 0.0
    %2441 = vmatprep.subr.mxu0 0.0
    %2442 = vmatpush1.msra.mxu0 0.0
    %2443 = vmatprep.subr.mxu0 0.0
    %2444 = vmatpush1.msra.mxu0 0.0
    %2445 = vmatprep.subr.mxu0 0.0
    %2446 = vmatpush1.msra.mxu0 0.0
    %2447 = vmatprep.subr.mxu0 0.0
    %2448 = vmatpush1.msra.mxu0 0.0
    %2449 = vmatprep.subr.mxu0 0.0
    %2450 = vmatpush1.msra.mxu0 0.0
    %2451 = vmatprep.subr.mxu0 0.0
    %2452 = vmatpush1.msra.mxu0 0.0
    %2453 = vmatprep.subr.mxu0 0.0
    %2454 = vmatpush1.msra.mxu0 0.0
    %2455 = vmatprep.subr.mxu0 0.0
    %2456 = vmatpush1.msra.mxu0 0.0
    %2457 = vmatprep.subr.mxu0 0.0
    %2458 = vmatpush1.msra.mxu0 0.0
    %2459 = vmatprep.subr.mxu0 0.0
    %2460 = vmatpush1.msra.mxu0 0.0
    %2461 = vmatprep.subr.mxu0 0.0
    %2462 = vmatpush1.msra.mxu0 0.0
    %2463 = vmatprep.subr.mxu0 0.0
    %2464 = vmatpush1.msra.mxu0 0.0
    %2465 = vmatprep.subr.mxu0 0.0
    %2466 = vmatpush1.msra.mxu0 0.0
    %2467 = vmatprep.subr.mxu0 0.0
    %2468 = vmatpush1.msra.mxu0 0.0
    %2469 = vmatprep.subr.mxu0 0.0
    %2470 = vmatpush1.msra.mxu0 0.0
    %2471 = vmatprep.subr.mxu0 0.0
    %2472 = vmatpush1.msra.mxu0 0.0
    %2473 = vmatprep.subr.mxu0 0.0
    %2474 = vmatpush1.msra.mxu0 0.0
    %2475 = vmatprep.subr.mxu0 0.0
    %2476 = vmatpush1.msra.mxu0 0.0
    %2477 = vmatprep.subr.mxu0 0.0
    %2478 = vmatpush1.msra.mxu0 0.0
    %2479 = vmatprep.subr.mxu0 0.0
    %2480 = vmatpush1.msra.mxu0 0.0
    %2481 = vmatprep.subr.mxu0 0.0
    %2482 = vmatpush1.msra.mxu0 0.0
    %2483 = vmatprep.mubr.f32.mxu0 0.0
    %2484 = vmatmul.mubr.f32.gmra.mrb[0].mxu0 %v2402
    %v2485 = vpop.f32.mrb[0].mxu0
    %v2486 = vadd.f32 0.0, %v2485
    %v2487 = vpop.f32.mrb[0].mxu0
    %v2488 = vadd.f32 0.0, %v2487
    %2489 = vmatprep.mubr.f32.mxu0 0.0
    %2490 = vmatmul.mubr.f32.gmra.mrb[0].mxu0 %v2405
    %v2491 = vpop.f32.mrb[0].mxu0
    %v2492 = vadd.f32 0.0, %v2491
    %v2493 = vpop.f32.mrb[0].mxu0
    %v2494 = vadd.f32 0.0, %v2493
    %2495 = vmatprep.mubr.f32.mxu0 0.0
    %2496 = vmatmul.mubr.f32.gmra.mrb[0].mxu0 %v2408
    %v2497 = vpop.f32.mrb[0].mxu0
    %v2498 = vadd.f32 0.0, %v2497
    %v2499 = vpop.f32.mrb[0].mxu0
    %v2500 = vadd.f32 0.0, %v2499
    %2501 = vmatprep.mubr.f32.mxu0 0.0
    %2502 = vmatmul.mubr.f32.gmra.mrb[0].mxu0 %v2411
    %v2503 = vpop.f32.mrb[0].mxu0
    %v2504 = vadd.f32 0.0, %v2503
    %v2505 = vpop.f32.mrb[0].mxu0
    %v2506 = vadd.f32 0.0, %v2505
    %2507 = vmatprep.mubr.f32.mxu0 0.0
    %2508 = vmatmul.mubr.f32.gmra.mrb[0].mxu0 %v2414
    %v2509 = vpop.f32.mrb[0].mxu0
    %v2510 = vadd.f32 0.0, %v2509
    %v2511 = vpop.f32.mrb[0].mxu0
    %v2512 = vadd.f32 0.0, %v2511
    %2513 = vmatprep.mubr.f32.mxu0 0.0
    %2514 = vmatmul.mubr.f32.gmra.mrb[0].mxu0 %v2417
    %v2515 = vpop.f32.mrb[0].mxu0
    %v2516 = vadd.f32 0.0, %v2515
    %v2517 = vpop.f32.mrb[0].mxu0
    %v2518 = vadd.f32 0.0, %v2517
    %2519 = vdwg.mxu0
    %2520 = vmatprep.subr.mxu0 0.0
    %2521 = vmatpush1.msra.mxu0 %v2382
    %2522 = vmatprep.subr.mxu0 0.0
    %2523 = vmatpush1.msra.mxu0 %v2387
    %2524 = vmatprep.subr.mxu0 0.0
    %2525 = vmatpush1.msra.mxu0 %v2392
    %2526 = vmatprep.subr.mxu0 0.0
    %2527 = vmatpush1.msra.mxu0 %v2397
    %2528 = vmatprep.subr.mxu0 0.0
    %2529 = vmatpush1.msra.mxu0 0.0
    %2530 = vmatprep.subr.mxu0 0.0
    %2531 = vmatpush1.msra.mxu0 0.0
    %2532 = vmatprep.subr.mxu0 0.0
    %2533 = vmatpush1.msra.mxu0 0.0
    %2534 = vmatprep.subr.mxu0 0.0
    %2535 = vmatpush1.msra.mxu0 0.0
    %2536 = vmatprep.subr.mxu0 0.0
    %2537 = vmatpush1.msra.mxu0 0.0
    %2538 = vmatprep.subr.mxu0 0.0
    %2539 = vmatpush1.msra.mxu0 0.0
    %2540 = vmatprep.subr.mxu0 0.0
    %2541 = vmatpush1.msra.mxu0 0.0
    %2542 = vmatprep.subr.mxu0 0.0
    %2543 = vmatpush1.msra.mxu0 0.0
    %2544 = vmatprep.subr.mxu0 0.0
    %2545 = vmatpush1.msra.mxu0 0.0
    %2546 = vmatprep.subr.mxu0 0.0
    %2547 = vmatpush1.msra.mxu0 0.0
    %2548 = vmatprep.subr.mxu0 0.0
    %2549 = vmatpush1.msra.mxu0 0.0
    %2550 = vmatprep.subr.mxu0 0.0
    %2551 = vmatpush1.msra.mxu0 0.0
    %2552 = vmatprep.subr.mxu0 0.0
    %2553 = vmatpush1.msra.mxu0 0.0
    %2554 = vmatprep.subr.mxu0 0.0
    %2555 = vmatpush1.msra.mxu0 0.0
    %2556 = vmatprep.subr.mxu0 0.0
    %2557 = vmatpush1.msra.mxu0 0.0
    %2558 = vmatprep.subr.mxu0 0.0
    %2559 = vmatpush1.msra.mxu0 0.0
    %2560 = vmatprep.subr.mxu0 0.0
    %2561 = vmatpush1.msra.mxu0 0.0
    %2562 = vmatprep.subr.mxu0 0.0
    %2563 = vmatpush1.msra.mxu0 0.0
    %2564 = vmatprep.subr.mxu0 0.0
    %2565 = vmatpush1.msra.mxu0 0.0
    %2566 = vmatprep.subr.mxu0 0.0
    %2567 = vmatpush1.msra.mxu0 0.0
    %2568 = vmatprep.subr.mxu0 0.0
    %2569 = vmatpush1.msra.mxu0 0.0
    %2570 = vmatprep.subr.mxu0 0.0
    %2571 = vmatpush1.msra.mxu0 0.0
    %2572 = vmatprep.subr.mxu0 0.0
    %2573 = vmatpush1.msra.mxu0 0.0
    %2574 = vmatprep.subr.mxu0 0.0
    %2575 = vmatpush1.msra.mxu0 0.0
    %2576 = vmatprep.subr.mxu0 0.0
    %2577 = vmatpush1.msra.mxu0 0.0
    %2578 = vmatprep.subr.mxu0 0.0
    %2579 = vmatpush1.msra.mxu0 0.0
    %2580 = vmatprep.subr.mxu0 0.0
    %2581 = vmatpush1.msra.mxu0 0.0
    %2582 = vmatprep.subr.mxu0 0.0
    %2583 = vmatpush1.msra.mxu0 0.0
    %2584 = vmatprep.mubr.f32.mxu0 0.0
    %2585 = vmatmul.mubr.f32.gmra.mrb[0].mxu0 %v2402
    %v2586 = vpop.f32.mrb[0].mxu0
    %v2587 = vadd.f32 0.0, %v2586
    %v2588 = vpop.f32.mrb[0].mxu0
    %2589 = vmatprep.mubr.f32.mxu0 0.0
    %2590 = vmatmul.mubr.f32.gmra.mrb[0].mxu0 %v2405
    %v2591 = vpop.f32.mrb[0].mxu0
    %v2592 = vadd.f32 0.0, %v2591
    %v2593 = vpop.f32.mrb[0].mxu0
    %2594 = vmatprep.mubr.f32.mxu0 0.0
    %2595 = vmatmul.mubr.f32.gmra.mrb[0].mxu0 %v2408
    %v2596 = vpop.f32.mrb[0].mxu0
    %v2597 = vadd.f32 0.0, %v2596
    %v2598 = vpop.f32.mrb[0].mxu0
    %2599 = vmatprep.mubr.f32.mxu0 0.0
    %2600 = vmatmul.mubr.f32.gmra.mrb[0].mxu0 %v2411
    %v2601 = vpop.f32.mrb[0].mxu0
    %v2602 = vadd.f32 0.0, %v2601
    %v2603 = vpop.f32.mrb[0].mxu0
    %2604 = vmatprep.mubr.f32.mxu0 0.0
    %2605 = vmatmul.mubr.f32.gmra.mrb[0].mxu0 %v2414
    %v2606 = vpop.f32.mrb[0].mxu0
    %v2607 = vadd.f32 0.0, %v2606
    %v2608 = vpop.f32.mrb[0].mxu0
    %2609 = vmatprep.mubr.f32.mxu0 0.0
    %2610 = vmatmul.mubr.f32.gmra.mrb[0].mxu0 %v2417
    %v2611 = vpop.f32.mrb[0].mxu0
    %v2612 = vadd.f32 0.0, %v2611
    %v2613 = vpop.f32.mrb[0].mxu0
    %2614 = vdwg.mxu0
    %v2615 = vmax.f32 %v2486, %v2492
    %v2616 = vmax.f32 %v2488, %v2494
    %v2617 = vmax.f32 %v2587, %v2592
    %v2618 = vmax.f32 %v2492, %v2498
    %v2619 = vmax.f32 %v2494, %v2500
    %v2620 = vmax.f32 %v2592, %v2597
    %v2621 = vmax.f32 %v2498, %v2504
    %v2622 = vmax.f32 %v2500, %v2506
    %v2623 = vmax.f32 %v2597, %v2602
    %v2624 = vmax.f32 %v2504, %v2510
    %v2625 = vmax.f32 %v2506, %v2512
    %v2626 = vmax.f32 %v2602, %v2607
    %v2627 = vmax.f32 %v2615, %v2498
    %v2628 = vmax.f32 %v2616, %v2500
    %v2629 = vmax.f32 %v2617, %v2597
    %v2630 = vmax.f32 %v2618, %v2504
    %v2631 = vmax.f32 %v2619, %v2506
    %v2632 = vmax.f32 %v2620, %v2602
    %v2633 = vmax.f32 %v2621, %v2510
    %v2634 = vmax.f32 %v2622, %v2512
    %v2635 = vmax.f32 %v2623, %v2607
    %v2636 = vmax.f32 %v2624, %v2516
    %v2637 = vmax.f32 %v2625, %v2518
    %v2638 = vmax.f32 %v2626, %v2612
    %v2639 = vmax.f32 %v2627, %v2628
    %v2640 = vmax.f32 %v2630, %v2631
    %v2641 = vmax.f32 %v2633, %v2634
    %v2642 = vmax.f32 %v2636, %v2637
    %v2643 = vmax.f32 %v2639, %v2629
    %v2644 = vmax.f32 %v2640, %v2632
    %v2645 = vmax.f32 %v2641, %v2635
    %v2646 = vmax.f32 %v2642, %v2638
    %v2647 = vld [vmem:[%s8] sm:$0xff]
    %v2648 = vld [vmem:[%s8 + $0x8] sm:$0xff]
    %v2649 = vld [vmem:[%s8 + $0x10] sm:$0xf]
    %v2650 = vld [vmem:[%s9] sm:$0xff]
    %v2651 = vld [vmem:[%s9 + $0x8] sm:$0xff]
    %v2652 = vld [vmem:[%s9 + $0x10] sm:$0xff]
    %v2653 = vld [vmem:[%s9 + $0x18] sm:$0xff]
    %v2654 = vld [vmem:[%s9 + $0x20] sm:$0xff]
    %v2655 = vld [vmem:[%s9 + $0x28] sm:$0xff]
    %v2656 = vld [vmem:[%s9 + $0x30] sm:$0xff]
    %v2657 = vld [vmem:[%s9 + $0x38] sm:$0xff]
    %v2658 = vld [vmem:[%s9 + $0x40] sm:$0xff]
    %v2659 = vld [vmem:[%s9 + $0x48] sm:$0xff]
    %v2660 = vld [vmem:[%s9 + $0x50] sm:$0xff]
    %v2661 = vld [vmem:[%s9 + $0x58] sm:$0xff]
    %v2662 = vld [vmem:[%s9 + $0x60] sm:$0xff]
    %v2663 = vld [vmem:[%s9 + $0x68] sm:$0xff]
    %v2664 = vld [vmem:[%s9 + $0x70] sm:$0xff]
    %v2665 = vld [vmem:[%s9 + $0x78] sm:$0xff]
    %2666 = vmatprep.subr.mxu0 0.0
    %2667 = vmatpush1.msra.mxu0 %v2650
    %2668 = vmatprep.subr.mxu0 0.0
    %2669 = vmatpush1.msra.mxu0 %v2651
    %2670 = vmatprep.subr.mxu0 0.0
    %2671 = vmatpush1.msra.mxu0 %v2652
    %2672 = vmatprep.subr.mxu0 0.0
    %2673 = vmatpush1.msra.mxu0 %v2653
    %2674 = vmatprep.subr.mxu0 0.0
    %2675 = vmatpush1.msra.mxu0 %v2654
    %2676 = vmatprep.subr.mxu0 0.0
    %2677 = vmatpush1.msra.mxu0 %v2655
    %2678 = vmatprep.subr.mxu0 0.0
    %2679 = vmatpush1.msra.mxu0 %v2656
    %2680 = vmatprep.subr.mxu0 0.0
    %2681 = vmatpush1.msra.mxu0 %v2657
    %2682 = vmatprep.subr.mxu0 0.0
    %2683 = vmatpush1.msra.mxu0 %v2658
    %2684 = vmatprep.subr.mxu0 0.0
    %2685 = vmatpush1.msra.mxu0 %v2659
    %2686 = vmatprep.subr.mxu0 0.0
    %2687 = vmatpush1.msra.mxu0 %v2660
    %2688 = vmatprep.subr.mxu0 0.0
    %2689 = vmatpush1.msra.mxu0 %v2661
    %2690 = vmatprep.subr.mxu0 0.0
    %2691 = vmatpush1.msra.mxu0 %v2662
    %2692 = vmatprep.subr.mxu0 0.0
    %2693 = vmatpush1.msra.mxu0 %v2663
    %2694 = vmatprep.subr.mxu0 0.0
    %2695 = vmatpush1.msra.mxu0 %v2664
    %2696 = vmatprep.subr.mxu0 0.0
    %2697 = vmatpush1.msra.mxu0 %v2665
    %2698 = vmatprep.subr.mxu0 0.0
    %2699 = vmatpush1.msra.mxu0 0.0
    %2700 = vmatprep.subr.mxu0 0.0
    %2701 = vmatpush1.msra.mxu0 0.0
    %2702 = vmatprep.subr.mxu0 0.0
    %2703 = vmatpush1.msra.mxu0 0.0
    %2704 = vmatprep.subr.mxu0 0.0
    %2705 = vmatpush1.msra.mxu0 0.0
    %2706 = vmatprep.subr.mxu0 0.0
    %2707 = vmatpush1.msra.mxu0 0.0
    %2708 = vmatprep.subr.mxu0 0.0
    %2709 = vmatpush1.msra.mxu0 0.0
    %2710 = vmatprep.subr.mxu0 0.0
    %2711 = vmatpush1.msra.mxu0 0.0
    %2712 = vmatprep.subr.mxu0 0.0
    %2713 = vmatpush1.msra.mxu0 0.0
    %2714 = vmatprep.subr.mxu0 0.0
    %2715 = vmatpush1.msra.mxu0 0.0
    %2716 = vmatprep.subr.mxu0 0.0
    %2717 = vmatpush1.msra.mxu0 0.0
    %2718 = vmatprep.subr.mxu0 0.0
    %2719 = vmatpush1.msra.mxu0 0.0
    %2720 = vmatprep.subr.mxu0 0.0
    %2721 = vmatpush1.msra.mxu0 0.0
    %2722 = vmatprep.subr.mxu0 0.0
    %2723 = vmatpush1.msra.mxu0 0.0
    %2724 = vmatprep.subr.mxu0 0.0
    %2725 = vmatpush1.msra.mxu0 0.0
    %2726 = vmatprep.subr.mxu0 0.0
    %2727 = vmatpush1.msra.mxu0 0.0
    %2728 = vmatprep.subr.mxu0 0.0
    %2729 = vmatpush1.msra.mxu0 0.0
    %2730 = vmatprep.mubr.f32.mxu0 0.0
    %2731 = vmatmul.mubr.f32.gmra.mrb[0].mxu0 %v2643
    %v2732 = vpop.f32.mrb[0].mxu0
    %v2733 = vadd.f32 0.0, %v2732
    %v2734 = vpop.f32.mrb[0].mxu0
    %2735 = vmatprep.mubr.f32.mxu0 0.0
    %2736 = vmatmul.mubr.f32.gmra.mrb[0].mxu0 %v2644
    %v2737 = vpop.f32.mrb[0].mxu0
    %v2738 = vadd.f32 0.0, %v2737
    %v2739 = vpop.f32.mrb[0].mxu0
    %2740 = vmatprep.mubr.f32.mxu0 0.0
    %2741 = vmatmul.mubr.f32.gmra.mrb[0].mxu0 %v2645
    %v2742 = vpop.f32.mrb[0].mxu0
    %v2743 = vadd.f32 0.0, %v2742
    %v2744 = vpop.f32.mrb[0].mxu0
    %2745 = vmatprep.mubr.f32.mxu0 0.0
    %2746 = vmatmul.mubr.f32.gmra.mrb[0].mxu0 %v2646
    %v2747 = vpop.f32.mrb[0].mxu0
    %v2748 = vadd.f32 0.0, %v2747
    %v2749 = vpop.f32.mrb[0].mxu0
    %2750 = vdwg.mxu0
    %v2752 = vsel %vm2400, %v2647, 0
    %v2755 = vsel %vm2400, %v2648, 0
    %v2758 = vsel %vm2400, %v2649, 0
    %2760 = vmatprep.subr.mxu0 0.0
    %2761 = vmatpush1.msra.mxu0 %v2733
    %2762 = vmatprep.subr.mxu0 0.0
    %2763 = vmatpush1.msra.mxu0 %v2738
    %2764 = vmatprep.subr.mxu0 0.0
    %2765 = vmatpush1.msra.mxu0 %v2743
    %2766 = vmatprep.subr.mxu0 0.0
    %2767 = vmatpush1.msra.mxu0 %v2748
    %2768 = vmatprep.subr.mxu0 0.0
    %2769 = vmatpush1.msra.mxu0 0.0
    %2770 = vmatprep.subr.mxu0 0.0
    %2771 = vmatpush1.msra.mxu0 0.0
    %2772 = vmatprep.subr.mxu0 0.0
    %2773 = vmatpush1.msra.mxu0 0.0
    %2774 = vmatprep.subr.mxu0 0.0
    %2775 = vmatpush1.msra.mxu0 0.0
    %2776 = vmatprep.subr.mxu0 0.0
    %2777 = vmatpush1.msra.mxu0 0.0
    %2778 = vmatprep.subr.mxu0 0.0
    %2779 = vmatpush1.msra.mxu0 0.0
    %2780 = vmatprep.subr.mxu0 0.0
    %2781 = vmatpush1.msra.mxu0 0.0
    %2782 = vmatprep.subr.mxu0 0.0
    %2783 = vmatpush1.msra.mxu0 0.0
    %2784 = vmatprep.subr.mxu0 0.0
    %2785 = vmatpush1.msra.mxu0 0.0
    %2786 = vmatprep.subr.mxu0 0.0
    %2787 = vmatpush1.msra.mxu0 0.0
    %2788 = vmatprep.subr.mxu0 0.0
    %2789 = vmatpush1.msra.mxu0 0.0
    %2790 = vmatprep.subr.mxu0 0.0
    %2791 = vmatpush1.msra.mxu0 0.0
    %2792 = vmatprep.subr.mxu0 0.0
    %2793 = vmatpush1.msra.mxu0 0.0
    %2794 = vmatprep.subr.mxu0 0.0
    %2795 = vmatpush1.msra.mxu0 0.0
    %2796 = vmatprep.subr.mxu0 0.0
    %2797 = vmatpush1.msra.mxu0 0.0
    %2798 = vmatprep.subr.mxu0 0.0
    %2799 = vmatpush1.msra.mxu0 0.0
    %2800 = vmatprep.subr.mxu0 0.0
    %2801 = vmatpush1.msra.mxu0 0.0
    %2802 = vmatprep.subr.mxu0 0.0
    %2803 = vmatpush1.msra.mxu0 0.0
    %2804 = vmatprep.subr.mxu0 0.0
    %2805 = vmatpush1.msra.mxu0 0.0
    %2806 = vmatprep.subr.mxu0 0.0
    %2807 = vmatpush1.msra.mxu0 0.0
    %2808 = vmatprep.subr.mxu0 0.0
    %2809 = vmatpush1.msra.mxu0 0.0
    %2810 = vmatprep.subr.mxu0 0.0
    %2811 = vmatpush1.msra.mxu0 0.0
    %2812 = vmatprep.subr.mxu0 0.0
    %2813 = vmatpush1.msra.mxu0 0.0
    %2814 = vmatprep.subr.mxu0 0.0
    %2815 = vmatpush1.msra.mxu0 0.0
    %2816 = vmatprep.subr.mxu0 0.0
    %2817 = vmatpush1.msra.mxu0 0.0
    %2818 = vmatprep.subr.mxu0 0.0
    %2819 = vmatpush1.msra.mxu0 0.0
    %2820 = vmatprep.subr.mxu0 0.0
    %2821 = vmatpush1.msra.mxu0 0.0
    %2822 = vmatprep.subr.mxu0 0.0
    %2823 = vmatpush1.msra.mxu0 0.0
    %2824 = vmatprep.mubr.f32.mxu0 0.0
    %2825 = vmatmul.mubr.f32.gmra.mrb[0].mxu0 %v2752
    %v2826 = vpop.f32.mrb[0].mxu0
    %v2827 = vadd.f32 0.0, %v2826
    %v2828 = vpop.f32.mrb[0].mxu0
    %2829 = vmatprep.mubr.f32.mxu0 0.0
    %2830 = vmatmul.mubr.f32.gmra.mrb[0].mxu0 %v2755
    %v2831 = vpop.f32.mrb[0].mxu0
    %v2832 = vadd.f32 0.0, %v2831
    %v2833 = vpop.f32.mrb[0].mxu0
    %2834 = vmatprep.mubr.f32.mxu0 0.0
    %2835 = vmatmul.mubr.f32.gmra.mrb[0].mxu0 %v2758
    %v2836 = vpop.f32.mrb[0].mxu0
    %v2837 = vadd.f32 0.0, %v2836
    %v2838 = vpop.f32.mrb[0].mxu0
    %2839 = vdwg.mxu0
    %vm2840 = vcmask 654336
    %2841 = vst.msk [vmem:[#allocation8] sm:$0xff] %vm2840, %v2827
    %2842 = vst.msk [vmem:[#allocation8 + $0x8] sm:$0xff] %vm2840, %v2832
    %vm2843 = vcmask 650240
    %2844 = vst.msk [vmem:[#allocation8 + $0x10] sm:$0xf] %vm2843, %v2837
    // Predicated region
    $region54: #{tpu_custom_call.1} parent=1 // pred_check
      _
    $region55: #{tpu_custom_call.1} parent=1 // pred_check_branch
      %2846 = sbr.rel (0) target = $region57
    $region56: #{tpu_custom_call.1} parent=1 // pred_region
      %s2848 = ssub.s32 384, 384
      %2849 = vsyncadd [#allocation4], %s2848
      %s2850 = sshll.u32 [#allocation8], 4
      %s2851 = int_to_ptr.vmem [resolvable:$true] %s2850
      %2856 = dma.vmem_to_hbm [thread:$0]  %s2851, 384, %s10, [#allocation4], 128, 128, 8
    $region57: #{tpu_custom_call.1} parent=1 // pred_fallthru
      _
    // Predicated region
    $region58: #{tpu_custom_call.1} parent=1 // pred_check
      _
    $region59: #{tpu_custom_call.1} parent=1 // pred_check_branch
      %2858 = sbr.rel (0) target = $region61
    $region60: #{tpu_custom_call.1} parent=1 // pred_region
      %2859 = dma.done [#allocation4], 384
    $region61: #{tpu_custom_call.1} parent=1 // pred_fallthru
      _
    %2860 = vsyncpa [#allocation3], 1
    %2861 = vsyncpa [#allocation6], 1
    %2862 = vsyncpa [#allocation4], 1

</llo_original>
